<compile_context>
chip_gen: v6e
topology: v6e:2x2x1
jax: 0.10.0
libtpu: 0.0.40
codegen_flags: <defaults>
</compile_context>

<pallas_src>
import functools

import jax
import jax.numpy as jnp
from jax import lax
from jax.experimental import pallas as pl
from jax.experimental.pallas import tpu as pltpu

EPS = 1e-5
NEG_SLOPE = 0.01  # torch.nn.LeakyReLU default
LANE = 128


def _round_up(n, m):
    return ((n + m - 1) // m) * m


def encoder_kernel(
    x_ref,
    w1_ref, b1_ref, g1_ref, be1_ref,
    w2_ref, b2_ref, g2_ref, be2_ref,
    w3_ref, b3_ref, g3_ref, be3_ref,
    w4a_ref, w4b_ref, w4c_ref, b4_ref, g4_ref, be4_ref,
    emb_t_ref,
    logits_ref, l4_ref,
):
    x = x_ref[...]
    B = x.shape[0]
    inv_b = jnp.float32(1.0 / B)
    # Hoisted once; used to push per-column batch reductions onto the MXU.
    # (8 identical rows keep M sublane-aligned; the MXU is otherwise idle.)
    ones_rows = jnp.ones((8, B), jnp.float32)

    def matmul(a, w_ref):
        # Activations cast to the (possibly bf16) weight dtype, f32 accumulate.
        return jnp.dot(a.astype(w_ref.dtype), w_ref[...],
                       preferred_element_type=jnp.float32)

    def leaky_bn(y, g, be):
        # LeakyReLU then training-mode BatchNorm1d (biased batch variance).
        y = jnp.where(y > 0, y, NEG_SLOPE * y)
        # Batch stats via ones @ y on the MXU instead of cross-sublane (XLU)
        # reductions; BN folded into a single per-column affine y*a + c.
        s1 = jnp.dot(ones_rows, y, preferred_element_type=jnp.float32)[0:1]
        s2 = jnp.dot(ones_rows, y * y, preferred_element_type=jnp.float32)[0:1]
        mean = s1 * inv_b
        var = s2 * inv_b - mean * mean
        a = g * lax.rsqrt(var + EPS)
        c = be - mean * a
        return y * a + c

    l1 = leaky_bn(matmul(x, w1_ref) + b1_ref[...], g1_ref[...], be1_ref[...])
    l2 = leaky_bn(matmul(l1, w2_ref) + b2_ref[...], g2_ref[...], be2_ref[...])
    l3 = leaky_bn(matmul(l2, w3_ref) + b3_ref[...], g3_ref[...], be3_ref[...])

    # cat(l1,l2,l3) @ W4 == l1 @ W4[:h1] + l2 @ W4[h1:h1+h2] + l3 @ W4[h1+h2:]
    # (W4 split host-side -> no lane-misaligned concat inside the kernel.)
    pre4 = (matmul(l1, w4a_ref) + matmul(l2, w4b_ref) + matmul(l3, w4c_ref)
            + b4_ref[...])
    l4 = leaky_bn(pre4, g4_ref[...], be4_ref[...])

    # sc = l4 @ label_embeddings.T  (emb_t pre-transposed: [h4_pad, n_labels])
    sc = jnp.dot(l4.astype(emb_t_ref.dtype), emb_t_ref[...],
                 preferred_element_type=jnp.float32)

    # softmax over labels
    m = jnp.max(sc, axis=1, keepdims=True)
    e = jnp.exp(sc - m)
    denom = jnp.sum(e, axis=1, keepdims=True)
    r = pl.reciprocal(denom, approx=True)   # EUP slot (otherwise idle)
    r = r * (2.0 - denom * r)               # one Newton step -> ~f32 exact
    logits_ref[...] = e * r
    l4_ref[...] = l4


@functools.partial(jax.jit, static_argnames=("matmul_dtype",))
def encoder_forward(x, params, label_embeddings, *, matmul_dtype=jnp.float32):
    B = x.shape[0]
    h1 = params["w1"].shape[1]
    h2 = params["w2"].shape[1]
    h3 = params["w3"].shape[1]
    h4 = params["w4"].shape[1]
    n_labels = label_embeddings.shape[0]
    h1p, h2p, h3p, h4p = (_round_up(h, LANE) for h in (h1, h2, h3, h4))

    def pad2(a, rows, cols, const=0.0):
        return jnp.pad(a, ((0, rows - a.shape[0]), (0, cols - a.shape[1])),
                       constant_values=const)

    def padv(v, cols, const=0.0):
        return jnp.pad(v, ((0, 0), (0, cols - v.shape[1])),
                       constant_values=const)

    wd = matmul_dtype
    # Linear weights (pre-transposed [in, out]) zero-padded so every hidden
    # width is a multiple of 128 lanes; padded rows/cols are zero so the math
    # on the real columns is exact.
    w1 = pad2(params["w1"], params["w1"].shape[0], h1p).astype(wd)
    w2 = pad2(params["w2"], h1p, h2p).astype(wd)
    w3 = pad2(params["w3"], h2p, h3p).astype(wd)
    w4 = params["w4"]
    w4a = pad2(w4[:h1], h1p, h4p).astype(wd)           # rows fed by l1
    w4b = pad2(w4[h1:h1 + h2], h2p, h4p).astype(wd)    # rows fed by l2
    w4c = pad2(w4[h1 + h2:], h3p, h4p).astype(wd)      # rows fed by l3
    emb_t = pad2(label_embeddings.T, h4p, n_labels).astype(wd)

    # bias=0 / gamma=1 / beta=0 on padded columns -> padded activations stay 0.
    b1, g1, be1 = padv(params["b1"], h1p), padv(params["g1"], h1p, 1.0), padv(params["be1"], h1p)
    b2, g2, be2 = padv(params["b2"], h2p), padv(params["g2"], h2p, 1.0), padv(params["be2"], h2p)
    b3, g3, be3 = padv(params["b3"], h3p), padv(params["g3"], h3p, 1.0), padv(params["be3"], h3p)
    b4, g4, be4 = padv(params["b4"], h4p), padv(params["g4"], h4p, 1.0), padv(params["be4"], h4p)

    inputs = (x, w1, b1, g1, be1, w2, b2, g2, be2, w3, b3, g3, be3,
              w4a, w4b, w4c, b4, g4, be4, emb_t)

    # Single kernel invocation (no grid): whole arrays resident in VMEM with
    # no double-buffering of weights.
    # TODO(synk): for large batch (especially v7x: 64 MiB VMEM, 2 TensorCores)
    # tile the batch axis over a grid with a two-pass BatchNorm
    # (sum / sum-of-squares accumulation pass, then an apply pass).
    vmem = pl.BlockSpec(memory_space=pltpu.MemorySpace.VMEM)
    logits, l4p = pl.pallas_call(
        encoder_kernel,
        in_specs=[vmem] * len(inputs),
        out_specs=(vmem, vmem),
        out_shape=(jax.ShapeDtypeStruct((B, n_labels), jnp.float32),
                   jax.ShapeDtypeStruct((B, h4p), jnp.float32)),
    )(*inputs)
    return logits, l4p[:, :h4]


def init_params(key, input_dims, h1, h2, h3, h4):
    """Deterministic synthetic parameter init (Linear W^T, bias, BN gamma/beta)."""
    dims = [
        ("1", input_dims, h1),
        ("2", h1, h2),
        ("3", h2, h3),
        ("4", h1 + h2 + h3, h4),
    ]
    params = {}
    for name, din, dout in dims:
        key, k_w, k_b, k_g, k_be = jax.random.split(key, 5)
        scale = 1.0 / jnp.sqrt(jnp.float32(din))
        params[f"w{name}"] = jax.random.uniform(
            k_w, (din, dout), jnp.float32, -scale, scale)           # W^T
        params[f"b{name}"] = jax.random.uniform(
            k_b, (1, dout), jnp.float32, -scale, scale)
        params[f"g{name}"] = 1.0 + 0.1 * jax.random.normal(k_g, (1, dout), jnp.float32)
        params[f"be{name}"] = 0.1 * jax.random.normal(k_be, (1, dout), jnp.float32)
    return params, key


def reference_forward(x, params, label_embeddings, matmul_dtype=jnp.float32):
    """Pure-JAX reference of the same math (optionally with bf16 matmul operands)."""
    wd = matmul_dtype

    def fc(a, w, b, g, be):
        y = jnp.dot(a.astype(wd), w.astype(wd),
                    preferred_element_type=jnp.float32) + b
        y = jnp.where(y > 0, y, NEG_SLOPE * y)
        mean = jnp.mean(y, axis=0, keepdims=True)
        var = jnp.mean((y - mean) ** 2, axis=0, keepdims=True)
        return (y - mean) / jnp.sqrt(var + EPS) * g + be

    l1 = fc(x, params["w1"], params["b1"], params["g1"], params["be1"])
    l2 = fc(l1, params["w2"], params["b2"], params["g2"], params["be2"])
    l3 = fc(l2, params["w3"], params["b3"], params["g3"], params["be3"])
    l4 = fc(jnp.concatenate((l1, l2, l3), axis=1),
            params["w4"], params["b4"], params["g4"], params["be4"])
    sc = jnp.dot(l4.astype(wd), label_embeddings.T.astype(wd),
                 preferred_element_type=jnp.float32)
    logits = jax.nn.softmax(sc, axis=1)
    return logits, l4


if __name__ == "__main__":
    # Small, forward-consistent shapes (module defaults for hidden widths).
    batch = 16
    input_dims = 32
    h1, h2, h3, h4 = 300, 150, 150, 768
    n_labels = 8

    key = jax.random.PRNGKey(0)
    params, key = init_params(key, input_dims, h1, h2, h3, h4)
    key, k_x, k_e = jax.random.split(key, 3)
    x = jax.random.normal(k_x, (batch, input_dims), jnp.float32)
    label_embeddings = jax.random.normal(k_e, (n_labels, h4), jnp.float32)

    # --- f32 path: matches the PyTorch module's default precision. ---
    logits, l4 = encoder_forward(x, params, label_embeddings,
                                 matmul_dtype=jnp.float32)
    jax.block_until_ready((logits, l4))
    assert logits.shape == (batch, n_labels) and l4.shape == (batch, h4)

    ref_logits, ref_l4 = reference_forward(x, params, label_embeddings,
                                           jnp.float32)
    assert jnp.allclose(logits, ref_logits, atol=1e-3, rtol=1e-3)
    assert jnp.allclose(l4, ref_l4, atol=1e-3, rtol=1e-3)

    # --- bf16 matmul-operand path (recommended on v6e/v7x MXUs), verified
    #     against a reference that applies the identical operand casts. ---
    logits16, l4_16 = encoder_forward(x, params, label_embeddings,
                                      matmul_dtype=jnp.bfloat16)
    jax.block_until_ready((logits16, l4_16))
    ref_logits16, ref_l4_16 = reference_forward(x, params, label_embeddings,
                                                jnp.bfloat16)
    assert jnp.allclose(logits16, ref_logits16, atol=1e-2, rtol=1e-2)
    assert jnp.allclose(l4_16, ref_l4_16, atol=1e-2, rtol=1e-2)

    print("KERNEL_OK")
</pallas_src>

<mosaic_0001>
module attributes {stable_mosaic.version = 11 : i64} {
  func.func @encoder_kernel(%arg0: memref<16x32xf32, #tpu.memory_space<vmem>>, %arg1: memref<32x384xf32, #tpu.memory_space<vmem>>, %arg2: memref<1x384xf32, #tpu.memory_space<vmem>>, %arg3: memref<1x384xf32, #tpu.memory_space<vmem>>, %arg4: memref<1x384xf32, #tpu.memory_space<vmem>>, %arg5: memref<384x256xf32, #tpu.memory_space<vmem>>, %arg6: memref<1x256xf32, #tpu.memory_space<vmem>>, %arg7: memref<1x256xf32, #tpu.memory_space<vmem>>, %arg8: memref<1x256xf32, #tpu.memory_space<vmem>>, %arg9: memref<256x256xf32, #tpu.memory_space<vmem>>, %arg10: memref<1x256xf32, #tpu.memory_space<vmem>>, %arg11: memref<1x256xf32, #tpu.memory_space<vmem>>, %arg12: memref<1x256xf32, #tpu.memory_space<vmem>>, %arg13: memref<384x768xf32, #tpu.memory_space<vmem>>, %arg14: memref<256x768xf32, #tpu.memory_space<vmem>>, %arg15: memref<256x768xf32, #tpu.memory_space<vmem>>, %arg16: memref<1x768xf32, #tpu.memory_space<vmem>>, %arg17: memref<1x768xf32, #tpu.memory_space<vmem>>, %arg18: memref<1x768xf32, #tpu.memory_space<vmem>>, %arg19: memref<768x8xf32, #tpu.memory_space<vmem>>, %arg20: memref<16x8xf32, #tpu.memory_space<vmem>>, %arg21: memref<16x768xf32, #tpu.memory_space<vmem>>) attributes {dimension_semantics = [], scalar_prefetch = 0 : i64, scratch_operands = 0 : i64, tpu.core_type = #tpu.core_type<tc>} {
    %c0 = arith.constant 0 : index
    %c0_0 = arith.constant 0 : index
    %0 = vector.load %arg0[%c0, %c0_0] : memref<16x32xf32, #tpu.memory_space<vmem>>, vector<16x32xf32>
    %cst = arith.constant 1.000000e+00 : f32
    %1 = vector.broadcast %cst : f32 to vector<8x16xf32>
    %c0_1 = arith.constant 0 : index
    %c0_2 = arith.constant 0 : index
    %2 = vector.load %arg1[%c0_1, %c0_2] : memref<32x384xf32, #tpu.memory_space<vmem>>, vector<32x384xf32>
    %cst_3 = arith.constant dense<0.000000e+00> : vector<16x384xf32>
    %3 = tpu.matmul %0, %2, %cst_3 {dimension_numbers = #tpu.dot_dimension_numbers<[1], [0], [0], [1], [0, 0, 1, 1], [], []>} : vector<16x32xf32>, vector<32x384xf32>, vector<16x384xf32> -> vector<16x384xf32>
    %c0_4 = arith.constant 0 : index
    %c0_5 = arith.constant 0 : index
    %4 = vector.load %arg2[%c0_4, %c0_5] : memref<1x384xf32, #tpu.memory_space<vmem>>, vector<1x384xf32>
    %5 = vector.broadcast %4 : vector<1x384xf32> to vector<16x384xf32>
    %6 = arith.addf %3, %5 : vector<16x384xf32>
    %c0_6 = arith.constant 0 : index
    %c0_7 = arith.constant 0 : index
    %7 = vector.load %arg3[%c0_6, %c0_7] : memref<1x384xf32, #tpu.memory_space<vmem>>, vector<1x384xf32>
    %c0_8 = arith.constant 0 : index
    %c0_9 = arith.constant 0 : index
    %8 = vector.load %arg4[%c0_8, %c0_9] : memref<1x384xf32, #tpu.memory_space<vmem>>, vector<1x384xf32>
    %cst_10 = arith.constant 0.000000e+00 : f32
    %9 = vector.broadcast %cst_10 : f32 to vector<16x384xf32>
    %10 = arith.cmpf ogt, %6, %9 : vector<16x384xf32>
    %cst_11 = arith.constant 0.00999999977 : f32
    %11 = vector.broadcast %cst_11 : f32 to vector<16x384xf32>
    %12 = arith.mulf %11, %6 : vector<16x384xf32>
    %13 = arith.select %10, %6, %12 : vector<16x384xi1>, vector<16x384xf32>
    %cst_12 = arith.constant dense<0.000000e+00> : vector<8x384xf32>
    %14 = tpu.matmul %1, %13, %cst_12 {dimension_numbers = #tpu.dot_dimension_numbers<[1], [0], [0], [1], [0, 0, 1, 1], [], []>} : vector<8x16xf32>, vector<16x384xf32>, vector<8x384xf32> -> vector<8x384xf32>
    %15 = vector.extract_strided_slice %14 {offsets = [0, 0], sizes = [1, 384], strides = [1, 1]} : vector<8x384xf32> to vector<1x384xf32>
    %16 = arith.mulf %13, %13 : vector<16x384xf32>
    %cst_13 = arith.constant dense<0.000000e+00> : vector<8x384xf32>
    %17 = tpu.matmul %1, %16, %cst_13 {dimension_numbers = #tpu.dot_dimension_numbers<[1], [0], [0], [1], [0, 0, 1, 1], [], []>} : vector<8x16xf32>, vector<16x384xf32>, vector<8x384xf32> -> vector<8x384xf32>
    %18 = vector.extract_strided_slice %17 {offsets = [0, 0], sizes = [1, 384], strides = [1, 1]} : vector<8x384xf32> to vector<1x384xf32>
    %cst_14 = arith.constant 6.250000e-02 : f32
    %19 = vector.broadcast %cst_14 : f32 to vector<1x384xf32>
    %20 = arith.mulf %15, %19 : vector<1x384xf32>
    %cst_15 = arith.constant 6.250000e-02 : f32
    %21 = vector.broadcast %cst_15 : f32 to vector<1x384xf32>
    %22 = arith.mulf %18, %21 : vector<1x384xf32>
    %23 = arith.mulf %20, %20 : vector<1x384xf32>
    %24 = arith.subf %22, %23 : vector<1x384xf32>
    %cst_16 = arith.constant 9.99999974E-6 : f32
    %25 = vector.broadcast %cst_16 : f32 to vector<1x384xf32>
    %26 = arith.addf %24, %25 : vector<1x384xf32>
    %27 = math.rsqrt %26 : vector<1x384xf32>
    %28 = arith.mulf %7, %27 : vector<1x384xf32>
    %29 = arith.mulf %20, %28 : vector<1x384xf32>
    %30 = arith.subf %8, %29 : vector<1x384xf32>
    %31 = vector.broadcast %28 : vector<1x384xf32> to vector<16x384xf32>
    %32 = arith.mulf %13, %31 : vector<16x384xf32>
    %33 = vector.broadcast %30 : vector<1x384xf32> to vector<16x384xf32>
    %34 = arith.addf %32, %33 : vector<16x384xf32>
    %c0_17 = arith.constant 0 : index
    %c0_18 = arith.constant 0 : index
    %35 = vector.load %arg5[%c0_17, %c0_18] : memref<384x256xf32, #tpu.memory_space<vmem>>, vector<384x256xf32>
    %cst_19 = arith.constant dense<0.000000e+00> : vector<16x256xf32>
    %36 = tpu.matmul %34, %35, %cst_19 {dimension_numbers = #tpu.dot_dimension_numbers<[1], [0], [0], [1], [0, 0, 1, 1], [], []>} : vector<16x384xf32>, vector<384x256xf32>, vector<16x256xf32> -> vector<16x256xf32>
    %c0_20 = arith.constant 0 : index
    %c0_21 = arith.constant 0 : index
    %37 = vector.load %arg6[%c0_20, %c0_21] : memref<1x256xf32, #tpu.memory_space<vmem>>, vector<1x256xf32>
    %38 = vector.broadcast %37 : vector<1x256xf32> to vector<16x256xf32>
    %39 = arith.addf %36, %38 : vector<16x256xf32>
    %c0_22 = arith.constant 0 : index
    %c0_23 = arith.constant 0 : index
    %40 = vector.load %arg7[%c0_22, %c0_23] : memref<1x256xf32, #tpu.memory_space<vmem>>, vector<1x256xf32>
    %c0_24 = arith.constant 0 : index
    %c0_25 = arith.constant 0 : index
    %41 = vector.load %arg8[%c0_24, %c0_25] : memref<1x256xf32, #tpu.memory_space<vmem>>, vector<1x256xf32>
    %cst_26 = arith.constant 0.000000e+00 : f32
    %42 = vector.broadcast %cst_26 : f32 to vector<16x256xf32>
    %43 = arith.cmpf ogt, %39, %42 : vector<16x256xf32>
    %cst_27 = arith.constant 0.00999999977 : f32
    %44 = vector.broadcast %cst_27 : f32 to vector<16x256xf32>
    %45 = arith.mulf %44, %39 : vector<16x256xf32>
    %46 = arith.select %43, %39, %45 : vector<16x256xi1>, vector<16x256xf32>
    %cst_28 = arith.constant dense<0.000000e+00> : vector<8x256xf32>
    %47 = tpu.matmul %1, %46, %cst_28 {dimension_numbers = #tpu.dot_dimension_numbers<[1], [0], [0], [1], [0, 0, 1, 1], [], []>} : vector<8x16xf32>, vector<16x256xf32>, vector<8x256xf32> -> vector<8x256xf32>
    %48 = vector.extract_strided_slice %47 {offsets = [0, 0], sizes = [1, 256], strides = [1, 1]} : vector<8x256xf32> to vector<1x256xf32>
    %49 = arith.mulf %46, %46 : vector<16x256xf32>
    %cst_29 = arith.constant dense<0.000000e+00> : vector<8x256xf32>
    %50 = tpu.matmul %1, %49, %cst_29 {dimension_numbers = #tpu.dot_dimension_numbers<[1], [0], [0], [1], [0, 0, 1, 1], [], []>} : vector<8x16xf32>, vector<16x256xf32>, vector<8x256xf32> -> vector<8x256xf32>
    %51 = vector.extract_strided_slice %50 {offsets = [0, 0], sizes = [1, 256], strides = [1, 1]} : vector<8x256xf32> to vector<1x256xf32>
    %cst_30 = arith.constant 6.250000e-02 : f32
    %52 = vector.broadcast %cst_30 : f32 to vector<1x256xf32>
    %53 = arith.mulf %48, %52 : vector<1x256xf32>
    %cst_31 = arith.constant 6.250000e-02 : f32
    %54 = vector.broadcast %cst_31 : f32 to vector<1x256xf32>
    %55 = arith.mulf %51, %54 : vector<1x256xf32>
    %56 = arith.mulf %53, %53 : vector<1x256xf32>
    %57 = arith.subf %55, %56 : vector<1x256xf32>
    %cst_32 = arith.constant 9.99999974E-6 : f32
    %58 = vector.broadcast %cst_32 : f32 to vector<1x256xf32>
    %59 = arith.addf %57, %58 : vector<1x256xf32>
    %60 = math.rsqrt %59 : vector<1x256xf32>
    %61 = arith.mulf %40, %60 : vector<1x256xf32>
    %62 = arith.mulf %53, %61 : vector<1x256xf32>
    %63 = arith.subf %41, %62 : vector<1x256xf32>
    %64 = vector.broadcast %61 : vector<1x256xf32> to vector<16x256xf32>
    %65 = arith.mulf %46, %64 : vector<16x256xf32>
    %66 = vector.broadcast %63 : vector<1x256xf32> to vector<16x256xf32>
    %67 = arith.addf %65, %66 : vector<16x256xf32>
    %c0_33 = arith.constant 0 : index
    %c0_34 = arith.constant 0 : index
    %68 = vector.load %arg9[%c0_33, %c0_34] : memref<256x256xf32, #tpu.memory_space<vmem>>, vector<256x256xf32>
    %cst_35 = arith.constant dense<0.000000e+00> : vector<16x256xf32>
    %69 = tpu.matmul %67, %68, %cst_35 {dimension_numbers = #tpu.dot_dimension_numbers<[1], [0], [0], [1], [0, 0, 1, 1], [], []>} : vector<16x256xf32>, vector<256x256xf32>, vector<16x256xf32> -> vector<16x256xf32>
    %c0_36 = arith.constant 0 : index
    %c0_37 = arith.constant 0 : index
    %70 = vector.load %arg10[%c0_36, %c0_37] : memref<1x256xf32, #tpu.memory_space<vmem>>, vector<1x256xf32>
    %71 = vector.broadcast %70 : vector<1x256xf32> to vector<16x256xf32>
    %72 = arith.addf %69, %71 : vector<16x256xf32>
    %c0_38 = arith.constant 0 : index
    %c0_39 = arith.constant 0 : index
    %73 = vector.load %arg11[%c0_38, %c0_39] : memref<1x256xf32, #tpu.memory_space<vmem>>, vector<1x256xf32>
    %c0_40 = arith.constant 0 : index
    %c0_41 = arith.constant 0 : index
    %74 = vector.load %arg12[%c0_40, %c0_41] : memref<1x256xf32, #tpu.memory_space<vmem>>, vector<1x256xf32>
    %cst_42 = arith.constant 0.000000e+00 : f32
    %75 = vector.broadcast %cst_42 : f32 to vector<16x256xf32>
    %76 = arith.cmpf ogt, %72, %75 : vector<16x256xf32>
    %cst_43 = arith.constant 0.00999999977 : f32
    %77 = vector.broadcast %cst_43 : f32 to vector<16x256xf32>
    %78 = arith.mulf %77, %72 : vector<16x256xf32>
    %79 = arith.select %76, %72, %78 : vector<16x256xi1>, vector<16x256xf32>
    %cst_44 = arith.constant dense<0.000000e+00> : vector<8x256xf32>
    %80 = tpu.matmul %1, %79, %cst_44 {dimension_numbers = #tpu.dot_dimension_numbers<[1], [0], [0], [1], [0, 0, 1, 1], [], []>} : vector<8x16xf32>, vector<16x256xf32>, vector<8x256xf32> -> vector<8x256xf32>
    %81 = vector.extract_strided_slice %80 {offsets = [0, 0], sizes = [1, 256], strides = [1, 1]} : vector<8x256xf32> to vector<1x256xf32>
    %82 = arith.mulf %79, %79 : vector<16x256xf32>
    %cst_45 = arith.constant dense<0.000000e+00> : vector<8x256xf32>
    %83 = tpu.matmul %1, %82, %cst_45 {dimension_numbers = #tpu.dot_dimension_numbers<[1], [0], [0], [1], [0, 0, 1, 1], [], []>} : vector<8x16xf32>, vector<16x256xf32>, vector<8x256xf32> -> vector<8x256xf32>
    %84 = vector.extract_strided_slice %83 {offsets = [0, 0], sizes = [1, 256], strides = [1, 1]} : vector<8x256xf32> to vector<1x256xf32>
    %cst_46 = arith.constant 6.250000e-02 : f32
    %85 = vector.broadcast %cst_46 : f32 to vector<1x256xf32>
    %86 = arith.mulf %81, %85 : vector<1x256xf32>
    %cst_47 = arith.constant 6.250000e-02 : f32
    %87 = vector.broadcast %cst_47 : f32 to vector<1x256xf32>
    %88 = arith.mulf %84, %87 : vector<1x256xf32>
    %89 = arith.mulf %86, %86 : vector<1x256xf32>
    %90 = arith.subf %88, %89 : vector<1x256xf32>
    %cst_48 = arith.constant 9.99999974E-6 : f32
    %91 = vector.broadcast %cst_48 : f32 to vector<1x256xf32>
    %92 = arith.addf %90, %91 : vector<1x256xf32>
    %93 = math.rsqrt %92 : vector<1x256xf32>
    %94 = arith.mulf %73, %93 : vector<1x256xf32>
    %95 = arith.mulf %86, %94 : vector<1x256xf32>
    %96 = arith.subf %74, %95 : vector<1x256xf32>
    %97 = vector.broadcast %94 : vector<1x256xf32> to vector<16x256xf32>
    %98 = arith.mulf %79, %97 : vector<16x256xf32>
    %99 = vector.broadcast %96 : vector<1x256xf32> to vector<16x256xf32>
    %100 = arith.addf %98, %99 : vector<16x256xf32>
    %c0_49 = arith.constant 0 : index
    %c0_50 = arith.constant 0 : index
    %101 = vector.load %arg13[%c0_49, %c0_50] : memref<384x768xf32, #tpu.memory_space<vmem>>, vector<384x768xf32>
    %cst_51 = arith.constant dense<0.000000e+00> : vector<16x768xf32>
    %102 = tpu.matmul %34, %101, %cst_51 {dimension_numbers = #tpu.dot_dimension_numbers<[1], [0], [0], [1], [0, 0, 1, 1], [], []>} : vector<16x384xf32>, vector<384x768xf32>, vector<16x768xf32> -> vector<16x768xf32>
    %c0_52 = arith.constant 0 : index
    %c0_53 = arith.constant 0 : index
    %103 = vector.load %arg14[%c0_52, %c0_53] : memref<256x768xf32, #tpu.memory_space<vmem>>, vector<256x768xf32>
    %cst_54 = arith.constant dense<0.000000e+00> : vector<16x768xf32>
    %104 = tpu.matmul %67, %103, %cst_54 {dimension_numbers = #tpu.dot_dimension_numbers<[1], [0], [0], [1], [0, 0, 1, 1], [], []>} : vector<16x256xf32>, vector<256x768xf32>, vector<16x768xf32> -> vector<16x768xf32>
    %105 = arith.addf %102, %104 : vector<16x768xf32>
    %c0_55 = arith.constant 0 : index
    %c0_56 = arith.constant 0 : index
    %106 = vector.load %arg15[%c0_55, %c0_56] : memref<256x768xf32, #tpu.memory_space<vmem>>, vector<256x768xf32>
    %cst_57 = arith.constant dense<0.000000e+00> : vector<16x768xf32>
    %107 = tpu.matmul %100, %106, %cst_57 {dimension_numbers = #tpu.dot_dimension_numbers<[1], [0], [0], [1], [0, 0, 1, 1], [], []>} : vector<16x256xf32>, vector<256x768xf32>, vector<16x768xf32> -> vector<16x768xf32>
    %108 = arith.addf %105, %107 : vector<16x768xf32>
    %c0_58 = arith.constant 0 : index
    %c0_59 = arith.constant 0 : index
    %109 = vector.load %arg16[%c0_58, %c0_59] : memref<1x768xf32, #tpu.memory_space<vmem>>, vector<1x768xf32>
    %110 = vector.broadcast %109 : vector<1x768xf32> to vector<16x768xf32>
    %111 = arith.addf %108, %110 : vector<16x768xf32>
    %c0_60 = arith.constant 0 : index
    %c0_61 = arith.constant 0 : index
    %112 = vector.load %arg17[%c0_60, %c0_61] : memref<1x768xf32, #tpu.memory_space<vmem>>, vector<1x768xf32>
    %c0_62 = arith.constant 0 : index
    %c0_63 = arith.constant 0 : index
    %113 = vector.load %arg18[%c0_62, %c0_63] : memref<1x768xf32, #tpu.memory_space<vmem>>, vector<1x768xf32>
    %cst_64 = arith.constant 0.000000e+00 : f32
    %114 = vector.broadcast %cst_64 : f32 to vector<16x768xf32>
    %115 = arith.cmpf ogt, %111, %114 : vector<16x768xf32>
    %cst_65 = arith.constant 0.00999999977 : f32
    %116 = vector.broadcast %cst_65 : f32 to vector<16x768xf32>
    %117 = arith.mulf %116, %111 : vector<16x768xf32>
    %118 = arith.select %115, %111, %117 : vector<16x768xi1>, vector<16x768xf32>
    %cst_66 = arith.constant dense<0.000000e+00> : vector<8x768xf32>
    %119 = tpu.matmul %1, %118, %cst_66 {dimension_numbers = #tpu.dot_dimension_numbers<[1], [0], [0], [1], [0, 0, 1, 1], [], []>} : vector<8x16xf32>, vector<16x768xf32>, vector<8x768xf32> -> vector<8x768xf32>
    %120 = vector.extract_strided_slice %119 {offsets = [0, 0], sizes = [1, 768], strides = [1, 1]} : vector<8x768xf32> to vector<1x768xf32>
    %121 = arith.mulf %118, %118 : vector<16x768xf32>
    %cst_67 = arith.constant dense<0.000000e+00> : vector<8x768xf32>
    %122 = tpu.matmul %1, %121, %cst_67 {dimension_numbers = #tpu.dot_dimension_numbers<[1], [0], [0], [1], [0, 0, 1, 1], [], []>} : vector<8x16xf32>, vector<16x768xf32>, vector<8x768xf32> -> vector<8x768xf32>
    %123 = vector.extract_strided_slice %122 {offsets = [0, 0], sizes = [1, 768], strides = [1, 1]} : vector<8x768xf32> to vector<1x768xf32>
    %cst_68 = arith.constant 6.250000e-02 : f32
    %124 = vector.broadcast %cst_68 : f32 to vector<1x768xf32>
    %125 = arith.mulf %120, %124 : vector<1x768xf32>
    %cst_69 = arith.constant 6.250000e-02 : f32
    %126 = vector.broadcast %cst_69 : f32 to vector<1x768xf32>
    %127 = arith.mulf %123, %126 : vector<1x768xf32>
    %128 = arith.mulf %125, %125 : vector<1x768xf32>
    %129 = arith.subf %127, %128 : vector<1x768xf32>
    %cst_70 = arith.constant 9.99999974E-6 : f32
    %130 = vector.broadcast %cst_70 : f32 to vector<1x768xf32>
    %131 = arith.addf %129, %130 : vector<1x768xf32>
    %132 = math.rsqrt %131 : vector<1x768xf32>
    %133 = arith.mulf %112, %132 : vector<1x768xf32>
    %134 = arith.mulf %125, %133 : vector<1x768xf32>
    %135 = arith.subf %113, %134 : vector<1x768xf32>
    %136 = vector.broadcast %133 : vector<1x768xf32> to vector<16x768xf32>
    %137 = arith.mulf %118, %136 : vector<16x768xf32>
    %138 = vector.broadcast %135 : vector<1x768xf32> to vector<16x768xf32>
    %139 = arith.addf %137, %138 : vector<16x768xf32>
    %c0_71 = arith.constant 0 : index
    %c0_72 = arith.constant 0 : index
    %140 = vector.load %arg19[%c0_71, %c0_72] : memref<768x8xf32, #tpu.memory_space<vmem>>, vector<768x8xf32>
    %cst_73 = arith.constant dense<0.000000e+00> : vector<16x8xf32>
    %141 = tpu.matmul %139, %140, %cst_73 {dimension_numbers = #tpu.dot_dimension_numbers<[1], [0], [0], [1], [0, 0, 1, 1], [], []>} : vector<16x768xf32>, vector<768x8xf32>, vector<16x8xf32> -> vector<16x8xf32>
    %cst_74 = arith.constant dense<0xFF800000> : vector<16xf32>
    %142 = vector.multi_reduction <maximumf>, %141, %cst_74 [1] : vector<16x8xf32> to vector<16xf32>
    %143 = vector.shape_cast %142 : vector<16xf32> to vector<16x1xf32>
    %144 = vector.broadcast %143 : vector<16x1xf32> to vector<16x8xf32>
    %145 = arith.subf %141, %144 : vector<16x8xf32>
    %146 = math.exp %145 : vector<16x8xf32>
    %cst_75 = arith.constant dense<0.000000e+00> : vector<16xf32>
    %147 = vector.multi_reduction <add>, %146, %cst_75 [1] : vector<16x8xf32> to vector<16xf32>
    %148 = vector.shape_cast %147 : vector<16xf32> to vector<16x1xf32>
    %149 = tpu.reciprocal %148 {approx = true} : vector<16x1xf32> -> vector<16x1xf32>
    %150 = arith.mulf %148, %149 : vector<16x1xf32>
    %cst_76 = arith.constant 2.000000e+00 : f32
    %151 = vector.broadcast %cst_76 : f32 to vector<16x1xf32>
    %152 = arith.subf %151, %150 : vector<16x1xf32>
    %153 = arith.mulf %149, %152 : vector<16x1xf32>
    %154 = vector.broadcast %153 : vector<16x1xf32> to vector<16x8xf32>
    %155 = arith.mulf %146, %154 : vector<16x8xf32>
    %c0_77 = arith.constant 0 : index
    %c0_78 = arith.constant 0 : index
    %156 = vector.load %arg20[%c0_77, %c0_78] : memref<16x8xf32, #tpu.memory_space<vmem>>, vector<16x8xf32>
    tpu.vector_store %arg20[%c0_77, %c0_78], %155 {strides = array<i32>} : memref<16x8xf32, #tpu.memory_space<vmem>>, vector<16x8xf32>,
    %c0_79 = arith.constant 0 : index
    %c0_80 = arith.constant 0 : index
    %157 = vector.load %arg21[%c0_79, %c0_80] : memref<16x768xf32, #tpu.memory_space<vmem>>, vector<16x768xf32>
    tpu.vector_store %arg21[%c0_79, %c0_80], %139 {strides = array<i32>} : memref<16x768xf32, #tpu.memory_space<vmem>>, vector<16x768xf32>,
    return
  }
}

</mosaic_0001>

<llo_original>
// kernel: encoder_forward.1
$region0: #{encoder_forward.1}
  #allocation0 [shape = 'u32[]', space=smem, size = 0x4, offset = 0x4, fixed_abs, tag = 'smem constant byte address 0x4 - core index']
  #allocation1 [shape = 'u32[144,128]{1,0:T(1,128)}', space=vmem, size = 0x12000, scoped, tag = 'internal scratch']
  %s0 = inlined_call_operand.vmem [shape: f32[16,32], index: 0, kind: input, shape index: {}]
  %s1 = inlined_call_operand.vmem [shape: f32[32,384], index: 1, kind: input, shape index: {}]
  %s2 = inlined_call_operand.vmem [shape: f32[1,384], index: 2, kind: input, shape index: {}]
  %s3 = inlined_call_operand.vmem [shape: f32[1,384], index: 3, kind: input, shape index: {}]
  %s4 = inlined_call_operand.vmem [shape: f32[1,384], index: 4, kind: input, shape index: {}]
  %s5 = inlined_call_operand.vmem [shape: f32[384,256], index: 5, kind: input, shape index: {}]
  %s6 = inlined_call_operand.vmem [shape: f32[1,256], index: 6, kind: input, shape index: {}]
  %s7 = inlined_call_operand.vmem [shape: f32[1,256], index: 7, kind: input, shape index: {}]
  %s8 = inlined_call_operand.vmem [shape: f32[1,256], index: 8, kind: input, shape index: {}]
  %s9 = inlined_call_operand.vmem [shape: f32[256,256], index: 9, kind: input, shape index: {}]
  %s10 = inlined_call_operand.vmem [shape: f32[1,256], index: 10, kind: input, shape index: {}]
  %s11 = inlined_call_operand.vmem [shape: f32[1,256], index: 11, kind: input, shape index: {}]
  %s12 = inlined_call_operand.vmem [shape: f32[1,256], index: 12, kind: input, shape index: {}]
  %s13 = inlined_call_operand.vmem [shape: f32[384,768], index: 13, kind: input, shape index: {}]
  %s14 = inlined_call_operand.vmem [shape: f32[256,768], index: 14, kind: input, shape index: {}]
  %s15 = inlined_call_operand.vmem [shape: f32[256,768], index: 15, kind: input, shape index: {}]
  %s16 = inlined_call_operand.vmem [shape: f32[1,768], index: 16, kind: input, shape index: {}]
  %s17 = inlined_call_operand.vmem [shape: f32[1,768], index: 17, kind: input, shape index: {}]
  %s18 = inlined_call_operand.vmem [shape: f32[1,768], index: 18, kind: input, shape index: {}]
  %s19 = inlined_call_operand.vmem [shape: f32[768,8], index: 19, kind: input, shape index: {}]
  %s20 = inlined_call_operand.vmem [shape: f32[16,8], index: 20, kind: output, shape index: {0}]
  %s21 = inlined_call_operand.hbm [shape: f32[16,768], index: 21, kind: output, shape index: {1}]
  %22 = xla_tuple %s20, %s21
  %s23 = sld [smem:[#allocation0]]
  $region98: #{encoder_forward.1} parent=0
    _
  %s25 = ssub.s32 1, %s23
  %s26 = scalar_select 0, %s25, %s23
  $region1: #{encoder_forward.1} parent=0
    #allocation2 [shape = 'u8[49152]{0}', space=vmem, size = 0xc000, scoped, tag = 'output window, operand 1, single buffered']
    #allocation3 [shape = 's32[1]{0}', space=sflag, size = 0x4, scoped, tag = 'scoped memory for encoder_forward.1']
    %27 = vsyncpa [#allocation3], 0
    // Predicated region
    $region2: #{encoder_forward.1} parent=1 // pred_check
      _
    $region3: #{encoder_forward.1} parent=1 // pred_check_branch
      %29 = sbr.rel (0) target = $region5
    $region4: #{encoder_forward.1} parent=1 // pred_region
      _
    $region5: #{encoder_forward.1} parent=1 // pred_fallthru
      _
    // Predicated region
    $region6: #{encoder_forward.1} parent=1 // pred_check
      _
    $region7: #{encoder_forward.1} parent=1 // pred_check_branch
      %31 = sbr.rel (0) target = $region9
    $region8: #{encoder_forward.1} parent=1 // pred_region
      _
    $region9: #{encoder_forward.1} parent=1 // pred_fallthru
      _
    // Predicated region
    $region10: #{encoder_forward.1} parent=1 // pred_check
      _
    $region11: #{encoder_forward.1} parent=1 // pred_check_branch
      %33 = sbr.rel (0) target = $region13
    $region12: #{encoder_forward.1} parent=1 // pred_region
      _
    $region13: #{encoder_forward.1} parent=1 // pred_fallthru
      _
    // Predicated region
    $region14: #{encoder_forward.1} parent=1 // pred_check
      _
    $region15: #{encoder_forward.1} parent=1 // pred_check_branch
      %35 = sbr.rel (0) target = $region17
    $region16: #{encoder_forward.1} parent=1 // pred_region
      _
    $region17: #{encoder_forward.1} parent=1 // pred_fallthru
      _
    // Predicated region
    $region18: #{encoder_forward.1} parent=1 // pred_check
      _
    $region19: #{encoder_forward.1} parent=1 // pred_check_branch
      %37 = sbr.rel (0) target = $region21
    $region20: #{encoder_forward.1} parent=1 // pred_region
      _
    $region21: #{encoder_forward.1} parent=1 // pred_fallthru
      _
    // Predicated region
    $region22: #{encoder_forward.1} parent=1 // pred_check
      _
    $region23: #{encoder_forward.1} parent=1 // pred_check_branch
      %39 = sbr.rel (0) target = $region25
    $region24: #{encoder_forward.1} parent=1 // pred_region
      _
    $region25: #{encoder_forward.1} parent=1 // pred_fallthru
      _
    // Predicated region
    $region26: #{encoder_forward.1} parent=1 // pred_check
      _
    $region27: #{encoder_forward.1} parent=1 // pred_check_branch
      %41 = sbr.rel (0) target = $region29
    $region28: #{encoder_forward.1} parent=1 // pred_region
      _
    $region29: #{encoder_forward.1} parent=1 // pred_fallthru
      _
    // Predicated region
    $region30: #{encoder_forward.1} parent=1 // pred_check
      _
    $region31: #{encoder_forward.1} parent=1 // pred_check_branch
      %43 = sbr.rel (0) target = $region33
    $region32: #{encoder_forward.1} parent=1 // pred_region
      _
    $region33: #{encoder_forward.1} parent=1 // pred_fallthru
      _
    // Predicated region
    $region34: #{encoder_forward.1} parent=1 // pred_check
      _
    $region35: #{encoder_forward.1} parent=1 // pred_check_branch
      %45 = sbr.rel (0) target = $region37
    $region36: #{encoder_forward.1} parent=1 // pred_region
      _
    $region37: #{encoder_forward.1} parent=1 // pred_fallthru
      _
    // Predicated region
    $region38: #{encoder_forward.1} parent=1 // pred_check
      _
    $region39: #{encoder_forward.1} parent=1 // pred_check_branch
      %47 = sbr.rel (0) target = $region41
    $region40: #{encoder_forward.1} parent=1 // pred_region
      _
    $region41: #{encoder_forward.1} parent=1 // pred_fallthru
      _
    // Predicated region
    $region42: #{encoder_forward.1} parent=1 // pred_check
      _
    $region43: #{encoder_forward.1} parent=1 // pred_check_branch
      %49 = sbr.rel (0) target = $region45
    $region44: #{encoder_forward.1} parent=1 // pred_region
      _
    $region45: #{encoder_forward.1} parent=1 // pred_fallthru
      _
    // Predicated region
    $region46: #{encoder_forward.1} parent=1 // pred_check
      _
    $region47: #{encoder_forward.1} parent=1 // pred_check_branch
      %51 = sbr.rel (0) target = $region49
    $region48: #{encoder_forward.1} parent=1 // pred_region
      _
    $region49: #{encoder_forward.1} parent=1 // pred_fallthru
      _
    // Predicated region
    $region50: #{encoder_forward.1} parent=1 // pred_check
      _
    $region51: #{encoder_forward.1} parent=1 // pred_check_branch
      %53 = sbr.rel (0) target = $region53
    $region52: #{encoder_forward.1} parent=1 // pred_region
      _
    $region53: #{encoder_forward.1} parent=1 // pred_fallthru
      _
    // Predicated region
    $region54: #{encoder_forward.1} parent=1 // pred_check
      _
    $region55: #{encoder_forward.1} parent=1 // pred_check_branch
      %55 = sbr.rel (0) target = $region57
    $region56: #{encoder_forward.1} parent=1 // pred_region
      _
    $region57: #{encoder_forward.1} parent=1 // pred_fallthru
      _
    // Predicated region
    $region58: #{encoder_forward.1} parent=1 // pred_check
      _
    $region59: #{encoder_forward.1} parent=1 // pred_check_branch
      %57 = sbr.rel (0) target = $region61
    $region60: #{encoder_forward.1} parent=1 // pred_region
      _
    $region61: #{encoder_forward.1} parent=1 // pred_fallthru
      _
    // Predicated region
    $region62: #{encoder_forward.1} parent=1 // pred_check
      _
    $region63: #{encoder_forward.1} parent=1 // pred_check_branch
      %59 = sbr.rel (0) target = $region65
    $region64: #{encoder_forward.1} parent=1 // pred_region
      _
    $region65: #{encoder_forward.1} parent=1 // pred_fallthru
      _
    // Predicated region
    $region66: #{encoder_forward.1} parent=1 // pred_check
      _
    $region67: #{encoder_forward.1} parent=1 // pred_check_branch
      %61 = sbr.rel (0) target = $region69
    $region68: #{encoder_forward.1} parent=1 // pred_region
      _
    $region69: #{encoder_forward.1} parent=1 // pred_fallthru
      _
    // Predicated region
    $region70: #{encoder_forward.1} parent=1 // pred_check
      _
    $region71: #{encoder_forward.1} parent=1 // pred_check_branch
      %63 = sbr.rel (0) target = $region73
    $region72: #{encoder_forward.1} parent=1 // pred_region
      _
    $region73: #{encoder_forward.1} parent=1 // pred_fallthru
      _
    // Predicated region
    $region74: #{encoder_forward.1} parent=1 // pred_check
      _
    $region75: #{encoder_forward.1} parent=1 // pred_check_branch
      %65 = sbr.rel (0) target = $region77
    $region76: #{encoder_forward.1} parent=1 // pred_region
      _
    $region77: #{encoder_forward.1} parent=1 // pred_fallthru
      _
    // Predicated region
    $region78: #{encoder_forward.1} parent=1 // pred_check
      _
    $region79: #{encoder_forward.1} parent=1 // pred_check_branch
      %67 = sbr.rel (0) target = $region81
    $region80: #{encoder_forward.1} parent=1 // pred_region
      _
    $region81: #{encoder_forward.1} parent=1 // pred_fallthru
      _
    %v68 = vld [vmem:[%s0] sm:$0xff]
    %v69 = vld [vmem:[%s0 + $0x8] sm:$0xff]
    %v70 = vld [vmem:[%s1] sm:$0xff]
    %v71 = vld [vmem:[%s1 + $0x8] sm:$0xff]
    %v72 = vld [vmem:[%s1 + $0x10] sm:$0xff]
    %v73 = vld [vmem:[%s1 + $0x18] sm:$0xff]
    %v74 = vld [vmem:[%s1 + $0x20] sm:$0xff]
    %v75 = vld [vmem:[%s1 + $0x28] sm:$0xff]
    %v76 = vld [vmem:[%s1 + $0x30] sm:$0xff]
    %v77 = vld [vmem:[%s1 + $0x38] sm:$0xff]
    %v78 = vld [vmem:[%s1 + $0x40] sm:$0xff]
    %v79 = vld [vmem:[%s1 + $0x48] sm:$0xff]
    %v80 = vld [vmem:[%s1 + $0x50] sm:$0xff]
    %v81 = vld [vmem:[%s1 + $0x58] sm:$0xff]
    %v82 = vld [vmem:[%s2] sm:$0x7]
    %v84 = vlaneseq
    %v85 = vshrl.u32 %v84, 7
    %v86 = vsub.s32 0, %v85
    %v87 = vrot.slane %v82, %v86
    %v88 = vlaneseq
    %v89 = vshrl.u32 %v88, 7
    %v90 = vsub.s32 1, %v89
    %v91 = vrot.slane %v82, %v90
    %v92 = vlaneseq
    %v93 = vshrl.u32 %v92, 7
    %v94 = vsub.s32 2, %v93
    %v95 = vrot.slane %v82, %v94
    %vm99 = vcmask 261120
    %v101 = vsel %vm99, %v68, 0
    %v104 = vsel %vm99, %v69, 0
    %106 = vmatprep.subr.mxu0 0.0
    %107 = vmatpush1.msra.mxu0 0.0
    %108 = vmatprep.subr.mxu0 0.0
    %109 = vmatpush1.msra.mxu0 0.0
    %110 = vmatprep.subr.mxu0 0.0
    %111 = vmatpush1.msra.mxu0 0.0
    %112 = vmatprep.subr.mxu0 0.0
    %113 = vmatpush1.msra.mxu0 0.0
    %114 = vmatprep.subr.mxu0 0.0
    %115 = vmatpush1.msra.mxu0 0.0
    %116 = vmatprep.subr.mxu0 0.0
    %117 = vmatpush1.msra.mxu0 0.0
    %118 = vmatprep.subr.mxu0 0.0
    %119 = vmatpush1.msra.mxu0 0.0
    %120 = vmatprep.subr.mxu0 0.0
    %121 = vmatpush1.msra.mxu0 0.0
    %122 = vmatprep.subr.mxu0 0.0
    %123 = vmatpush1.msra.mxu0 0.0
    %124 = vmatprep.subr.mxu0 0.0
    %125 = vmatpush1.msra.mxu0 0.0
    %126 = vmatprep.subr.mxu0 0.0
    %127 = vmatpush1.msra.mxu0 0.0
    %128 = vmatprep.subr.mxu0 0.0
    %129 = vmatpush1.msra.mxu0 0.0
    %130 = vmatprep.subr.mxu0 %v80
    %131 = vmatpush1.msra.mxu0 %v79
    %132 = vmatprep.subr.mxu0 %v77
    %133 = vmatpush1.msra.mxu0 %v76
    %134 = vmatprep.subr.mxu0 %v74
    %135 = vmatpush1.msra.mxu0 %v73
    %136 = vmatprep.subr.mxu0 %v71
    %137 = vmatpush1.msra.mxu0 %v70
    %138 = vmatprep.subr.mxu0 0.0
    %139 = vmatpush2.msra.mxu0 0.0
    %140 = vmatprep.subr.mxu0 0.0
    %141 = vmatpush2.msra.mxu0 0.0
    %142 = vmatprep.subr.mxu0 0.0
    %143 = vmatpush2.msra.mxu0 0.0
    %144 = vmatprep.subr.mxu0 0.0
    %145 = vmatpush2.msra.mxu0 0.0
    %146 = vmatprep.subr.mxu0 0.0
    %147 = vmatpush2.msra.mxu0 0.0
    %148 = vmatprep.subr.mxu0 0.0
    %149 = vmatpush2.msra.mxu0 0.0
    %150 = vmatprep.subr.mxu0 0.0
    %151 = vmatpush2.msra.mxu0 0.0
    %152 = vmatprep.subr.mxu0 0.0
    %153 = vmatpush2.msra.mxu0 0.0
    %154 = vmatprep.subr.mxu0 0.0
    %155 = vmatpush2.msra.mxu0 0.0
    %156 = vmatprep.subr.mxu0 0.0
    %157 = vmatpush2.msra.mxu0 0.0
    %158 = vmatprep.subr.mxu0 0.0
    %159 = vmatpush2.msra.mxu0 0.0
    %160 = vmatprep.subr.mxu0 0.0
    %161 = vmatpush2.msra.mxu0 0.0
    %162 = vmatprep.subr.mxu0 0.0
    %163 = vmatpush2.msra.mxu0 0.0
    %164 = vmatprep.subr.mxu0 0.0
    %165 = vmatpush2.msra.mxu0 0.0
    %166 = vmatprep.subr.mxu0 0.0
    %167 = vmatpush2.msra.mxu0 0.0
    %168 = vmatprep.subr.mxu0 0.0
    %169 = vmatpush2.msra.mxu0 0.0
    %170 = vmatprep.mubr.f32.mxu0 0.0
    %171 = vmatmul.mubr.f32.gmra.mxu0 %v101
    %v172 = vpop.f32.mrf.mxu0
    %v173 = vadd.f32 %v87, %v172
    %v174 = vpop.f32.mrf.mxu0
    %v175 = vadd.f32 %v91, %v174
    %176 = vmatprep.mubr.f32.mxu0 0.0
    %177 = vmatmul.mubr.f32.gmra.mxu0 %v104
    %v178 = vpop.f32.mrf.mxu0
    %v179 = vadd.f32 %v87, %v178
    %v180 = vpop.f32.mrf.mxu0
    %v181 = vadd.f32 %v91, %v180
    %182 = vdwg.mxu0
    %183 = vmatprep.subr.mxu0 0.0
    %184 = vmatpush1.msra.mxu0 0.0
    %185 = vmatprep.subr.mxu0 0.0
    %186 = vmatpush1.msra.mxu0 0.0
    %187 = vmatprep.subr.mxu0 0.0
    %188 = vmatpush1.msra.mxu0 0.0
    %189 = vmatprep.subr.mxu0 0.0
    %190 = vmatpush1.msra.mxu0 0.0
    %191 = vmatprep.subr.mxu0 0.0
    %192 = vmatpush1.msra.mxu0 0.0
    %193 = vmatprep.subr.mxu0 0.0
    %194 = vmatpush1.msra.mxu0 0.0
    %195 = vmatprep.subr.mxu0 0.0
    %196 = vmatpush1.msra.mxu0 0.0
    %197 = vmatprep.subr.mxu0 0.0
    %198 = vmatpush1.msra.mxu0 0.0
    %199 = vmatprep.subr.mxu0 0.0
    %200 = vmatpush1.msra.mxu0 0.0
    %201 = vmatprep.subr.mxu0 0.0
    %202 = vmatpush1.msra.mxu0 0.0
    %203 = vmatprep.subr.mxu0 0.0
    %204 = vmatpush1.msra.mxu0 0.0
    %205 = vmatprep.subr.mxu0 0.0
    %206 = vmatpush1.msra.mxu0 0.0
    %207 = vmatprep.subr.mxu0 0.0
    %208 = vmatpush1.msra.mxu0 %v81
    %209 = vmatprep.subr.mxu0 0.0
    %210 = vmatpush1.msra.mxu0 %v78
    %211 = vmatprep.subr.mxu0 0.0
    %212 = vmatpush1.msra.mxu0 %v75
    %213 = vmatprep.subr.mxu0 0.0
    %214 = vmatpush1.msra.mxu0 %v72
    %215 = vmatprep.subr.mxu0 0.0
    %216 = vmatpush2.msra.mxu0 0.0
    %217 = vmatprep.subr.mxu0 0.0
    %218 = vmatpush2.msra.mxu0 0.0
    %219 = vmatprep.subr.mxu0 0.0
    %220 = vmatpush2.msra.mxu0 0.0
    %221 = vmatprep.subr.mxu0 0.0
    %222 = vmatpush2.msra.mxu0 0.0
    %223 = vmatprep.subr.mxu0 0.0
    %224 = vmatpush2.msra.mxu0 0.0
    %225 = vmatprep.subr.mxu0 0.0
    %226 = vmatpush2.msra.mxu0 0.0
    %227 = vmatprep.subr.mxu0 0.0
    %228 = vmatpush2.msra.mxu0 0.0
    %229 = vmatprep.subr.mxu0 0.0
    %230 = vmatpush2.msra.mxu0 0.0
    %231 = vmatprep.subr.mxu0 0.0
    %232 = vmatpush2.msra.mxu0 0.0
    %233 = vmatprep.subr.mxu0 0.0
    %234 = vmatpush2.msra.mxu0 0.0
    %235 = vmatprep.subr.mxu0 0.0
    %236 = vmatpush2.msra.mxu0 0.0
    %237 = vmatprep.subr.mxu0 0.0
    %238 = vmatpush2.msra.mxu0 0.0
    %239 = vmatprep.subr.mxu0 0.0
    %240 = vmatpush2.msra.mxu0 0.0
    %241 = vmatprep.subr.mxu0 0.0
    %242 = vmatpush2.msra.mxu0 0.0
    %243 = vmatprep.subr.mxu0 0.0
    %244 = vmatpush2.msra.mxu0 0.0
    %245 = vmatprep.subr.mxu0 0.0
    %246 = vmatpush2.msra.mxu0 0.0
    %247 = vmatprep.mubr.f32.mxu0 0.0
    %248 = vmatmul.mubr.f32.gmra.mxu0 %v101
    %v249 = vpop.f32.mrf.mxu0
    %v250 = vadd.f32 %v95, %v249
    %v251 = vpop.f32.mrf.mxu0
    %252 = vmatprep.mubr.f32.mxu0 0.0
    %253 = vmatmul.mubr.f32.gmra.mxu0 %v104
    %v254 = vpop.f32.mrf.mxu0
    %v255 = vadd.f32 %v95, %v254
    %v256 = vpop.f32.mrf.mxu0
    %257 = vdwg.mxu0
    %v258 = vld [vmem:[%s3] sm:$0x7]
    %v259 = vld [vmem:[%s4] sm:$0x7]
    %vm260 = vcmp.gt.f32.partialorder %v173, 0.0
    %vm261 = vcmp.gt.f32.partialorder %v175, 0.0
    %vm262 = vcmp.gt.f32.partialorder %v250, 0.0
    %vm263 = vcmp.gt.f32.partialorder %v179, 0.0
    %vm264 = vcmp.gt.f32.partialorder %v181, 0.0
    %vm265 = vcmp.gt.f32.partialorder %v255, 0.0
    %v266 = vmul.f32 %v173, 0.01
    %v267 = vmul.f32 %v175, 0.01
    %v268 = vmul.f32 %v250, 0.01
    %v269 = vmul.f32 %v179, 0.01
    %v270 = vmul.f32 %v181, 0.01
    %v271 = vmul.f32 %v255, 0.01
    %v272 = vsel %vm260, %v173, %v266
    %v273 = vsel %vm261, %v175, %v267
    %v274 = vsel %vm262, %v250, %v268
    %v275 = vsel %vm263, %v179, %v269
    %v276 = vsel %vm264, %v181, %v270
    %v277 = vsel %vm265, %v255, %v271
    %vm278 = vcmask 130048
    %v280 = vsel %vm278, 1.0, 0
    %282 = vmatprep.subr.mxu0 0.0
    %283 = vmatpush1.msra.mxu0 0.0
    %284 = vmatprep.subr.mxu0 0.0
    %285 = vmatpush1.msra.mxu0 0.0
    %286 = vmatprep.subr.mxu0 0.0
    %287 = vmatpush1.msra.mxu0 0.0
    %288 = vmatprep.subr.mxu0 0.0
    %289 = vmatpush1.msra.mxu0 0.0
    %290 = vmatprep.subr.mxu0 0.0
    %291 = vmatpush1.msra.mxu0 0.0
    %292 = vmatprep.subr.mxu0 0.0
    %293 = vmatpush1.msra.mxu0 0.0
    %294 = vmatprep.subr.mxu0 0.0
    %295 = vmatpush1.msra.mxu0 0.0
    %296 = vmatprep.subr.mxu0 0.0
    %297 = vmatpush1.msra.mxu0 0.0
    %298 = vmatprep.subr.mxu0 0.0
    %299 = vmatpush1.msra.mxu0 0.0
    %300 = vmatprep.subr.mxu0 0.0
    %301 = vmatpush1.msra.mxu0 0.0
    %302 = vmatprep.subr.mxu0 0.0
    %303 = vmatpush1.msra.mxu0 0.0
    %304 = vmatprep.subr.mxu0 0.0
    %305 = vmatpush1.msra.mxu0 0.0
    %306 = vmatprep.subr.mxu0 0.0
    %307 = vmatpush1.msra.mxu0 0.0
    %308 = vmatprep.subr.mxu0 0.0
    %309 = vmatpush1.msra.mxu0 0.0
    %310 = vmatprep.subr.mxu0 %v276
    %311 = vmatpush1.msra.mxu0 %v275
    %312 = vmatprep.subr.mxu0 %v273
    %313 = vmatpush1.msra.mxu0 %v272
    %314 = vmatprep.subr.mxu0 0.0
    %315 = vmatpush2.msra.mxu0 0.0
    %316 = vmatprep.subr.mxu0 0.0
    %317 = vmatpush2.msra.mxu0 0.0
    %318 = vmatprep.subr.mxu0 0.0
    %319 = vmatpush2.msra.mxu0 0.0
    %320 = vmatprep.subr.mxu0 0.0
    %321 = vmatpush2.msra.mxu0 0.0
    %322 = vmatprep.subr.mxu0 0.0
    %323 = vmatpush2.msra.mxu0 0.0
    %324 = vmatprep.subr.mxu0 0.0
    %325 = vmatpush2.msra.mxu0 0.0
    %326 = vmatprep.subr.mxu0 0.0
    %327 = vmatpush2.msra.mxu0 0.0
    %328 = vmatprep.subr.mxu0 0.0
    %329 = vmatpush2.msra.mxu0 0.0
    %330 = vmatprep.subr.mxu0 0.0
    %331 = vmatpush2.msra.mxu0 0.0
    %332 = vmatprep.subr.mxu0 0.0
    %333 = vmatpush2.msra.mxu0 0.0
    %334 = vmatprep.subr.mxu0 0.0
    %335 = vmatpush2.msra.mxu0 0.0
    %336 = vmatprep.subr.mxu0 0.0
    %337 = vmatpush2.msra.mxu0 0.0
    %338 = vmatprep.subr.mxu0 0.0
    %339 = vmatpush2.msra.mxu0 0.0
    %340 = vmatprep.subr.mxu0 0.0
    %341 = vmatpush2.msra.mxu0 0.0
    %342 = vmatprep.subr.mxu0 0.0
    %343 = vmatpush2.msra.mxu0 0.0
    %344 = vmatprep.subr.mxu0 0.0
    %345 = vmatpush2.msra.mxu0 0.0
    %346 = vmatprep.mubr.f32.mxu0 0.0
    %347 = vmatmul.mubr.f32.gmra.mxu0 %v280
    %v348 = vpop.f32.mrf.mxu0
    %v349 = vadd.f32 0.0, %v348
    %v350 = vpop.f32.mrf.mxu0
    %v351 = vadd.f32 0.0, %v350
    %352 = vdwg.mxu0
    %353 = vmatprep.subr.mxu0 0.0
    %354 = vmatpush1.msra.mxu0 0.0
    %355 = vmatprep.subr.mxu0 0.0
    %356 = vmatpush1.msra.mxu0 0.0
    %357 = vmatprep.subr.mxu0 0.0
    %358 = vmatpush1.msra.mxu0 0.0
    %359 = vmatprep.subr.mxu0 0.0
    %360 = vmatpush1.msra.mxu0 0.0
    %361 = vmatprep.subr.mxu0 0.0
    %362 = vmatpush1.msra.mxu0 0.0
    %363 = vmatprep.subr.mxu0 0.0
    %364 = vmatpush1.msra.mxu0 0.0
    %365 = vmatprep.subr.mxu0 0.0
    %366 = vmatpush1.msra.mxu0 0.0
    %367 = vmatprep.subr.mxu0 0.0
    %368 = vmatpush1.msra.mxu0 0.0
    %369 = vmatprep.subr.mxu0 0.0
    %370 = vmatpush1.msra.mxu0 0.0
    %371 = vmatprep.subr.mxu0 0.0
    %372 = vmatpush1.msra.mxu0 0.0
    %373 = vmatprep.subr.mxu0 0.0
    %374 = vmatpush1.msra.mxu0 0.0
    %375 = vmatprep.subr.mxu0 0.0
    %376 = vmatpush1.msra.mxu0 0.0
    %377 = vmatprep.subr.mxu0 0.0
    %378 = vmatpush1.msra.mxu0 0.0
    %379 = vmatprep.subr.mxu0 0.0
    %380 = vmatpush1.msra.mxu0 0.0
    %381 = vmatprep.subr.mxu0 0.0
    %382 = vmatpush1.msra.mxu0 %v277
    %383 = vmatprep.subr.mxu0 0.0
    %384 = vmatpush1.msra.mxu0 %v274
    %385 = vmatprep.subr.mxu0 0.0
    %386 = vmatpush2.msra.mxu0 0.0
    %387 = vmatprep.subr.mxu0 0.0
    %388 = vmatpush2.msra.mxu0 0.0
    %389 = vmatprep.subr.mxu0 0.0
    %390 = vmatpush2.msra.mxu0 0.0
    %391 = vmatprep.subr.mxu0 0.0
    %392 = vmatpush2.msra.mxu0 0.0
    %393 = vmatprep.subr.mxu0 0.0
    %394 = vmatpush2.msra.mxu0 0.0
    %395 = vmatprep.subr.mxu0 0.0
    %396 = vmatpush2.msra.mxu0 0.0
    %397 = vmatprep.subr.mxu0 0.0
    %398 = vmatpush2.msra.mxu0 0.0
    %399 = vmatprep.subr.mxu0 0.0
    %400 = vmatpush2.msra.mxu0 0.0
    %401 = vmatprep.subr.mxu0 0.0
    %402 = vmatpush2.msra.mxu0 0.0
    %403 = vmatprep.subr.mxu0 0.0
    %404 = vmatpush2.msra.mxu0 0.0
    %405 = vmatprep.subr.mxu0 0.0
    %406 = vmatpush2.msra.mxu0 0.0
    %407 = vmatprep.subr.mxu0 0.0
    %408 = vmatpush2.msra.mxu0 0.0
    %409 = vmatprep.subr.mxu0 0.0
    %410 = vmatpush2.msra.mxu0 0.0
    %411 = vmatprep.subr.mxu0 0.0
    %412 = vmatpush2.msra.mxu0 0.0
    %413 = vmatprep.subr.mxu0 0.0
    %414 = vmatpush2.msra.mxu0 0.0
    %415 = vmatprep.subr.mxu0 0.0
    %416 = vmatpush2.msra.mxu0 0.0
    %417 = vmatprep.mubr.f32.mxu0 0.0
    %418 = vmatmul.mubr.f32.gmra.mxu0 %v280
    %v419 = vpop.f32.mrf.mxu0
    %v420 = vadd.f32 0.0, %v419
    %v421 = vpop.f32.mrf.mxu0
    %422 = vdwg.mxu0
    %v423 = vmul.f32 %v272, %v272
    %v424 = vmul.f32 %v273, %v273
    %v425 = vmul.f32 %v274, %v274
    %v426 = vmul.f32 %v275, %v275
    %v427 = vmul.f32 %v276, %v276
    %v428 = vmul.f32 %v277, %v277
    %429 = vmatprep.subr.mxu0 0.0
    %430 = vmatpush1.msra.mxu0 0.0
    %431 = vmatprep.subr.mxu0 0.0
    %432 = vmatpush1.msra.mxu0 0.0
    %433 = vmatprep.subr.mxu0 0.0
    %434 = vmatpush1.msra.mxu0 0.0
    %435 = vmatprep.subr.mxu0 0.0
    %436 = vmatpush1.msra.mxu0 0.0
    %437 = vmatprep.subr.mxu0 0.0
    %438 = vmatpush1.msra.mxu0 0.0
    %439 = vmatprep.subr.mxu0 0.0
    %440 = vmatpush1.msra.mxu0 0.0
    %441 = vmatprep.subr.mxu0 0.0
    %442 = vmatpush1.msra.mxu0 0.0
    %443 = vmatprep.subr.mxu0 0.0
    %444 = vmatpush1.msra.mxu0 0.0
    %445 = vmatprep.subr.mxu0 0.0
    %446 = vmatpush1.msra.mxu0 0.0
    %447 = vmatprep.subr.mxu0 0.0
    %448 = vmatpush1.msra.mxu0 0.0
    %449 = vmatprep.subr.mxu0 0.0
    %450 = vmatpush1.msra.mxu0 0.0
    %451 = vmatprep.subr.mxu0 0.0
    %452 = vmatpush1.msra.mxu0 0.0
    %453 = vmatprep.subr.mxu0 0.0
    %454 = vmatpush1.msra.mxu0 0.0
    %455 = vmatprep.subr.mxu0 0.0
    %456 = vmatpush1.msra.mxu0 0.0
    %457 = vmatprep.subr.mxu0 %v427
    %458 = vmatpush1.msra.mxu0 %v426
    %459 = vmatprep.subr.mxu0 %v424
    %460 = vmatpush1.msra.mxu0 %v423
    %461 = vmatprep.subr.mxu0 0.0
    %462 = vmatpush2.msra.mxu0 0.0
    %463 = vmatprep.subr.mxu0 0.0
    %464 = vmatpush2.msra.mxu0 0.0
    %465 = vmatprep.subr.mxu0 0.0
    %466 = vmatpush2.msra.mxu0 0.0
    %467 = vmatprep.subr.mxu0 0.0
    %468 = vmatpush2.msra.mxu0 0.0
    %469 = vmatprep.subr.mxu0 0.0
    %470 = vmatpush2.msra.mxu0 0.0
    %471 = vmatprep.subr.mxu0 0.0
    %472 = vmatpush2.msra.mxu0 0.0
    %473 = vmatprep.subr.mxu0 0.0
    %474 = vmatpush2.msra.mxu0 0.0
    %475 = vmatprep.subr.mxu0 0.0
    %476 = vmatpush2.msra.mxu0 0.0
    %477 = vmatprep.subr.mxu0 0.0
    %478 = vmatpush2.msra.mxu0 0.0
    %479 = vmatprep.subr.mxu0 0.0
    %480 = vmatpush2.msra.mxu0 0.0
    %481 = vmatprep.subr.mxu0 0.0
    %482 = vmatpush2.msra.mxu0 0.0
    %483 = vmatprep.subr.mxu0 0.0
    %484 = vmatpush2.msra.mxu0 0.0
    %485 = vmatprep.subr.mxu0 0.0
    %486 = vmatpush2.msra.mxu0 0.0
    %487 = vmatprep.subr.mxu0 0.0
    %488 = vmatpush2.msra.mxu0 0.0
    %489 = vmatprep.subr.mxu0 0.0
    %490 = vmatpush2.msra.mxu0 0.0
    %491 = vmatprep.subr.mxu0 0.0
    %492 = vmatpush2.msra.mxu0 0.0
    %493 = vmatprep.mubr.f32.mxu0 0.0
    %494 = vmatmul.mubr.f32.gmra.mxu0 %v280
    %v495 = vpop.f32.mrf.mxu0
    %v496 = vadd.f32 0.0, %v495
    %v497 = vpop.f32.mrf.mxu0
    %v498 = vadd.f32 0.0, %v497
    %499 = vdwg.mxu0
    %500 = vmatprep.subr.mxu0 0.0
    %501 = vmatpush1.msra.mxu0 0.0
    %502 = vmatprep.subr.mxu0 0.0
    %503 = vmatpush1.msra.mxu0 0.0
    %504 = vmatprep.subr.mxu0 0.0
    %505 = vmatpush1.msra.mxu0 0.0
    %506 = vmatprep.subr.mxu0 0.0
    %507 = vmatpush1.msra.mxu0 0.0
    %508 = vmatprep.subr.mxu0 0.0
    %509 = vmatpush1.msra.mxu0 0.0
    %510 = vmatprep.subr.mxu0 0.0
    %511 = vmatpush1.msra.mxu0 0.0
    %512 = vmatprep.subr.mxu0 0.0
    %513 = vmatpush1.msra.mxu0 0.0
    %514 = vmatprep.subr.mxu0 0.0
    %515 = vmatpush1.msra.mxu0 0.0
    %516 = vmatprep.subr.mxu0 0.0
    %517 = vmatpush1.msra.mxu0 0.0
    %518 = vmatprep.subr.mxu0 0.0
    %519 = vmatpush1.msra.mxu0 0.0
    %520 = vmatprep.subr.mxu0 0.0
    %521 = vmatpush1.msra.mxu0 0.0
    %522 = vmatprep.subr.mxu0 0.0
    %523 = vmatpush1.msra.mxu0 0.0
    %524 = vmatprep.subr.mxu0 0.0
    %525 = vmatpush1.msra.mxu0 0.0
    %526 = vmatprep.subr.mxu0 0.0
    %527 = vmatpush1.msra.mxu0 0.0
    %528 = vmatprep.subr.mxu0 0.0
    %529 = vmatpush1.msra.mxu0 %v428
    %530 = vmatprep.subr.mxu0 0.0
    %531 = vmatpush1.msra.mxu0 %v425
    %532 = vmatprep.subr.mxu0 0.0
    %533 = vmatpush2.msra.mxu0 0.0
    %534 = vmatprep.subr.mxu0 0.0
    %535 = vmatpush2.msra.mxu0 0.0
    %536 = vmatprep.subr.mxu0 0.0
    %537 = vmatpush2.msra.mxu0 0.0
    %538 = vmatprep.subr.mxu0 0.0
    %539 = vmatpush2.msra.mxu0 0.0
    %540 = vmatprep.subr.mxu0 0.0
    %541 = vmatpush2.msra.mxu0 0.0
    %542 = vmatprep.subr.mxu0 0.0
    %543 = vmatpush2.msra.mxu0 0.0
    %544 = vmatprep.subr.mxu0 0.0
    %545 = vmatpush2.msra.mxu0 0.0
    %546 = vmatprep.subr.mxu0 0.0
    %547 = vmatpush2.msra.mxu0 0.0
    %548 = vmatprep.subr.mxu0 0.0
    %549 = vmatpush2.msra.mxu0 0.0
    %550 = vmatprep.subr.mxu0 0.0
    %551 = vmatpush2.msra.mxu0 0.0
    %552 = vmatprep.subr.mxu0 0.0
    %553 = vmatpush2.msra.mxu0 0.0
    %554 = vmatprep.subr.mxu0 0.0
    %555 = vmatpush2.msra.mxu0 0.0
    %556 = vmatprep.subr.mxu0 0.0
    %557 = vmatpush2.msra.mxu0 0.0
    %558 = vmatprep.subr.mxu0 0.0
    %559 = vmatpush2.msra.mxu0 0.0
    %560 = vmatprep.subr.mxu0 0.0
    %561 = vmatpush2.msra.mxu0 0.0
    %562 = vmatprep.subr.mxu0 0.0
    %563 = vmatpush2.msra.mxu0 0.0
    %564 = vmatprep.mubr.f32.mxu0 0.0
    %565 = vmatmul.mubr.f32.gmra.mxu0 %v280
    %v566 = vpop.f32.mrf.mxu0
    %v567 = vadd.f32 0.0, %v566
    %v568 = vpop.f32.mrf.mxu0
    %569 = vdwg.mxu0
    %v570 = vmul.f32 %v349, 0.0625
    %v571 = vmul.f32 %v351, 0.0625
    %v572 = vmul.f32 %v420, 0.0625
    %v573 = vmul.f32 %v496, 0.0625
    %v574 = vmul.f32 %v498, 0.0625
    %v575 = vmul.f32 %v567, 0.0625
    %v576 = vmul.f32 %v570, %v570
    %v577 = vmul.f32 %v571, %v571
    %v578 = vmul.f32 %v572, %v572
    %v579 = vsub.f32 %v573, %v576
    %v580 = vsub.f32 %v574, %v577
    %v581 = vsub.f32 %v575, %v578
    %v582 = vadd.f32 %v579, 1e-05
    %v583 = vadd.f32 %v580, 1e-05
    %v584 = vadd.f32 %v581, 1e-05
    %v585 = vrsqrt.pop %v582
    %v586 = vrsqrt.pop %v583
    %v587 = vrsqrt.pop %v584
    %v591 = vcombine.low %v585, %v586
    %v593 = vunpack.c.l.s4 1966171168
    %v594 = vunpack.c.0.s8 %v593
    %v595 = vlaneseq
    %v596 = vshrl.u32 %v595, 7
    %v597 = vsub.s32 %v594, %v596
    %v598 = vrot.slane %v591, %v597
    %v600 = vunpack.c.l.s4 1966171168
    %v601 = vunpack.c.0.s8 %v600
    %v602 = vlaneseq
    %v603 = vshrl.u32 %v602, 7
    %v604 = vsub.s32 %v601, %v603
    %v605 = vrot.slane %v587, %v604
    %v606 = vcombine.low %v598, %v605
    %v608 = vunpack.c.l.s4 1966171168
    %v609 = vunpack.c.0.s8 %v608
    %v610 = vlaneseq
    %v611 = vshrl.u32 %v610, 7
    %v612 = vsub.s32 %v609, %v611
    %v613 = vrot.slane %v606, %v612
    %v615 = vmul.f32 %v258, %v613
    %v617 = vlaneseq
    %v618 = vshrl.u32 %v617, 7
    %v619 = vsub.s32 0, %v618
    %v620 = vrot.slane %v615, %v619
    %v621 = vlaneseq
    %v622 = vshrl.u32 %v621, 7
    %v623 = vsub.s32 1, %v622
    %v624 = vrot.slane %v615, %v623
    %v625 = vlaneseq
    %v626 = vshrl.u32 %v625, 7
    %v627 = vsub.s32 2, %v626
    %v628 = vrot.slane %v615, %v627
    %v632 = vmul.f32 %v570, %v620
    %v633 = vmul.f32 %v571, %v624
    %v634 = vmul.f32 %v572, %v628
    %v638 = vcombine.low %v632, %v633
    %v640 = vunpack.c.l.s4 1966171168
    %v641 = vunpack.c.0.s8 %v640
    %v642 = vlaneseq
    %v643 = vshrl.u32 %v642, 7
    %v644 = vsub.s32 %v641, %v643
    %v645 = vrot.slane %v638, %v644
    %v647 = vunpack.c.l.s4 1966171168
    %v648 = vunpack.c.0.s8 %v647
    %v649 = vlaneseq
    %v650 = vshrl.u32 %v649, 7
    %v651 = vsub.s32 %v648, %v650
    %v652 = vrot.slane %v634, %v651
    %v653 = vcombine.low %v645, %v652
    %v655 = vunpack.c.l.s4 1966171168
    %v656 = vunpack.c.0.s8 %v655
    %v657 = vlaneseq
    %v658 = vshrl.u32 %v657, 7
    %v659 = vsub.s32 %v656, %v658
    %v660 = vrot.slane %v653, %v659
    %v662 = vsub.f32 %v259, %v660
    %v663 = vmul.f32 %v272, %v620
    %v664 = vmul.f32 %v273, %v624
    %v665 = vmul.f32 %v274, %v628
    %v666 = vmul.f32 %v275, %v620
    %v667 = vmul.f32 %v276, %v624
    %v668 = vmul.f32 %v277, %v628
    %v670 = vlaneseq
    %v671 = vshrl.u32 %v670, 7
    %v672 = vsub.s32 0, %v671
    %v673 = vrot.slane %v662, %v672
    %v674 = vlaneseq
    %v675 = vshrl.u32 %v674, 7
    %v676 = vsub.s32 1, %v675
    %v677 = vrot.slane %v662, %v676
    %v678 = vlaneseq
    %v679 = vshrl.u32 %v678, 7
    %v680 = vsub.s32 2, %v679
    %v681 = vrot.slane %v662, %v680
    %v685 = vadd.f32 %v663, %v673
    %v686 = vadd.f32 %v664, %v677
    %v687 = vadd.f32 %v665, %v681
    %v688 = vadd.f32 %v666, %v673
    %v689 = vadd.f32 %v667, %v677
    %v690 = vadd.f32 %v668, %v681
    %v691 = vld [vmem:[%s5] sm:$0xff]
    %v692 = vld [vmem:[%s5 + $0x8] sm:$0xff]
    %v693 = vld [vmem:[%s5 + $0x10] sm:$0xff]
    %v694 = vld [vmem:[%s5 + $0x18] sm:$0xff]
    %v695 = vld [vmem:[%s5 + $0x20] sm:$0xff]
    %v696 = vld [vmem:[%s5 + $0x28] sm:$0xff]
    %v697 = vld [vmem:[%s5 + $0x30] sm:$0xff]
    %v698 = vld [vmem:[%s5 + $0x38] sm:$0xff]
    %v699 = vld [vmem:[%s5 + $0x40] sm:$0xff]
    %v700 = vld [vmem:[%s5 + $0x48] sm:$0xff]
    %v701 = vld [vmem:[%s5 + $0x50] sm:$0xff]
    %v702 = vld [vmem:[%s5 + $0x58] sm:$0xff]
    %v703 = vld [vmem:[%s5 + $0x60] sm:$0xff]
    %v704 = vld [vmem:[%s5 + $0x68] sm:$0xff]
    %v705 = vld [vmem:[%s5 + $0x70] sm:$0xff]
    %v706 = vld [vmem:[%s5 + $0x78] sm:$0xff]
    %v707 = vld [vmem:[%s5 + $0x80] sm:$0xff]
    %v708 = vld [vmem:[%s5 + $0x88] sm:$0xff]
    %v709 = vld [vmem:[%s5 + $0x90] sm:$0xff]
    %v710 = vld [vmem:[%s5 + $0x98] sm:$0xff]
    %v711 = vld [vmem:[%s5 + $0xa0] sm:$0xff]
    %v712 = vld [vmem:[%s5 + $0xa8] sm:$0xff]
    %v713 = vld [vmem:[%s5 + $0xb0] sm:$0xff]
    %v714 = vld [vmem:[%s5 + $0xb8] sm:$0xff]
    %v715 = vld [vmem:[%s5 + $0xc0] sm:$0xff]
    %v716 = vld [vmem:[%s5 + $0xc8] sm:$0xff]
    %v717 = vld [vmem:[%s5 + $0xd0] sm:$0xff]
    %v718 = vld [vmem:[%s5 + $0xd8] sm:$0xff]
    %v719 = vld [vmem:[%s5 + $0xe0] sm:$0xff]
    %v720 = vld [vmem:[%s5 + $0xe8] sm:$0xff]
    %v721 = vld [vmem:[%s5 + $0xf0] sm:$0xff]
    %v722 = vld [vmem:[%s5 + $0xf8] sm:$0xff]
    %v723 = vld [vmem:[%s5 + $0x100] sm:$0xff]
    %v724 = vld [vmem:[%s5 + $0x108] sm:$0xff]
    %v725 = vld [vmem:[%s5 + $0x110] sm:$0xff]
    %v726 = vld [vmem:[%s5 + $0x118] sm:$0xff]
    %v727 = vld [vmem:[%s5 + $0x120] sm:$0xff]
    %v728 = vld [vmem:[%s5 + $0x128] sm:$0xff]
    %v729 = vld [vmem:[%s5 + $0x130] sm:$0xff]
    %v730 = vld [vmem:[%s5 + $0x138] sm:$0xff]
    %v731 = vld [vmem:[%s5 + $0x140] sm:$0xff]
    %v732 = vld [vmem:[%s5 + $0x148] sm:$0xff]
    %v733 = vld [vmem:[%s5 + $0x150] sm:$0xff]
    %v734 = vld [vmem:[%s5 + $0x158] sm:$0xff]
    %v735 = vld [vmem:[%s5 + $0x160] sm:$0xff]
    %v736 = vld [vmem:[%s5 + $0x168] sm:$0xff]
    %v737 = vld [vmem:[%s5 + $0x170] sm:$0xff]
    %v738 = vld [vmem:[%s5 + $0x178] sm:$0xff]
    %v739 = vld [vmem:[%s5 + $0x180] sm:$0xff]
    %v740 = vld [vmem:[%s5 + $0x188] sm:$0xff]
    %v741 = vld [vmem:[%s5 + $0x190] sm:$0xff]
    %v742 = vld [vmem:[%s5 + $0x198] sm:$0xff]
    %v743 = vld [vmem:[%s5 + $0x1a0] sm:$0xff]
    %v744 = vld [vmem:[%s5 + $0x1a8] sm:$0xff]
    %v745 = vld [vmem:[%s5 + $0x1b0] sm:$0xff]
    %v746 = vld [vmem:[%s5 + $0x1b8] sm:$0xff]
    %v747 = vld [vmem:[%s5 + $0x1c0] sm:$0xff]
    %v748 = vld [vmem:[%s5 + $0x1c8] sm:$0xff]
    %v749 = vld [vmem:[%s5 + $0x1d0] sm:$0xff]
    %v750 = vld [vmem:[%s5 + $0x1d8] sm:$0xff]
    %v751 = vld [vmem:[%s5 + $0x1e0] sm:$0xff]
    %v752 = vld [vmem:[%s5 + $0x1e8] sm:$0xff]
    %v753 = vld [vmem:[%s5 + $0x1f0] sm:$0xff]
    %v754 = vld [vmem:[%s5 + $0x1f8] sm:$0xff]
    %v755 = vld [vmem:[%s5 + $0x200] sm:$0xff]
    %v756 = vld [vmem:[%s5 + $0x208] sm:$0xff]
    %v757 = vld [vmem:[%s5 + $0x210] sm:$0xff]
    %v758 = vld [vmem:[%s5 + $0x218] sm:$0xff]
    %v759 = vld [vmem:[%s5 + $0x220] sm:$0xff]
    %v760 = vld [vmem:[%s5 + $0x228] sm:$0xff]
    %v761 = vld [vmem:[%s5 + $0x230] sm:$0xff]
    %v762 = vld [vmem:[%s5 + $0x238] sm:$0xff]
    %v763 = vld [vmem:[%s5 + $0x240] sm:$0xff]
    %v764 = vld [vmem:[%s5 + $0x248] sm:$0xff]
    %v765 = vld [vmem:[%s5 + $0x250] sm:$0xff]
    %v766 = vld [vmem:[%s5 + $0x258] sm:$0xff]
    %v767 = vld [vmem:[%s5 + $0x260] sm:$0xff]
    %v768 = vld [vmem:[%s5 + $0x268] sm:$0xff]
    %v769 = vld [vmem:[%s5 + $0x270] sm:$0xff]
    %v770 = vld [vmem:[%s5 + $0x278] sm:$0xff]
    %v771 = vld [vmem:[%s5 + $0x280] sm:$0xff]
    %v772 = vld [vmem:[%s5 + $0x288] sm:$0xff]
    %v773 = vld [vmem:[%s5 + $0x290] sm:$0xff]
    %v774 = vld [vmem:[%s5 + $0x298] sm:$0xff]
    %v775 = vld [vmem:[%s5 + $0x2a0] sm:$0xff]
    %v776 = vld [vmem:[%s5 + $0x2a8] sm:$0xff]
    %v777 = vld [vmem:[%s5 + $0x2b0] sm:$0xff]
    %v778 = vld [vmem:[%s5 + $0x2b8] sm:$0xff]
    %v779 = vld [vmem:[%s5 + $0x2c0] sm:$0xff]
    %v780 = vld [vmem:[%s5 + $0x2c8] sm:$0xff]
    %v781 = vld [vmem:[%s5 + $0x2d0] sm:$0xff]
    %v782 = vld [vmem:[%s5 + $0x2d8] sm:$0xff]
    %v783 = vld [vmem:[%s5 + $0x2e0] sm:$0xff]
    %v784 = vld [vmem:[%s5 + $0x2e8] sm:$0xff]
    %v785 = vld [vmem:[%s5 + $0x2f0] sm:$0xff]
    %v786 = vld [vmem:[%s5 + $0x2f8] sm:$0xff]
    %v787 = vld [vmem:[%s6] sm:$0x3]
    %v789 = vlaneseq
    %v790 = vshrl.u32 %v789, 7
    %v791 = vsub.s32 0, %v790
    %v792 = vrot.slane %v787, %v791
    %v793 = vlaneseq
    %v794 = vshrl.u32 %v793, 7
    %v795 = vsub.s32 1, %v794
    %v796 = vrot.slane %v787, %v795
    %799 = vmatprep.subr.mxu0 %v722
    %800 = vmatpush1.msra.mxu0 %v721
    %801 = vmatprep.subr.mxu0 %v720
    %802 = vmatpush1.msra.mxu0 %v719
    %803 = vmatprep.subr.mxu0 %v718
    %804 = vmatpush1.msra.mxu0 %v717
    %805 = vmatprep.subr.mxu0 %v716
    %806 = vmatpush1.msra.mxu0 %v715
    %807 = vmatprep.subr.mxu0 %v714
    %808 = vmatpush1.msra.mxu0 %v713
    %809 = vmatprep.subr.mxu0 %v712
    %810 = vmatpush1.msra.mxu0 %v711
    %811 = vmatprep.subr.mxu0 %v710
    %812 = vmatpush1.msra.mxu0 %v709
    %813 = vmatprep.subr.mxu0 %v708
    %814 = vmatpush1.msra.mxu0 %v707
    %815 = vmatprep.subr.mxu0 %v706
    %816 = vmatpush1.msra.mxu0 %v705
    %817 = vmatprep.subr.mxu0 %v704
    %818 = vmatpush1.msra.mxu0 %v703
    %819 = vmatprep.subr.mxu0 %v702
    %820 = vmatpush1.msra.mxu0 %v701
    %821 = vmatprep.subr.mxu0 %v700
    %822 = vmatpush1.msra.mxu0 %v699
    %823 = vmatprep.subr.mxu0 %v698
    %824 = vmatpush1.msra.mxu0 %v697
    %825 = vmatprep.subr.mxu0 %v696
    %826 = vmatpush1.msra.mxu0 %v695
    %827 = vmatprep.subr.mxu0 %v694
    %828 = vmatpush1.msra.mxu0 %v693
    %829 = vmatprep.subr.mxu0 %v692
    %830 = vmatpush1.msra.mxu0 %v691
    %831 = vmatprep.subr.mxu0 %v754
    %832 = vmatpush2.msra.mxu0 %v753
    %833 = vmatprep.subr.mxu0 %v752
    %834 = vmatpush2.msra.mxu0 %v751
    %835 = vmatprep.subr.mxu0 %v750
    %836 = vmatpush2.msra.mxu0 %v749
    %837 = vmatprep.subr.mxu0 %v748
    %838 = vmatpush2.msra.mxu0 %v747
    %839 = vmatprep.subr.mxu0 %v746
    %840 = vmatpush2.msra.mxu0 %v745
    %841 = vmatprep.subr.mxu0 %v744
    %842 = vmatpush2.msra.mxu0 %v743
    %843 = vmatprep.subr.mxu0 %v742
    %844 = vmatpush2.msra.mxu0 %v741
    %845 = vmatprep.subr.mxu0 %v740
    %846 = vmatpush2.msra.mxu0 %v739
    %847 = vmatprep.subr.mxu0 %v738
    %848 = vmatpush2.msra.mxu0 %v737
    %849 = vmatprep.subr.mxu0 %v736
    %850 = vmatpush2.msra.mxu0 %v735
    %851 = vmatprep.subr.mxu0 %v734
    %852 = vmatpush2.msra.mxu0 %v733
    %853 = vmatprep.subr.mxu0 %v732
    %854 = vmatpush2.msra.mxu0 %v731
    %855 = vmatprep.subr.mxu0 %v730
    %856 = vmatpush2.msra.mxu0 %v729
    %857 = vmatprep.subr.mxu0 %v728
    %858 = vmatpush2.msra.mxu0 %v727
    %859 = vmatprep.subr.mxu0 %v726
    %860 = vmatpush2.msra.mxu0 %v725
    %861 = vmatprep.subr.mxu0 %v724
    %862 = vmatpush2.msra.mxu0 %v723
    %863 = vmatprep.mubr.f32.mxu0 %v686
    %864 = vmatmul.mubr.f32.gmra.mxu0 %v685
    %v865 = vpop.f32.mrf.mxu0
    %v866 = vadd.f32 %v792, %v865
    %v867 = vpop.f32.mrf.mxu0
    %v868 = vadd.f32 %v796, %v867
    %869 = vmatprep.mubr.f32.mxu0 %v689
    %870 = vmatmul.mubr.f32.gmra.mxu0 %v688
    %v871 = vpop.f32.mrf.mxu0
    %v872 = vadd.f32 %v792, %v871
    %v873 = vpop.f32.mrf.mxu0
    %v874 = vadd.f32 %v796, %v873
    %875 = vdwg.mxu0
    %876 = vmatprep.subr.mxu0 %v786
    %877 = vmatpush1.msra.mxu0 %v785
    %878 = vmatprep.subr.mxu0 %v784
    %879 = vmatpush1.msra.mxu0 %v783
    %880 = vmatprep.subr.mxu0 %v782
    %881 = vmatpush1.msra.mxu0 %v781
    %882 = vmatprep.subr.mxu0 %v780
    %883 = vmatpush1.msra.mxu0 %v779
    %884 = vmatprep.subr.mxu0 %v778
    %885 = vmatpush1.msra.mxu0 %v777
    %886 = vmatprep.subr.mxu0 %v776
    %887 = vmatpush1.msra.mxu0 %v775
    %888 = vmatprep.subr.mxu0 %v774
    %889 = vmatpush1.msra.mxu0 %v773
    %890 = vmatprep.subr.mxu0 %v772
    %891 = vmatpush1.msra.mxu0 %v771
    %892 = vmatprep.subr.mxu0 %v770
    %893 = vmatpush1.msra.mxu0 %v769
    %894 = vmatprep.subr.mxu0 %v768
    %895 = vmatpush1.msra.mxu0 %v767
    %896 = vmatprep.subr.mxu0 %v766
    %897 = vmatpush1.msra.mxu0 %v765
    %898 = vmatprep.subr.mxu0 %v764
    %899 = vmatpush1.msra.mxu0 %v763
    %900 = vmatprep.subr.mxu0 %v762
    %901 = vmatpush1.msra.mxu0 %v761
    %902 = vmatprep.subr.mxu0 %v760
    %903 = vmatpush1.msra.mxu0 %v759
    %904 = vmatprep.subr.mxu0 %v758
    %905 = vmatpush1.msra.mxu0 %v757
    %906 = vmatprep.subr.mxu0 %v756
    %907 = vmatpush1.msra.mxu0 %v755
    %908 = vmatprep.subr.mxu0 0.0
    %909 = vmatpush2.msra.mxu0 0.0
    %910 = vmatprep.subr.mxu0 0.0
    %911 = vmatpush2.msra.mxu0 0.0
    %912 = vmatprep.subr.mxu0 0.0
    %913 = vmatpush2.msra.mxu0 0.0
    %914 = vmatprep.subr.mxu0 0.0
    %915 = vmatpush2.msra.mxu0 0.0
    %916 = vmatprep.subr.mxu0 0.0
    %917 = vmatpush2.msra.mxu0 0.0
    %918 = vmatprep.subr.mxu0 0.0
    %919 = vmatpush2.msra.mxu0 0.0
    %920 = vmatprep.subr.mxu0 0.0
    %921 = vmatpush2.msra.mxu0 0.0
    %922 = vmatprep.subr.mxu0 0.0
    %923 = vmatpush2.msra.mxu0 0.0
    %924 = vmatprep.subr.mxu0 0.0
    %925 = vmatpush2.msra.mxu0 0.0
    %926 = vmatprep.subr.mxu0 0.0
    %927 = vmatpush2.msra.mxu0 0.0
    %928 = vmatprep.subr.mxu0 0.0
    %929 = vmatpush2.msra.mxu0 0.0
    %930 = vmatprep.subr.mxu0 0.0
    %931 = vmatpush2.msra.mxu0 0.0
    %932 = vmatprep.subr.mxu0 0.0
    %933 = vmatpush2.msra.mxu0 0.0
    %934 = vmatprep.subr.mxu0 0.0
    %935 = vmatpush2.msra.mxu0 0.0
    %936 = vmatprep.subr.mxu0 0.0
    %937 = vmatpush2.msra.mxu0 0.0
    %938 = vmatprep.subr.mxu0 0.0
    %939 = vmatpush2.msra.mxu0 0.0
    %940 = vmatprep.mubr.f32.mxu0 0.0
    %941 = vmatmul.mubr.f32.gmra.mxu0 %v687
    %v942 = vpop.f32.mrf.mxu0
    %v943 = vadd.f32 %v866, %v942
    %v944 = vpop.f32.mrf.mxu0
    %v945 = vadd.f32 %v868, %v944
    %946 = vmatprep.mubr.f32.mxu0 0.0
    %947 = vmatmul.mubr.f32.gmra.mxu0 %v690
    %v948 = vpop.f32.mrf.mxu0
    %v949 = vadd.f32 %v872, %v948
    %v950 = vpop.f32.mrf.mxu0
    %v951 = vadd.f32 %v874, %v950
    %952 = vdwg.mxu0
    %v953 = vld [vmem:[%s7] sm:$0x3]
    %v954 = vld [vmem:[%s8] sm:$0x3]
    %vm955 = vcmp.gt.f32.partialorder %v943, 0.0
    %vm956 = vcmp.gt.f32.partialorder %v945, 0.0
    %vm957 = vcmp.gt.f32.partialorder %v949, 0.0
    %vm958 = vcmp.gt.f32.partialorder %v951, 0.0
    %v959 = vmul.f32 %v943, 0.01
    %v960 = vmul.f32 %v945, 0.01
    %v961 = vmul.f32 %v949, 0.01
    %v962 = vmul.f32 %v951, 0.01
    %v963 = vsel %vm955, %v943, %v959
    %v964 = vsel %vm956, %v945, %v960
    %v965 = vsel %vm957, %v949, %v961
    %v966 = vsel %vm958, %v951, %v962
    %967 = vmatprep.subr.mxu0 0.0
    %968 = vmatpush1.msra.mxu0 0.0
    %969 = vmatprep.subr.mxu0 0.0
    %970 = vmatpush1.msra.mxu0 0.0
    %971 = vmatprep.subr.mxu0 0.0
    %972 = vmatpush1.msra.mxu0 0.0
    %973 = vmatprep.subr.mxu0 0.0
    %974 = vmatpush1.msra.mxu0 0.0
    %975 = vmatprep.subr.mxu0 0.0
    %976 = vmatpush1.msra.mxu0 0.0
    %977 = vmatprep.subr.mxu0 0.0
    %978 = vmatpush1.msra.mxu0 0.0
    %979 = vmatprep.subr.mxu0 0.0
    %980 = vmatpush1.msra.mxu0 0.0
    %981 = vmatprep.subr.mxu0 0.0
    %982 = vmatpush1.msra.mxu0 0.0
    %983 = vmatprep.subr.mxu0 0.0
    %984 = vmatpush1.msra.mxu0 0.0
    %985 = vmatprep.subr.mxu0 0.0
    %986 = vmatpush1.msra.mxu0 0.0
    %987 = vmatprep.subr.mxu0 0.0
    %988 = vmatpush1.msra.mxu0 0.0
    %989 = vmatprep.subr.mxu0 0.0
    %990 = vmatpush1.msra.mxu0 0.0
    %991 = vmatprep.subr.mxu0 0.0
    %992 = vmatpush1.msra.mxu0 0.0
    %993 = vmatprep.subr.mxu0 0.0
    %994 = vmatpush1.msra.mxu0 0.0
    %995 = vmatprep.subr.mxu0 %v966
    %996 = vmatpush1.msra.mxu0 %v965
    %997 = vmatprep.subr.mxu0 %v964
    %998 = vmatpush1.msra.mxu0 %v963
    %999 = vmatprep.subr.mxu0 0.0
    %1000 = vmatpush2.msra.mxu0 0.0
    %1001 = vmatprep.subr.mxu0 0.0
    %1002 = vmatpush2.msra.mxu0 0.0
    %1003 = vmatprep.subr.mxu0 0.0
    %1004 = vmatpush2.msra.mxu0 0.0
    %1005 = vmatprep.subr.mxu0 0.0
    %1006 = vmatpush2.msra.mxu0 0.0
    %1007 = vmatprep.subr.mxu0 0.0
    %1008 = vmatpush2.msra.mxu0 0.0
    %1009 = vmatprep.subr.mxu0 0.0
    %1010 = vmatpush2.msra.mxu0 0.0
    %1011 = vmatprep.subr.mxu0 0.0
    %1012 = vmatpush2.msra.mxu0 0.0
    %1013 = vmatprep.subr.mxu0 0.0
    %1014 = vmatpush2.msra.mxu0 0.0
    %1015 = vmatprep.subr.mxu0 0.0
    %1016 = vmatpush2.msra.mxu0 0.0
    %1017 = vmatprep.subr.mxu0 0.0
    %1018 = vmatpush2.msra.mxu0 0.0
    %1019 = vmatprep.subr.mxu0 0.0
    %1020 = vmatpush2.msra.mxu0 0.0
    %1021 = vmatprep.subr.mxu0 0.0
    %1022 = vmatpush2.msra.mxu0 0.0
    %1023 = vmatprep.subr.mxu0 0.0
    %1024 = vmatpush2.msra.mxu0 0.0
    %1025 = vmatprep.subr.mxu0 0.0
    %1026 = vmatpush2.msra.mxu0 0.0
    %1027 = vmatprep.subr.mxu0 0.0
    %1028 = vmatpush2.msra.mxu0 0.0
    %1029 = vmatprep.subr.mxu0 0.0
    %1030 = vmatpush2.msra.mxu0 0.0
    %1031 = vmatprep.mubr.f32.mxu0 0.0
    %1032 = vmatmul.mubr.f32.gmra.mxu0 %v280
    %v1033 = vpop.f32.mrf.mxu0
    %v1034 = vadd.f32 0.0, %v1033
    %v1035 = vpop.f32.mrf.mxu0
    %v1036 = vadd.f32 0.0, %v1035
    %1037 = vdwg.mxu0
    %v1038 = vmul.f32 %v963, %v963
    %v1039 = vmul.f32 %v964, %v964
    %v1040 = vmul.f32 %v965, %v965
    %v1041 = vmul.f32 %v966, %v966
    %1042 = vmatprep.subr.mxu0 0.0
    %1043 = vmatpush1.msra.mxu0 0.0
    %1044 = vmatprep.subr.mxu0 0.0
    %1045 = vmatpush1.msra.mxu0 0.0
    %1046 = vmatprep.subr.mxu0 0.0
    %1047 = vmatpush1.msra.mxu0 0.0
    %1048 = vmatprep.subr.mxu0 0.0
    %1049 = vmatpush1.msra.mxu0 0.0
    %1050 = vmatprep.subr.mxu0 0.0
    %1051 = vmatpush1.msra.mxu0 0.0
    %1052 = vmatprep.subr.mxu0 0.0
    %1053 = vmatpush1.msra.mxu0 0.0
    %1054 = vmatprep.subr.mxu0 0.0
    %1055 = vmatpush1.msra.mxu0 0.0
    %1056 = vmatprep.subr.mxu0 0.0
    %1057 = vmatpush1.msra.mxu0 0.0
    %1058 = vmatprep.subr.mxu0 0.0
    %1059 = vmatpush1.msra.mxu0 0.0
    %1060 = vmatprep.subr.mxu0 0.0
    %1061 = vmatpush1.msra.mxu0 0.0
    %1062 = vmatprep.subr.mxu0 0.0
    %1063 = vmatpush1.msra.mxu0 0.0
    %1064 = vmatprep.subr.mxu0 0.0
    %1065 = vmatpush1.msra.mxu0 0.0
    %1066 = vmatprep.subr.mxu0 0.0
    %1067 = vmatpush1.msra.mxu0 0.0
    %1068 = vmatprep.subr.mxu0 0.0
    %1069 = vmatpush1.msra.mxu0 0.0
    %1070 = vmatprep.subr.mxu0 %v1041
    %1071 = vmatpush1.msra.mxu0 %v1040
    %1072 = vmatprep.subr.mxu0 %v1039
    %1073 = vmatpush1.msra.mxu0 %v1038
    %1074 = vmatprep.subr.mxu0 0.0
    %1075 = vmatpush2.msra.mxu0 0.0
    %1076 = vmatprep.subr.mxu0 0.0
    %1077 = vmatpush2.msra.mxu0 0.0
    %1078 = vmatprep.subr.mxu0 0.0
    %1079 = vmatpush2.msra.mxu0 0.0
    %1080 = vmatprep.subr.mxu0 0.0
    %1081 = vmatpush2.msra.mxu0 0.0
    %1082 = vmatprep.subr.mxu0 0.0
    %1083 = vmatpush2.msra.mxu0 0.0
    %1084 = vmatprep.subr.mxu0 0.0
    %1085 = vmatpush2.msra.mxu0 0.0
    %1086 = vmatprep.subr.mxu0 0.0
    %1087 = vmatpush2.msra.mxu0 0.0
    %1088 = vmatprep.subr.mxu0 0.0
    %1089 = vmatpush2.msra.mxu0 0.0
    %1090 = vmatprep.subr.mxu0 0.0
    %1091 = vmatpush2.msra.mxu0 0.0
    %1092 = vmatprep.subr.mxu0 0.0
    %1093 = vmatpush2.msra.mxu0 0.0
    %1094 = vmatprep.subr.mxu0 0.0
    %1095 = vmatpush2.msra.mxu0 0.0
    %1096 = vmatprep.subr.mxu0 0.0
    %1097 = vmatpush2.msra.mxu0 0.0
    %1098 = vmatprep.subr.mxu0 0.0
    %1099 = vmatpush2.msra.mxu0 0.0
    %1100 = vmatprep.subr.mxu0 0.0
    %1101 = vmatpush2.msra.mxu0 0.0
    %1102 = vmatprep.subr.mxu0 0.0
    %1103 = vmatpush2.msra.mxu0 0.0
    %1104 = vmatprep.subr.mxu0 0.0
    %1105 = vmatpush2.msra.mxu0 0.0
    %1106 = vmatprep.mubr.f32.mxu0 0.0
    %1107 = vmatmul.mubr.f32.gmra.mxu0 %v280
    %v1108 = vpop.f32.mrf.mxu0
    %v1109 = vadd.f32 0.0, %v1108
    %v1110 = vpop.f32.mrf.mxu0
    %v1111 = vadd.f32 0.0, %v1110
    %1112 = vdwg.mxu0
    %v1113 = vmul.f32 %v1034, 0.0625
    %v1114 = vmul.f32 %v1036, 0.0625
    %v1115 = vmul.f32 %v1109, 0.0625
    %v1116 = vmul.f32 %v1111, 0.0625
    %v1117 = vmul.f32 %v1113, %v1113
    %v1118 = vmul.f32 %v1114, %v1114
    %v1119 = vsub.f32 %v1115, %v1117
    %v1120 = vsub.f32 %v1116, %v1118
    %v1121 = vadd.f32 %v1119, 1e-05
    %v1122 = vadd.f32 %v1120, 1e-05
    %v1123 = vrsqrt.pop %v1121
    %v1124 = vrsqrt.pop %v1122
    %v1127 = vcombine.low %v1123, %v1124
    %v1129 = vunpack.c.l.s4 1966171168
    %v1130 = vunpack.c.0.s8 %v1129
    %v1131 = vlaneseq
    %v1132 = vshrl.u32 %v1131, 7
    %v1133 = vsub.s32 %v1130, %v1132
    %v1134 = vrot.slane %v1127, %v1133
    %v1136 = vunpack.c.l.s4 1966171168
    %v1137 = vunpack.c.0.s8 %v1136
    %v1138 = vlaneseq
    %v1139 = vshrl.u32 %v1138, 7
    %v1140 = vsub.s32 %v1137, %v1139
    %v1141 = vrot.slane %v1134, %v1140
    %v1143 = vmul.f32 %v953, %v1141
    %v1145 = vlaneseq
    %v1146 = vshrl.u32 %v1145, 7
    %v1147 = vsub.s32 0, %v1146
    %v1148 = vrot.slane %v1143, %v1147
    %v1149 = vlaneseq
    %v1150 = vshrl.u32 %v1149, 7
    %v1151 = vsub.s32 1, %v1150
    %v1152 = vrot.slane %v1143, %v1151
    %v1155 = vmul.f32 %v1113, %v1148
    %v1156 = vmul.f32 %v1114, %v1152
    %v1159 = vcombine.low %v1155, %v1156
    %v1161 = vunpack.c.l.s4 1966171168
    %v1162 = vunpack.c.0.s8 %v1161
    %v1163 = vlaneseq
    %v1164 = vshrl.u32 %v1163, 7
    %v1165 = vsub.s32 %v1162, %v1164
    %v1166 = vrot.slane %v1159, %v1165
    %v1168 = vunpack.c.l.s4 1966171168
    %v1169 = vunpack.c.0.s8 %v1168
    %v1170 = vlaneseq
    %v1171 = vshrl.u32 %v1170, 7
    %v1172 = vsub.s32 %v1169, %v1171
    %v1173 = vrot.slane %v1166, %v1172
    %v1175 = vsub.f32 %v954, %v1173
    %v1176 = vmul.f32 %v963, %v1148
    %v1177 = vmul.f32 %v964, %v1152
    %v1178 = vmul.f32 %v965, %v1148
    %v1179 = vmul.f32 %v966, %v1152
    %v1181 = vlaneseq
    %v1182 = vshrl.u32 %v1181, 7
    %v1183 = vsub.s32 0, %v1182
    %v1184 = vrot.slane %v1175, %v1183
    %v1185 = vlaneseq
    %v1186 = vshrl.u32 %v1185, 7
    %v1187 = vsub.s32 1, %v1186
    %v1188 = vrot.slane %v1175, %v1187
    %v1191 = vadd.f32 %v1176, %v1184
    %v1192 = vadd.f32 %v1177, %v1188
    %v1193 = vadd.f32 %v1178, %v1184
    %v1194 = vadd.f32 %v1179, %v1188
    %v1195 = vld [vmem:[%s9] sm:$0xff]
    %v1196 = vld [vmem:[%s9 + $0x8] sm:$0xff]
    %v1197 = vld [vmem:[%s9 + $0x10] sm:$0xff]
    %v1198 = vld [vmem:[%s9 + $0x18] sm:$0xff]
    %v1199 = vld [vmem:[%s9 + $0x20] sm:$0xff]
    %v1200 = vld [vmem:[%s9 + $0x28] sm:$0xff]
    %v1201 = vld [vmem:[%s9 + $0x30] sm:$0xff]
    %v1202 = vld [vmem:[%s9 + $0x38] sm:$0xff]
    %v1203 = vld [vmem:[%s9 + $0x40] sm:$0xff]
    %v1204 = vld [vmem:[%s9 + $0x48] sm:$0xff]
    %v1205 = vld [vmem:[%s9 + $0x50] sm:$0xff]
    %v1206 = vld [vmem:[%s9 + $0x58] sm:$0xff]
    %v1207 = vld [vmem:[%s9 + $0x60] sm:$0xff]
    %v1208 = vld [vmem:[%s9 + $0x68] sm:$0xff]
    %v1209 = vld [vmem:[%s9 + $0x70] sm:$0xff]
    %v1210 = vld [vmem:[%s9 + $0x78] sm:$0xff]
    %v1211 = vld [vmem:[%s9 + $0x80] sm:$0xff]
    %v1212 = vld [vmem:[%s9 + $0x88] sm:$0xff]
    %v1213 = vld [vmem:[%s9 + $0x90] sm:$0xff]
    %v1214 = vld [vmem:[%s9 + $0x98] sm:$0xff]
    %v1215 = vld [vmem:[%s9 + $0xa0] sm:$0xff]
    %v1216 = vld [vmem:[%s9 + $0xa8] sm:$0xff]
    %v1217 = vld [vmem:[%s9 + $0xb0] sm:$0xff]
    %v1218 = vld [vmem:[%s9 + $0xb8] sm:$0xff]
    %v1219 = vld [vmem:[%s9 + $0xc0] sm:$0xff]
    %v1220 = vld [vmem:[%s9 + $0xc8] sm:$0xff]
    %v1221 = vld [vmem:[%s9 + $0xd0] sm:$0xff]
    %v1222 = vld [vmem:[%s9 + $0xd8] sm:$0xff]
    %v1223 = vld [vmem:[%s9 + $0xe0] sm:$0xff]
    %v1224 = vld [vmem:[%s9 + $0xe8] sm:$0xff]
    %v1225 = vld [vmem:[%s9 + $0xf0] sm:$0xff]
    %v1226 = vld [vmem:[%s9 + $0xf8] sm:$0xff]
    %v1227 = vld [vmem:[%s9 + $0x100] sm:$0xff]
    %v1228 = vld [vmem:[%s9 + $0x108] sm:$0xff]
    %v1229 = vld [vmem:[%s9 + $0x110] sm:$0xff]
    %v1230 = vld [vmem:[%s9 + $0x118] sm:$0xff]
    %v1231 = vld [vmem:[%s9 + $0x120] sm:$0xff]
    %v1232 = vld [vmem:[%s9 + $0x128] sm:$0xff]
    %v1233 = vld [vmem:[%s9 + $0x130] sm:$0xff]
    %v1234 = vld [vmem:[%s9 + $0x138] sm:$0xff]
    %v1235 = vld [vmem:[%s9 + $0x140] sm:$0xff]
    %v1236 = vld [vmem:[%s9 + $0x148] sm:$0xff]
    %v1237 = vld [vmem:[%s9 + $0x150] sm:$0xff]
    %v1238 = vld [vmem:[%s9 + $0x158] sm:$0xff]
    %v1239 = vld [vmem:[%s9 + $0x160] sm:$0xff]
    %v1240 = vld [vmem:[%s9 + $0x168] sm:$0xff]
    %v1241 = vld [vmem:[%s9 + $0x170] sm:$0xff]
    %v1242 = vld [vmem:[%s9 + $0x178] sm:$0xff]
    %v1243 = vld [vmem:[%s9 + $0x180] sm:$0xff]
    %v1244 = vld [vmem:[%s9 + $0x188] sm:$0xff]
    %v1245 = vld [vmem:[%s9 + $0x190] sm:$0xff]
    %v1246 = vld [vmem:[%s9 + $0x198] sm:$0xff]
    %v1247 = vld [vmem:[%s9 + $0x1a0] sm:$0xff]
    %v1248 = vld [vmem:[%s9 + $0x1a8] sm:$0xff]
    %v1249 = vld [vmem:[%s9 + $0x1b0] sm:$0xff]
    %v1250 = vld [vmem:[%s9 + $0x1b8] sm:$0xff]
    %v1251 = vld [vmem:[%s9 + $0x1c0] sm:$0xff]
    %v1252 = vld [vmem:[%s9 + $0x1c8] sm:$0xff]
    %v1253 = vld [vmem:[%s9 + $0x1d0] sm:$0xff]
    %v1254 = vld [vmem:[%s9 + $0x1d8] sm:$0xff]
    %v1255 = vld [vmem:[%s9 + $0x1e0] sm:$0xff]
    %v1256 = vld [vmem:[%s9 + $0x1e8] sm:$0xff]
    %v1257 = vld [vmem:[%s9 + $0x1f0] sm:$0xff]
    %v1258 = vld [vmem:[%s9 + $0x1f8] sm:$0xff]
    %v1259 = vld [vmem:[%s10] sm:$0x3]
    %v1261 = vlaneseq
    %v1262 = vshrl.u32 %v1261, 7
    %v1263 = vsub.s32 0, %v1262
    %v1264 = vrot.slane %v1259, %v1263
    %v1265 = vlaneseq
    %v1266 = vshrl.u32 %v1265, 7
    %v1267 = vsub.s32 1, %v1266
    %v1268 = vrot.slane %v1259, %v1267
    %1271 = vmatprep.subr.mxu0 %v1226
    %1272 = vmatpush1.msra.mxu0 %v1225
    %1273 = vmatprep.subr.mxu0 %v1224
    %1274 = vmatpush1.msra.mxu0 %v1223
    %1275 = vmatprep.subr.mxu0 %v1222
    %1276 = vmatpush1.msra.mxu0 %v1221
    %1277 = vmatprep.subr.mxu0 %v1220
    %1278 = vmatpush1.msra.mxu0 %v1219
    %1279 = vmatprep.subr.mxu0 %v1218
    %1280 = vmatpush1.msra.mxu0 %v1217
    %1281 = vmatprep.subr.mxu0 %v1216
    %1282 = vmatpush1.msra.mxu0 %v1215
    %1283 = vmatprep.subr.mxu0 %v1214
    %1284 = vmatpush1.msra.mxu0 %v1213
    %1285 = vmatprep.subr.mxu0 %v1212
    %1286 = vmatpush1.msra.mxu0 %v1211
    %1287 = vmatprep.subr.mxu0 %v1210
    %1288 = vmatpush1.msra.mxu0 %v1209
    %1289 = vmatprep.subr.mxu0 %v1208
    %1290 = vmatpush1.msra.mxu0 %v1207
    %1291 = vmatprep.subr.mxu0 %v1206
    %1292 = vmatpush1.msra.mxu0 %v1205
    %1293 = vmatprep.subr.mxu0 %v1204
    %1294 = vmatpush1.msra.mxu0 %v1203
    %1295 = vmatprep.subr.mxu0 %v1202
    %1296 = vmatpush1.msra.mxu0 %v1201
    %1297 = vmatprep.subr.mxu0 %v1200
    %1298 = vmatpush1.msra.mxu0 %v1199
    %1299 = vmatprep.subr.mxu0 %v1198
    %1300 = vmatpush1.msra.mxu0 %v1197
    %1301 = vmatprep.subr.mxu0 %v1196
    %1302 = vmatpush1.msra.mxu0 %v1195
    %1303 = vmatprep.subr.mxu0 %v1258
    %1304 = vmatpush2.msra.mxu0 %v1257
    %1305 = vmatprep.subr.mxu0 %v1256
    %1306 = vmatpush2.msra.mxu0 %v1255
    %1307 = vmatprep.subr.mxu0 %v1254
    %1308 = vmatpush2.msra.mxu0 %v1253
    %1309 = vmatprep.subr.mxu0 %v1252
    %1310 = vmatpush2.msra.mxu0 %v1251
    %1311 = vmatprep.subr.mxu0 %v1250
    %1312 = vmatpush2.msra.mxu0 %v1249
    %1313 = vmatprep.subr.mxu0 %v1248
    %1314 = vmatpush2.msra.mxu0 %v1247
    %1315 = vmatprep.subr.mxu0 %v1246
    %1316 = vmatpush2.msra.mxu0 %v1245
    %1317 = vmatprep.subr.mxu0 %v1244
    %1318 = vmatpush2.msra.mxu0 %v1243
    %1319 = vmatprep.subr.mxu0 %v1242
    %1320 = vmatpush2.msra.mxu0 %v1241
    %1321 = vmatprep.subr.mxu0 %v1240
    %1322 = vmatpush2.msra.mxu0 %v1239
    %1323 = vmatprep.subr.mxu0 %v1238
    %1324 = vmatpush2.msra.mxu0 %v1237
    %1325 = vmatprep.subr.mxu0 %v1236
    %1326 = vmatpush2.msra.mxu0 %v1235
    %1327 = vmatprep.subr.mxu0 %v1234
    %1328 = vmatpush2.msra.mxu0 %v1233
    %1329 = vmatprep.subr.mxu0 %v1232
    %1330 = vmatpush2.msra.mxu0 %v1231
    %1331 = vmatprep.subr.mxu0 %v1230
    %1332 = vmatpush2.msra.mxu0 %v1229
    %1333 = vmatprep.subr.mxu0 %v1228
    %1334 = vmatpush2.msra.mxu0 %v1227
    %1335 = vmatprep.mubr.f32.mxu0 %v1192
    %1336 = vmatmul.mubr.f32.gmra.mxu0 %v1191
    %v1337 = vpop.f32.mrf.mxu0
    %v1338 = vadd.f32 %v1264, %v1337
    %v1339 = vpop.f32.mrf.mxu0
    %v1340 = vadd.f32 %v1268, %v1339
    %1341 = vmatprep.mubr.f32.mxu0 %v1194
    %1342 = vmatmul.mubr.f32.gmra.mxu0 %v1193
    %v1343 = vpop.f32.mrf.mxu0
    %v1344 = vadd.f32 %v1264, %v1343
    %v1345 = vpop.f32.mrf.mxu0
    %v1346 = vadd.f32 %v1268, %v1345
    %1347 = vdwg.mxu0
    %v1348 = vld [vmem:[%s11] sm:$0x3]
    %v1349 = vld [vmem:[%s12] sm:$0x3]
    %vm1350 = vcmp.gt.f32.partialorder %v1338, 0.0
    %vm1351 = vcmp.gt.f32.partialorder %v1340, 0.0
    %vm1352 = vcmp.gt.f32.partialorder %v1344, 0.0
    %vm1353 = vcmp.gt.f32.partialorder %v1346, 0.0
    %v1354 = vmul.f32 %v1338, 0.01
    %v1355 = vmul.f32 %v1340, 0.01
    %v1356 = vmul.f32 %v1344, 0.01
    %v1357 = vmul.f32 %v1346, 0.01
    %v1358 = vsel %vm1350, %v1338, %v1354
    %v1359 = vsel %vm1351, %v1340, %v1355
    %v1360 = vsel %vm1352, %v1344, %v1356
    %v1361 = vsel %vm1353, %v1346, %v1357
    %1362 = vmatprep.subr.mxu0 0.0
    %1363 = vmatpush1.msra.mxu0 0.0
    %1364 = vmatprep.subr.mxu0 0.0
    %1365 = vmatpush1.msra.mxu0 0.0
    %1366 = vmatprep.subr.mxu0 0.0
    %1367 = vmatpush1.msra.mxu0 0.0
    %1368 = vmatprep.subr.mxu0 0.0
    %1369 = vmatpush1.msra.mxu0 0.0
    %1370 = vmatprep.subr.mxu0 0.0
    %1371 = vmatpush1.msra.mxu0 0.0
    %1372 = vmatprep.subr.mxu0 0.0
    %1373 = vmatpush1.msra.mxu0 0.0
    %1374 = vmatprep.subr.mxu0 0.0
    %1375 = vmatpush1.msra.mxu0 0.0
    %1376 = vmatprep.subr.mxu0 0.0
    %1377 = vmatpush1.msra.mxu0 0.0
    %1378 = vmatprep.subr.mxu0 0.0
    %1379 = vmatpush1.msra.mxu0 0.0
    %1380 = vmatprep.subr.mxu0 0.0
    %1381 = vmatpush1.msra.mxu0 0.0
    %1382 = vmatprep.subr.mxu0 0.0
    %1383 = vmatpush1.msra.mxu0 0.0
    %1384 = vmatprep.subr.mxu0 0.0
    %1385 = vmatpush1.msra.mxu0 0.0
    %1386 = vmatprep.subr.mxu0 0.0
    %1387 = vmatpush1.msra.mxu0 0.0
    %1388 = vmatprep.subr.mxu0 0.0
    %1389 = vmatpush1.msra.mxu0 0.0
    %1390 = vmatprep.subr.mxu0 %v1361
    %1391 = vmatpush1.msra.mxu0 %v1360
    %1392 = vmatprep.subr.mxu0 %v1359
    %1393 = vmatpush1.msra.mxu0 %v1358
    %1394 = vmatprep.subr.mxu0 0.0
    %1395 = vmatpush2.msra.mxu0 0.0
    %1396 = vmatprep.subr.mxu0 0.0
    %1397 = vmatpush2.msra.mxu0 0.0
    %1398 = vmatprep.subr.mxu0 0.0
    %1399 = vmatpush2.msra.mxu0 0.0
    %1400 = vmatprep.subr.mxu0 0.0
    %1401 = vmatpush2.msra.mxu0 0.0
    %1402 = vmatprep.subr.mxu0 0.0
    %1403 = vmatpush2.msra.mxu0 0.0
    %1404 = vmatprep.subr.mxu0 0.0
    %1405 = vmatpush2.msra.mxu0 0.0
    %1406 = vmatprep.subr.mxu0 0.0
    %1407 = vmatpush2.msra.mxu0 0.0
    %1408 = vmatprep.subr.mxu0 0.0
    %1409 = vmatpush2.msra.mxu0 0.0
    %1410 = vmatprep.subr.mxu0 0.0
    %1411 = vmatpush2.msra.mxu0 0.0
    %1412 = vmatprep.subr.mxu0 0.0
    %1413 = vmatpush2.msra.mxu0 0.0
    %1414 = vmatprep.subr.mxu0 0.0
    %1415 = vmatpush2.msra.mxu0 0.0
    %1416 = vmatprep.subr.mxu0 0.0
    %1417 = vmatpush2.msra.mxu0 0.0
    %1418 = vmatprep.subr.mxu0 0.0
    %1419 = vmatpush2.msra.mxu0 0.0
    %1420 = vmatprep.subr.mxu0 0.0
    %1421 = vmatpush2.msra.mxu0 0.0
    %1422 = vmatprep.subr.mxu0 0.0
    %1423 = vmatpush2.msra.mxu0 0.0
    %1424 = vmatprep.subr.mxu0 0.0
    %1425 = vmatpush2.msra.mxu0 0.0
    %1426 = vmatprep.mubr.f32.mxu0 0.0
    %1427 = vmatmul.mubr.f32.gmra.mxu0 %v280
    %v1428 = vpop.f32.mrf.mxu0
    %v1429 = vadd.f32 0.0, %v1428
    %v1430 = vpop.f32.mrf.mxu0
    %v1431 = vadd.f32 0.0, %v1430
    %1432 = vdwg.mxu0
    %v1433 = vmul.f32 %v1358, %v1358
    %v1434 = vmul.f32 %v1359, %v1359
    %v1435 = vmul.f32 %v1360, %v1360
    %v1436 = vmul.f32 %v1361, %v1361
    %1437 = vmatprep.subr.mxu0 0.0
    %1438 = vmatpush1.msra.mxu0 0.0
    %1439 = vmatprep.subr.mxu0 0.0
    %1440 = vmatpush1.msra.mxu0 0.0
    %1441 = vmatprep.subr.mxu0 0.0
    %1442 = vmatpush1.msra.mxu0 0.0
    %1443 = vmatprep.subr.mxu0 0.0
    %1444 = vmatpush1.msra.mxu0 0.0
    %1445 = vmatprep.subr.mxu0 0.0
    %1446 = vmatpush1.msra.mxu0 0.0
    %1447 = vmatprep.subr.mxu0 0.0
    %1448 = vmatpush1.msra.mxu0 0.0
    %1449 = vmatprep.subr.mxu0 0.0
    %1450 = vmatpush1.msra.mxu0 0.0
    %1451 = vmatprep.subr.mxu0 0.0
    %1452 = vmatpush1.msra.mxu0 0.0
    %1453 = vmatprep.subr.mxu0 0.0
    %1454 = vmatpush1.msra.mxu0 0.0
    %1455 = vmatprep.subr.mxu0 0.0
    %1456 = vmatpush1.msra.mxu0 0.0
    %1457 = vmatprep.subr.mxu0 0.0
    %1458 = vmatpush1.msra.mxu0 0.0
    %1459 = vmatprep.subr.mxu0 0.0
    %1460 = vmatpush1.msra.mxu0 0.0
    %1461 = vmatprep.subr.mxu0 0.0
    %1462 = vmatpush1.msra.mxu0 0.0
    %1463 = vmatprep.subr.mxu0 0.0
    %1464 = vmatpush1.msra.mxu0 0.0
    %1465 = vmatprep.subr.mxu0 %v1436
    %1466 = vmatpush1.msra.mxu0 %v1435
    %1467 = vmatprep.subr.mxu0 %v1434
    %1468 = vmatpush1.msra.mxu0 %v1433
    %1469 = vmatprep.subr.mxu0 0.0
    %1470 = vmatpush2.msra.mxu0 0.0
    %1471 = vmatprep.subr.mxu0 0.0
    %1472 = vmatpush2.msra.mxu0 0.0
    %1473 = vmatprep.subr.mxu0 0.0
    %1474 = vmatpush2.msra.mxu0 0.0
    %1475 = vmatprep.subr.mxu0 0.0
    %1476 = vmatpush2.msra.mxu0 0.0
    %1477 = vmatprep.subr.mxu0 0.0
    %1478 = vmatpush2.msra.mxu0 0.0
    %1479 = vmatprep.subr.mxu0 0.0
    %1480 = vmatpush2.msra.mxu0 0.0
    %1481 = vmatprep.subr.mxu0 0.0
    %1482 = vmatpush2.msra.mxu0 0.0
    %1483 = vmatprep.subr.mxu0 0.0
    %1484 = vmatpush2.msra.mxu0 0.0
    %1485 = vmatprep.subr.mxu0 0.0
    %1486 = vmatpush2.msra.mxu0 0.0
    %1487 = vmatprep.subr.mxu0 0.0
    %1488 = vmatpush2.msra.mxu0 0.0
    %1489 = vmatprep.subr.mxu0 0.0
    %1490 = vmatpush2.msra.mxu0 0.0
    %1491 = vmatprep.subr.mxu0 0.0
    %1492 = vmatpush2.msra.mxu0 0.0
    %1493 = vmatprep.subr.mxu0 0.0
    %1494 = vmatpush2.msra.mxu0 0.0
    %1495 = vmatprep.subr.mxu0 0.0
    %1496 = vmatpush2.msra.mxu0 0.0
    %1497 = vmatprep.subr.mxu0 0.0
    %1498 = vmatpush2.msra.mxu0 0.0
    %1499 = vmatprep.subr.mxu0 0.0
    %1500 = vmatpush2.msra.mxu0 0.0
    %1501 = vmatprep.mubr.f32.mxu0 0.0
    %1502 = vmatmul.mubr.f32.gmra.mxu0 %v280
    %v1503 = vpop.f32.mrf.mxu0
    %v1504 = vadd.f32 0.0, %v1503
    %v1505 = vpop.f32.mrf.mxu0
    %v1506 = vadd.f32 0.0, %v1505
    %1507 = vdwg.mxu0
    %v1508 = vmul.f32 %v1429, 0.0625
    %v1509 = vmul.f32 %v1431, 0.0625
    %v1510 = vmul.f32 %v1504, 0.0625
    %v1511 = vmul.f32 %v1506, 0.0625
    %v1512 = vmul.f32 %v1508, %v1508
    %v1513 = vmul.f32 %v1509, %v1509
    %v1514 = vsub.f32 %v1510, %v1512
    %v1515 = vsub.f32 %v1511, %v1513
    %v1516 = vadd.f32 %v1514, 1e-05
    %v1517 = vadd.f32 %v1515, 1e-05
    %v1518 = vrsqrt.pop %v1516
    %v1519 = vrsqrt.pop %v1517
    %v1522 = vcombine.low %v1518, %v1519
    %v1524 = vunpack.c.l.s4 1966171168
    %v1525 = vunpack.c.0.s8 %v1524
    %v1526 = vlaneseq
    %v1527 = vshrl.u32 %v1526, 7
    %v1528 = vsub.s32 %v1525, %v1527
    %v1529 = vrot.slane %v1522, %v1528
    %v1531 = vunpack.c.l.s4 1966171168
    %v1532 = vunpack.c.0.s8 %v1531
    %v1533 = vlaneseq
    %v1534 = vshrl.u32 %v1533, 7
    %v1535 = vsub.s32 %v1532, %v1534
    %v1536 = vrot.slane %v1529, %v1535
    %v1538 = vmul.f32 %v1348, %v1536
    %v1540 = vlaneseq
    %v1541 = vshrl.u32 %v1540, 7
    %v1542 = vsub.s32 0, %v1541
    %v1543 = vrot.slane %v1538, %v1542
    %v1544 = vlaneseq
    %v1545 = vshrl.u32 %v1544, 7
    %v1546 = vsub.s32 1, %v1545
    %v1547 = vrot.slane %v1538, %v1546
    %v1550 = vmul.f32 %v1508, %v1543
    %v1551 = vmul.f32 %v1509, %v1547
    %v1554 = vcombine.low %v1550, %v1551
    %v1556 = vunpack.c.l.s4 1966171168
    %v1557 = vunpack.c.0.s8 %v1556
    %v1558 = vlaneseq
    %v1559 = vshrl.u32 %v1558, 7
    %v1560 = vsub.s32 %v1557, %v1559
    %v1561 = vrot.slane %v1554, %v1560
    %v1563 = vunpack.c.l.s4 1966171168
    %v1564 = vunpack.c.0.s8 %v1563
    %v1565 = vlaneseq
    %v1566 = vshrl.u32 %v1565, 7
    %v1567 = vsub.s32 %v1564, %v1566
    %v1568 = vrot.slane %v1561, %v1567
    %v1570 = vsub.f32 %v1349, %v1568
    %v1571 = vmul.f32 %v1358, %v1543
    %v1572 = vmul.f32 %v1359, %v1547
    %v1573 = vmul.f32 %v1360, %v1543
    %v1574 = vmul.f32 %v1361, %v1547
    %v1576 = vlaneseq
    %v1577 = vshrl.u32 %v1576, 7
    %v1578 = vsub.s32 0, %v1577
    %v1579 = vrot.slane %v1570, %v1578
    %v1580 = vlaneseq
    %v1581 = vshrl.u32 %v1580, 7
    %v1582 = vsub.s32 1, %v1581
    %v1583 = vrot.slane %v1570, %v1582
    %v1586 = vadd.f32 %v1571, %v1579
    %v1587 = vadd.f32 %v1572, %v1583
    %v1588 = vadd.f32 %v1573, %v1579
    %v1589 = vadd.f32 %v1574, %v1583
    %v1590 = vld [vmem:[%s13] sm:$0xff]
    %v1591 = vld [vmem:[%s13 + $0x8] sm:$0xff]
    %v1592 = vld [vmem:[%s13 + $0x10] sm:$0xff]
    %v1593 = vld [vmem:[%s13 + $0x18] sm:$0xff]
    %v1594 = vld [vmem:[%s13 + $0x20] sm:$0xff]
    %v1595 = vld [vmem:[%s13 + $0x28] sm:$0xff]
    %v1596 = vld [vmem:[%s13 + $0x30] sm:$0xff]
    %v1597 = vld [vmem:[%s13 + $0x38] sm:$0xff]
    %v1598 = vld [vmem:[%s13 + $0x40] sm:$0xff]
    %v1599 = vld [vmem:[%s13 + $0x48] sm:$0xff]
    %v1600 = vld [vmem:[%s13 + $0x50] sm:$0xff]
    %v1601 = vld [vmem:[%s13 + $0x58] sm:$0xff]
    %v1602 = vld [vmem:[%s13 + $0x60] sm:$0xff]
    %v1603 = vld [vmem:[%s13 + $0x68] sm:$0xff]
    %v1604 = vld [vmem:[%s13 + $0x70] sm:$0xff]
    %v1605 = vld [vmem:[%s13 + $0x78] sm:$0xff]
    %v1606 = vld [vmem:[%s13 + $0x80] sm:$0xff]
    %v1607 = vld [vmem:[%s13 + $0x88] sm:$0xff]
    %v1608 = vld [vmem:[%s13 + $0x90] sm:$0xff]
    %v1609 = vld [vmem:[%s13 + $0x98] sm:$0xff]
    %v1610 = vld [vmem:[%s13 + $0xa0] sm:$0xff]
    %v1611 = vld [vmem:[%s13 + $0xa8] sm:$0xff]
    %v1612 = vld [vmem:[%s13 + $0xb0] sm:$0xff]
    %v1613 = vld [vmem:[%s13 + $0xb8] sm:$0xff]
    %v1614 = vld [vmem:[%s13 + $0xc0] sm:$0xff]
    %v1615 = vld [vmem:[%s13 + $0xc8] sm:$0xff]
    %v1616 = vld [vmem:[%s13 + $0xd0] sm:$0xff]
    %v1617 = vld [vmem:[%s13 + $0xd8] sm:$0xff]
    %v1618 = vld [vmem:[%s13 + $0xe0] sm:$0xff]
    %v1619 = vld [vmem:[%s13 + $0xe8] sm:$0xff]
    %v1620 = vld [vmem:[%s13 + $0xf0] sm:$0xff]
    %v1621 = vld [vmem:[%s13 + $0xf8] sm:$0xff]
    %v1622 = vld [vmem:[%s13 + $0x100] sm:$0xff]
    %v1623 = vld [vmem:[%s13 + $0x108] sm:$0xff]
    %v1624 = vld [vmem:[%s13 + $0x110] sm:$0xff]
    %v1625 = vld [vmem:[%s13 + $0x118] sm:$0xff]
    %v1626 = vld [vmem:[%s13 + $0x120] sm:$0xff]
    %v1627 = vld [vmem:[%s13 + $0x128] sm:$0xff]
    %v1628 = vld [vmem:[%s13 + $0x130] sm:$0xff]
    %v1629 = vld [vmem:[%s13 + $0x138] sm:$0xff]
    %v1630 = vld [vmem:[%s13 + $0x140] sm:$0xff]
    %v1631 = vld [vmem:[%s13 + $0x148] sm:$0xff]
    %v1632 = vld [vmem:[%s13 + $0x150] sm:$0xff]
    %v1633 = vld [vmem:[%s13 + $0x158] sm:$0xff]
    %v1634 = vld [vmem:[%s13 + $0x160] sm:$0xff]
    %v1635 = vld [vmem:[%s13 + $0x168] sm:$0xff]
    %v1636 = vld [vmem:[%s13 + $0x170] sm:$0xff]
    %v1637 = vld [vmem:[%s13 + $0x178] sm:$0xff]
    %v1638 = vld [vmem:[%s13 + $0x180] sm:$0xff]
    %v1639 = vld [vmem:[%s13 + $0x188] sm:$0xff]
    %v1640 = vld [vmem:[%s13 + $0x190] sm:$0xff]
    %v1641 = vld [vmem:[%s13 + $0x198] sm:$0xff]
    %v1642 = vld [vmem:[%s13 + $0x1a0] sm:$0xff]
    %v1643 = vld [vmem:[%s13 + $0x1a8] sm:$0xff]
    %v1644 = vld [vmem:[%s13 + $0x1b0] sm:$0xff]
    %v1645 = vld [vmem:[%s13 + $0x1b8] sm:$0xff]
    %v1646 = vld [vmem:[%s13 + $0x1c0] sm:$0xff]
    %v1647 = vld [vmem:[%s13 + $0x1c8] sm:$0xff]
    %v1648 = vld [vmem:[%s13 + $0x1d0] sm:$0xff]
    %v1649 = vld [vmem:[%s13 + $0x1d8] sm:$0xff]
    %v1650 = vld [vmem:[%s13 + $0x1e0] sm:$0xff]
    %v1651 = vld [vmem:[%s13 + $0x1e8] sm:$0xff]
    %v1652 = vld [vmem:[%s13 + $0x1f0] sm:$0xff]
    %v1653 = vld [vmem:[%s13 + $0x1f8] sm:$0xff]
    %v1654 = vld [vmem:[%s13 + $0x200] sm:$0xff]
    %v1655 = vld [vmem:[%s13 + $0x208] sm:$0xff]
    %v1656 = vld [vmem:[%s13 + $0x210] sm:$0xff]
    %v1657 = vld [vmem:[%s13 + $0x218] sm:$0xff]
    %v1658 = vld [vmem:[%s13 + $0x220] sm:$0xff]
    %v1659 = vld [vmem:[%s13 + $0x228] sm:$0xff]
    %v1660 = vld [vmem:[%s13 + $0x230] sm:$0xff]
    %v1661 = vld [vmem:[%s13 + $0x238] sm:$0xff]
    %v1662 = vld [vmem:[%s13 + $0x240] sm:$0xff]
    %v1663 = vld [vmem:[%s13 + $0x248] sm:$0xff]
    %v1664 = vld [vmem:[%s13 + $0x250] sm:$0xff]
    %v1665 = vld [vmem:[%s13 + $0x258] sm:$0xff]
    %v1666 = vld [vmem:[%s13 + $0x260] sm:$0xff]
    %v1667 = vld [vmem:[%s13 + $0x268] sm:$0xff]
    %v1668 = vld [vmem:[%s13 + $0x270] sm:$0xff]
    %v1669 = vld [vmem:[%s13 + $0x278] sm:$0xff]
    %v1670 = vld [vmem:[%s13 + $0x280] sm:$0xff]
    %v1671 = vld [vmem:[%s13 + $0x288] sm:$0xff]
    %v1672 = vld [vmem:[%s13 + $0x290] sm:$0xff]
    %v1673 = vld [vmem:[%s13 + $0x298] sm:$0xff]
    %v1674 = vld [vmem:[%s13 + $0x2a0] sm:$0xff]
    %v1675 = vld [vmem:[%s13 + $0x2a8] sm:$0xff]
    %v1676 = vld [vmem:[%s13 + $0x2b0] sm:$0xff]
    %v1677 = vld [vmem:[%s13 + $0x2b8] sm:$0xff]
    %v1678 = vld [vmem:[%s13 + $0x2c0] sm:$0xff]
    %v1679 = vld [vmem:[%s13 + $0x2c8] sm:$0xff]
    %v1680 = vld [vmem:[%s13 + $0x2d0] sm:$0xff]
    %v1681 = vld [vmem:[%s13 + $0x2d8] sm:$0xff]
    %v1682 = vld [vmem:[%s13 + $0x2e0] sm:$0xff]
    %v1683 = vld [vmem:[%s13 + $0x2e8] sm:$0xff]
    %v1684 = vld [vmem:[%s13 + $0x2f0] sm:$0xff]
    %v1685 = vld [vmem:[%s13 + $0x2f8] sm:$0xff]
    %v1686 = vld [vmem:[%s13 + $0x300] sm:$0xff]
    %v1687 = vld [vmem:[%s13 + $0x308] sm:$0xff]
    %v1688 = vld [vmem:[%s13 + $0x310] sm:$0xff]
    %v1689 = vld [vmem:[%s13 + $0x318] sm:$0xff]
    %v1690 = vld [vmem:[%s13 + $0x320] sm:$0xff]
    %v1691 = vld [vmem:[%s13 + $0x328] sm:$0xff]
    %v1692 = vld [vmem:[%s13 + $0x330] sm:$0xff]
    %v1693 = vld [vmem:[%s13 + $0x338] sm:$0xff]
    %v1694 = vld [vmem:[%s13 + $0x340] sm:$0xff]
    %v1695 = vld [vmem:[%s13 + $0x348] sm:$0xff]
    %v1696 = vld [vmem:[%s13 + $0x350] sm:$0xff]
    %v1697 = vld [vmem:[%s13 + $0x358] sm:$0xff]
    %v1698 = vld [vmem:[%s13 + $0x360] sm:$0xff]
    %v1699 = vld [vmem:[%s13 + $0x368] sm:$0xff]
    %v1700 = vld [vmem:[%s13 + $0x370] sm:$0xff]
    %v1701 = vld [vmem:[%s13 + $0x378] sm:$0xff]
    %v1702 = vld [vmem:[%s13 + $0x380] sm:$0xff]
    %v1703 = vld [vmem:[%s13 + $0x388] sm:$0xff]
    %v1704 = vld [vmem:[%s13 + $0x390] sm:$0xff]
    %v1705 = vld [vmem:[%s13 + $0x398] sm:$0xff]
    %v1706 = vld [vmem:[%s13 + $0x3a0] sm:$0xff]
    %v1707 = vld [vmem:[%s13 + $0x3a8] sm:$0xff]
    %v1708 = vld [vmem:[%s13 + $0x3b0] sm:$0xff]
    %v1709 = vld [vmem:[%s13 + $0x3b8] sm:$0xff]
    %v1710 = vld [vmem:[%s13 + $0x3c0] sm:$0xff]
    %v1711 = vld [vmem:[%s13 + $0x3c8] sm:$0xff]
    %v1712 = vld [vmem:[%s13 + $0x3d0] sm:$0xff]
    %v1713 = vld [vmem:[%s13 + $0x3d8] sm:$0xff]
    %v1714 = vld [vmem:[%s13 + $0x3e0] sm:$0xff]
    %v1715 = vld [vmem:[%s13 + $0x3e8] sm:$0xff]
    %v1716 = vld [vmem:[%s13 + $0x3f0] sm:$0xff]
    %v1717 = vld [vmem:[%s13 + $0x3f8] sm:$0xff]
    %v1718 = vld [vmem:[%s13 + $0x400] sm:$0xff]
    %v1719 = vld [vmem:[%s13 + $0x408] sm:$0xff]
    %v1720 = vld [vmem:[%s13 + $0x410] sm:$0xff]
    %v1721 = vld [vmem:[%s13 + $0x418] sm:$0xff]
    %v1722 = vld [vmem:[%s13 + $0x420] sm:$0xff]
    %v1723 = vld [vmem:[%s13 + $0x428] sm:$0xff]
    %v1724 = vld [vmem:[%s13 + $0x430] sm:$0xff]
    %v1725 = vld [vmem:[%s13 + $0x438] sm:$0xff]
    %v1726 = vld [vmem:[%s13 + $0x440] sm:$0xff]
    %v1727 = vld [vmem:[%s13 + $0x448] sm:$0xff]
    %v1728 = vld [vmem:[%s13 + $0x450] sm:$0xff]
    %v1729 = vld [vmem:[%s13 + $0x458] sm:$0xff]
    %v1730 = vld [vmem:[%s13 + $0x460] sm:$0xff]
    %v1731 = vld [vmem:[%s13 + $0x468] sm:$0xff]
    %v1732 = vld [vmem:[%s13 + $0x470] sm:$0xff]
    %v1733 = vld [vmem:[%s13 + $0x478] sm:$0xff]
    %v1734 = vld [vmem:[%s13 + $0x480] sm:$0xff]
    %v1735 = vld [vmem:[%s13 + $0x488] sm:$0xff]
    %v1736 = vld [vmem:[%s13 + $0x490] sm:$0xff]
    %v1737 = vld [vmem:[%s13 + $0x498] sm:$0xff]
    %v1738 = vld [vmem:[%s13 + $0x4a0] sm:$0xff]
    %v1739 = vld [vmem:[%s13 + $0x4a8] sm:$0xff]
    %v1740 = vld [vmem:[%s13 + $0x4b0] sm:$0xff]
    %v1741 = vld [vmem:[%s13 + $0x4b8] sm:$0xff]
    %v1742 = vld [vmem:[%s13 + $0x4c0] sm:$0xff]
    %v1743 = vld [vmem:[%s13 + $0x4c8] sm:$0xff]
    %v1744 = vld [vmem:[%s13 + $0x4d0] sm:$0xff]
    %v1745 = vld [vmem:[%s13 + $0x4d8] sm:$0xff]
    %v1746 = vld [vmem:[%s13 + $0x4e0] sm:$0xff]
    %v1747 = vld [vmem:[%s13 + $0x4e8] sm:$0xff]
    %v1748 = vld [vmem:[%s13 + $0x4f0] sm:$0xff]
    %v1749 = vld [vmem:[%s13 + $0x4f8] sm:$0xff]
    %v1750 = vld [vmem:[%s13 + $0x500] sm:$0xff]
    %v1751 = vld [vmem:[%s13 + $0x508] sm:$0xff]
    %v1752 = vld [vmem:[%s13 + $0x510] sm:$0xff]
    %v1753 = vld [vmem:[%s13 + $0x518] sm:$0xff]
    %v1754 = vld [vmem:[%s13 + $0x520] sm:$0xff]
    %v1755 = vld [vmem:[%s13 + $0x528] sm:$0xff]
    %v1756 = vld [vmem:[%s13 + $0x530] sm:$0xff]
    %v1757 = vld [vmem:[%s13 + $0x538] sm:$0xff]
    %v1758 = vld [vmem:[%s13 + $0x540] sm:$0xff]
    %v1759 = vld [vmem:[%s13 + $0x548] sm:$0xff]
    %v1760 = vld [vmem:[%s13 + $0x550] sm:$0xff]
    %v1761 = vld [vmem:[%s13 + $0x558] sm:$0xff]
    %v1762 = vld [vmem:[%s13 + $0x560] sm:$0xff]
    %v1763 = vld [vmem:[%s13 + $0x568] sm:$0xff]
    %v1764 = vld [vmem:[%s13 + $0x570] sm:$0xff]
    %v1765 = vld [vmem:[%s13 + $0x578] sm:$0xff]
    %v1766 = vld [vmem:[%s13 + $0x580] sm:$0xff]
    %v1767 = vld [vmem:[%s13 + $0x588] sm:$0xff]
    %v1768 = vld [vmem:[%s13 + $0x590] sm:$0xff]
    %v1769 = vld [vmem:[%s13 + $0x598] sm:$0xff]
    %v1770 = vld [vmem:[%s13 + $0x5a0] sm:$0xff]
    %v1771 = vld [vmem:[%s13 + $0x5a8] sm:$0xff]
    %v1772 = vld [vmem:[%s13 + $0x5b0] sm:$0xff]
    %v1773 = vld [vmem:[%s13 + $0x5b8] sm:$0xff]
    %v1774 = vld [vmem:[%s13 + $0x5c0] sm:$0xff]
    %v1775 = vld [vmem:[%s13 + $0x5c8] sm:$0xff]
    %v1776 = vld [vmem:[%s13 + $0x5d0] sm:$0xff]
    %v1777 = vld [vmem:[%s13 + $0x5d8] sm:$0xff]
    %v1778 = vld [vmem:[%s13 + $0x5e0] sm:$0xff]
    %v1779 = vld [vmem:[%s13 + $0x5e8] sm:$0xff]
    %v1780 = vld [vmem:[%s13 + $0x5f0] sm:$0xff]
    %v1781 = vld [vmem:[%s13 + $0x5f8] sm:$0xff]
    %v1782 = vld [vmem:[%s13 + $0x600] sm:$0xff]
    %v1783 = vld [vmem:[%s13 + $0x608] sm:$0xff]
    %v1784 = vld [vmem:[%s13 + $0x610] sm:$0xff]
    %v1785 = vld [vmem:[%s13 + $0x618] sm:$0xff]
    %v1786 = vld [vmem:[%s13 + $0x620] sm:$0xff]
    %v1787 = vld [vmem:[%s13 + $0x628] sm:$0xff]
    %v1788 = vld [vmem:[%s13 + $0x630] sm:$0xff]
    %v1789 = vld [vmem:[%s13 + $0x638] sm:$0xff]
    %v1790 = vld [vmem:[%s13 + $0x640] sm:$0xff]
    %v1791 = vld [vmem:[%s13 + $0x648] sm:$0xff]
    %v1792 = vld [vmem:[%s13 + $0x650] sm:$0xff]
    %v1793 = vld [vmem:[%s13 + $0x658] sm:$0xff]
    %v1794 = vld [vmem:[%s13 + $0x660] sm:$0xff]
    %v1795 = vld [vmem:[%s13 + $0x668] sm:$0xff]
    %v1796 = vld [vmem:[%s13 + $0x670] sm:$0xff]
    %v1797 = vld [vmem:[%s13 + $0x678] sm:$0xff]
    %v1798 = vld [vmem:[%s13 + $0x680] sm:$0xff]
    %v1799 = vld [vmem:[%s13 + $0x688] sm:$0xff]
    %v1800 = vld [vmem:[%s13 + $0x690] sm:$0xff]
    %v1801 = vld [vmem:[%s13 + $0x698] sm:$0xff]
    %v1802 = vld [vmem:[%s13 + $0x6a0] sm:$0xff]
    %v1803 = vld [vmem:[%s13 + $0x6a8] sm:$0xff]
    %v1804 = vld [vmem:[%s13 + $0x6b0] sm:$0xff]
    %v1805 = vld [vmem:[%s13 + $0x6b8] sm:$0xff]
    %v1806 = vld [vmem:[%s13 + $0x6c0] sm:$0xff]
    %v1807 = vld [vmem:[%s13 + $0x6c8] sm:$0xff]
    %v1808 = vld [vmem:[%s13 + $0x6d0] sm:$0xff]
    %v1809 = vld [vmem:[%s13 + $0x6d8] sm:$0xff]
    %v1810 = vld [vmem:[%s13 + $0x6e0] sm:$0xff]
    %v1811 = vld [vmem:[%s13 + $0x6e8] sm:$0xff]
    %v1812 = vld [vmem:[%s13 + $0x6f0] sm:$0xff]
    %v1813 = vld [vmem:[%s13 + $0x6f8] sm:$0xff]
    %v1814 = vld [vmem:[%s13 + $0x700] sm:$0xff]
    %v1815 = vld [vmem:[%s13 + $0x708] sm:$0xff]
    %v1816 = vld [vmem:[%s13 + $0x710] sm:$0xff]
    %v1817 = vld [vmem:[%s13 + $0x718] sm:$0xff]
    %v1818 = vld [vmem:[%s13 + $0x720] sm:$0xff]
    %v1819 = vld [vmem:[%s13 + $0x728] sm:$0xff]
    %v1820 = vld [vmem:[%s13 + $0x730] sm:$0xff]
    %v1821 = vld [vmem:[%s13 + $0x738] sm:$0xff]
    %v1822 = vld [vmem:[%s13 + $0x740] sm:$0xff]
    %v1823 = vld [vmem:[%s13 + $0x748] sm:$0xff]
    %v1824 = vld [vmem:[%s13 + $0x750] sm:$0xff]
    %v1825 = vld [vmem:[%s13 + $0x758] sm:$0xff]
    %v1826 = vld [vmem:[%s13 + $0x760] sm:$0xff]
    %v1827 = vld [vmem:[%s13 + $0x768] sm:$0xff]
    %v1828 = vld [vmem:[%s13 + $0x770] sm:$0xff]
    %v1829 = vld [vmem:[%s13 + $0x778] sm:$0xff]
    %v1830 = vld [vmem:[%s13 + $0x780] sm:$0xff]
    %v1831 = vld [vmem:[%s13 + $0x788] sm:$0xff]
    %v1832 = vld [vmem:[%s13 + $0x790] sm:$0xff]
    %v1833 = vld [vmem:[%s13 + $0x798] sm:$0xff]
    %v1834 = vld [vmem:[%s13 + $0x7a0] sm:$0xff]
    %v1835 = vld [vmem:[%s13 + $0x7a8] sm:$0xff]
    %v1836 = vld [vmem:[%s13 + $0x7b0] sm:$0xff]
    %v1837 = vld [vmem:[%s13 + $0x7b8] sm:$0xff]
    %v1838 = vld [vmem:[%s13 + $0x7c0] sm:$0xff]
    %v1839 = vld [vmem:[%s13 + $0x7c8] sm:$0xff]
    %v1840 = vld [vmem:[%s13 + $0x7d0] sm:$0xff]
    %v1841 = vld [vmem:[%s13 + $0x7d8] sm:$0xff]
    %v1842 = vld [vmem:[%s13 + $0x7e0] sm:$0xff]
    %v1843 = vld [vmem:[%s13 + $0x7e8] sm:$0xff]
    %v1844 = vld [vmem:[%s13 + $0x7f0] sm:$0xff]
    %v1845 = vld [vmem:[%s13 + $0x7f8] sm:$0xff]
    %v1846 = vld [vmem:[%s13 + $0x800] sm:$0xff]
    %v1847 = vld [vmem:[%s13 + $0x808] sm:$0xff]
    %v1848 = vld [vmem:[%s13 + $0x810] sm:$0xff]
    %v1849 = vld [vmem:[%s13 + $0x818] sm:$0xff]
    %v1850 = vld [vmem:[%s13 + $0x820] sm:$0xff]
    %v1851 = vld [vmem:[%s13 + $0x828] sm:$0xff]
    %v1852 = vld [vmem:[%s13 + $0x830] sm:$0xff]
    %v1853 = vld [vmem:[%s13 + $0x838] sm:$0xff]
    %v1854 = vld [vmem:[%s13 + $0x840] sm:$0xff]
    %v1855 = vld [vmem:[%s13 + $0x848] sm:$0xff]
    %v1856 = vld [vmem:[%s13 + $0x850] sm:$0xff]
    %v1857 = vld [vmem:[%s13 + $0x858] sm:$0xff]
    %v1858 = vld [vmem:[%s13 + $0x860] sm:$0xff]
    %v1859 = vld [vmem:[%s13 + $0x868] sm:$0xff]
    %v1860 = vld [vmem:[%s13 + $0x870] sm:$0xff]
    %v1861 = vld [vmem:[%s13 + $0x878] sm:$0xff]
    %v1862 = vld [vmem:[%s13 + $0x880] sm:$0xff]
    %v1863 = vld [vmem:[%s13 + $0x888] sm:$0xff]
    %v1864 = vld [vmem:[%s13 + $0x890] sm:$0xff]
    %v1865 = vld [vmem:[%s13 + $0x898] sm:$0xff]
    %v1866 = vld [vmem:[%s13 + $0x8a0] sm:$0xff]
    %v1867 = vld [vmem:[%s13 + $0x8a8] sm:$0xff]
    %v1868 = vld [vmem:[%s13 + $0x8b0] sm:$0xff]
    %v1869 = vld [vmem:[%s13 + $0x8b8] sm:$0xff]
    %v1870 = vld [vmem:[%s13 + $0x8c0] sm:$0xff]
    %v1871 = vld [vmem:[%s13 + $0x8c8] sm:$0xff]
    %v1872 = vld [vmem:[%s13 + $0x8d0] sm:$0xff]
    %v1873 = vld [vmem:[%s13 + $0x8d8] sm:$0xff]
    %v1874 = vld [vmem:[%s13 + $0x8e0] sm:$0xff]
    %v1875 = vld [vmem:[%s13 + $0x8e8] sm:$0xff]
    %v1876 = vld [vmem:[%s13 + $0x8f0] sm:$0xff]
    %v1877 = vld [vmem:[%s13 + $0x8f8] sm:$0xff]
    %v1878 = vld [vmem:[%s14] sm:$0xff]
    %v1879 = vld [vmem:[%s14 + $0x8] sm:$0xff]
    %v1880 = vld [vmem:[%s14 + $0x10] sm:$0xff]
    %v1881 = vld [vmem:[%s14 + $0x18] sm:$0xff]
    %v1882 = vld [vmem:[%s14 + $0x20] sm:$0xff]
    %v1883 = vld [vmem:[%s14 + $0x28] sm:$0xff]
    %v1884 = vld [vmem:[%s14 + $0x30] sm:$0xff]
    %v1885 = vld [vmem:[%s14 + $0x38] sm:$0xff]
    %v1886 = vld [vmem:[%s14 + $0x40] sm:$0xff]
    %v1887 = vld [vmem:[%s14 + $0x48] sm:$0xff]
    %v1888 = vld [vmem:[%s14 + $0x50] sm:$0xff]
    %v1889 = vld [vmem:[%s14 + $0x58] sm:$0xff]
    %v1890 = vld [vmem:[%s14 + $0x60] sm:$0xff]
    %v1891 = vld [vmem:[%s14 + $0x68] sm:$0xff]
    %v1892 = vld [vmem:[%s14 + $0x70] sm:$0xff]
    %v1893 = vld [vmem:[%s14 + $0x78] sm:$0xff]
    %v1894 = vld [vmem:[%s14 + $0x80] sm:$0xff]
    %v1895 = vld [vmem:[%s14 + $0x88] sm:$0xff]
    %v1896 = vld [vmem:[%s14 + $0x90] sm:$0xff]
    %v1897 = vld [vmem:[%s14 + $0x98] sm:$0xff]
    %v1898 = vld [vmem:[%s14 + $0xa0] sm:$0xff]
    %v1899 = vld [vmem:[%s14 + $0xa8] sm:$0xff]
    %v1900 = vld [vmem:[%s14 + $0xb0] sm:$0xff]
    %v1901 = vld [vmem:[%s14 + $0xb8] sm:$0xff]
    %v1902 = vld [vmem:[%s14 + $0xc0] sm:$0xff]
    %v1903 = vld [vmem:[%s14 + $0xc8] sm:$0xff]
    %v1904 = vld [vmem:[%s14 + $0xd0] sm:$0xff]
    %v1905 = vld [vmem:[%s14 + $0xd8] sm:$0xff]
    %v1906 = vld [vmem:[%s14 + $0xe0] sm:$0xff]
    %v1907 = vld [vmem:[%s14 + $0xe8] sm:$0xff]
    %v1908 = vld [vmem:[%s14 + $0xf0] sm:$0xff]
    %v1909 = vld [vmem:[%s14 + $0xf8] sm:$0xff]
    %v1910 = vld [vmem:[%s14 + $0x100] sm:$0xff]
    %v1911 = vld [vmem:[%s14 + $0x108] sm:$0xff]
    %v1912 = vld [vmem:[%s14 + $0x110] sm:$0xff]
    %v1913 = vld [vmem:[%s14 + $0x118] sm:$0xff]
    %v1914 = vld [vmem:[%s14 + $0x120] sm:$0xff]
    %v1915 = vld [vmem:[%s14 + $0x128] sm:$0xff]
    %v1916 = vld [vmem:[%s14 + $0x130] sm:$0xff]
    %v1917 = vld [vmem:[%s14 + $0x138] sm:$0xff]
    %v1918 = vld [vmem:[%s14 + $0x140] sm:$0xff]
    %v1919 = vld [vmem:[%s14 + $0x148] sm:$0xff]
    %v1920 = vld [vmem:[%s14 + $0x150] sm:$0xff]
    %v1921 = vld [vmem:[%s14 + $0x158] sm:$0xff]
    %v1922 = vld [vmem:[%s14 + $0x160] sm:$0xff]
    %v1923 = vld [vmem:[%s14 + $0x168] sm:$0xff]
    %v1924 = vld [vmem:[%s14 + $0x170] sm:$0xff]
    %v1925 = vld [vmem:[%s14 + $0x178] sm:$0xff]
    %v1926 = vld [vmem:[%s14 + $0x180] sm:$0xff]
    %v1927 = vld [vmem:[%s14 + $0x188] sm:$0xff]
    %v1928 = vld [vmem:[%s14 + $0x190] sm:$0xff]
    %v1929 = vld [vmem:[%s14 + $0x198] sm:$0xff]
    %v1930 = vld [vmem:[%s14 + $0x1a0] sm:$0xff]
    %v1931 = vld [vmem:[%s14 + $0x1a8] sm:$0xff]
    %v1932 = vld [vmem:[%s14 + $0x1b0] sm:$0xff]
    %v1933 = vld [vmem:[%s14 + $0x1b8] sm:$0xff]
    %v1934 = vld [vmem:[%s14 + $0x1c0] sm:$0xff]
    %v1935 = vld [vmem:[%s14 + $0x1c8] sm:$0xff]
    %v1936 = vld [vmem:[%s14 + $0x1d0] sm:$0xff]
    %v1937 = vld [vmem:[%s14 + $0x1d8] sm:$0xff]
    %v1938 = vld [vmem:[%s14 + $0x1e0] sm:$0xff]
    %v1939 = vld [vmem:[%s14 + $0x1e8] sm:$0xff]
    %v1940 = vld [vmem:[%s14 + $0x1f0] sm:$0xff]
    %v1941 = vld [vmem:[%s14 + $0x1f8] sm:$0xff]
    %v1942 = vld [vmem:[%s14 + $0x200] sm:$0xff]
    %v1943 = vld [vmem:[%s14 + $0x208] sm:$0xff]
    %v1944 = vld [vmem:[%s14 + $0x210] sm:$0xff]
    %v1945 = vld [vmem:[%s14 + $0x218] sm:$0xff]
    %v1946 = vld [vmem:[%s14 + $0x220] sm:$0xff]
    %v1947 = vld [vmem:[%s14 + $0x228] sm:$0xff]
    %v1948 = vld [vmem:[%s14 + $0x230] sm:$0xff]
    %v1949 = vld [vmem:[%s14 + $0x238] sm:$0xff]
    %v1950 = vld [vmem:[%s14 + $0x240] sm:$0xff]
    %v1951 = vld [vmem:[%s14 + $0x248] sm:$0xff]
    %v1952 = vld [vmem:[%s14 + $0x250] sm:$0xff]
    %v1953 = vld [vmem:[%s14 + $0x258] sm:$0xff]
    %v1954 = vld [vmem:[%s14 + $0x260] sm:$0xff]
    %v1955 = vld [vmem:[%s14 + $0x268] sm:$0xff]
    %v1956 = vld [vmem:[%s14 + $0x270] sm:$0xff]
    %v1957 = vld [vmem:[%s14 + $0x278] sm:$0xff]
    %v1958 = vld [vmem:[%s14 + $0x280] sm:$0xff]
    %v1959 = vld [vmem:[%s14 + $0x288] sm:$0xff]
    %v1960 = vld [vmem:[%s14 + $0x290] sm:$0xff]
    %v1961 = vld [vmem:[%s14 + $0x298] sm:$0xff]
    %v1962 = vld [vmem:[%s14 + $0x2a0] sm:$0xff]
    %v1963 = vld [vmem:[%s14 + $0x2a8] sm:$0xff]
    %v1964 = vld [vmem:[%s14 + $0x2b0] sm:$0xff]
    %v1965 = vld [vmem:[%s14 + $0x2b8] sm:$0xff]
    %v1966 = vld [vmem:[%s14 + $0x2c0] sm:$0xff]
    %v1967 = vld [vmem:[%s14 + $0x2c8] sm:$0xff]
    %v1968 = vld [vmem:[%s14 + $0x2d0] sm:$0xff]
    %v1969 = vld [vmem:[%s14 + $0x2d8] sm:$0xff]
    %v1970 = vld [vmem:[%s14 + $0x2e0] sm:$0xff]
    %v1971 = vld [vmem:[%s14 + $0x2e8] sm:$0xff]
    %v1972 = vld [vmem:[%s14 + $0x2f0] sm:$0xff]
    %v1973 = vld [vmem:[%s14 + $0x2f8] sm:$0xff]
    %v1974 = vld [vmem:[%s14 + $0x300] sm:$0xff]
    %v1975 = vld [vmem:[%s14 + $0x308] sm:$0xff]
    %v1976 = vld [vmem:[%s14 + $0x310] sm:$0xff]
    %v1977 = vld [vmem:[%s14 + $0x318] sm:$0xff]
    %v1978 = vld [vmem:[%s14 + $0x320] sm:$0xff]
    %v1979 = vld [vmem:[%s14 + $0x328] sm:$0xff]
    %v1980 = vld [vmem:[%s14 + $0x330] sm:$0xff]
    %v1981 = vld [vmem:[%s14 + $0x338] sm:$0xff]
    %v1982 = vld [vmem:[%s14 + $0x340] sm:$0xff]
    %v1983 = vld [vmem:[%s14 + $0x348] sm:$0xff]
    %v1984 = vld [vmem:[%s14 + $0x350] sm:$0xff]
    %v1985 = vld [vmem:[%s14 + $0x358] sm:$0xff]
    %v1986 = vld [vmem:[%s14 + $0x360] sm:$0xff]
    %v1987 = vld [vmem:[%s14 + $0x368] sm:$0xff]
    %v1988 = vld [vmem:[%s14 + $0x370] sm:$0xff]
    %v1989 = vld [vmem:[%s14 + $0x378] sm:$0xff]
    %v1990 = vld [vmem:[%s14 + $0x380] sm:$0xff]
    %v1991 = vld [vmem:[%s14 + $0x388] sm:$0xff]
    %v1992 = vld [vmem:[%s14 + $0x390] sm:$0xff]
    %v1993 = vld [vmem:[%s14 + $0x398] sm:$0xff]
    %v1994 = vld [vmem:[%s14 + $0x3a0] sm:$0xff]
    %v1995 = vld [vmem:[%s14 + $0x3a8] sm:$0xff]
    %v1996 = vld [vmem:[%s14 + $0x3b0] sm:$0xff]
    %v1997 = vld [vmem:[%s14 + $0x3b8] sm:$0xff]
    %v1998 = vld [vmem:[%s14 + $0x3c0] sm:$0xff]
    %v1999 = vld [vmem:[%s14 + $0x3c8] sm:$0xff]
    %v2000 = vld [vmem:[%s14 + $0x3d0] sm:$0xff]
    %v2001 = vld [vmem:[%s14 + $0x3d8] sm:$0xff]
    %v2002 = vld [vmem:[%s14 + $0x3e0] sm:$0xff]
    %v2003 = vld [vmem:[%s14 + $0x3e8] sm:$0xff]
    %v2004 = vld [vmem:[%s14 + $0x3f0] sm:$0xff]
    %v2005 = vld [vmem:[%s14 + $0x3f8] sm:$0xff]
    %v2006 = vld [vmem:[%s14 + $0x400] sm:$0xff]
    %v2007 = vld [vmem:[%s14 + $0x408] sm:$0xff]
    %v2008 = vld [vmem:[%s14 + $0x410] sm:$0xff]
    %v2009 = vld [vmem:[%s14 + $0x418] sm:$0xff]
    %v2010 = vld [vmem:[%s14 + $0x420] sm:$0xff]
    %v2011 = vld [vmem:[%s14 + $0x428] sm:$0xff]
    %v2012 = vld [vmem:[%s14 + $0x430] sm:$0xff]
    %v2013 = vld [vmem:[%s14 + $0x438] sm:$0xff]
    %v2014 = vld [vmem:[%s14 + $0x440] sm:$0xff]
    %v2015 = vld [vmem:[%s14 + $0x448] sm:$0xff]
    %v2016 = vld [vmem:[%s14 + $0x450] sm:$0xff]
    %v2017 = vld [vmem:[%s14 + $0x458] sm:$0xff]
    %v2018 = vld [vmem:[%s14 + $0x460] sm:$0xff]
    %v2019 = vld [vmem:[%s14 + $0x468] sm:$0xff]
    %v2020 = vld [vmem:[%s14 + $0x470] sm:$0xff]
    %v2021 = vld [vmem:[%s14 + $0x478] sm:$0xff]
    %v2022 = vld [vmem:[%s14 + $0x480] sm:$0xff]
    %v2023 = vld [vmem:[%s14 + $0x488] sm:$0xff]
    %v2024 = vld [vmem:[%s14 + $0x490] sm:$0xff]
    %v2025 = vld [vmem:[%s14 + $0x498] sm:$0xff]
    %v2026 = vld [vmem:[%s14 + $0x4a0] sm:$0xff]
    %v2027 = vld [vmem:[%s14 + $0x4a8] sm:$0xff]
    %v2028 = vld [vmem:[%s14 + $0x4b0] sm:$0xff]
    %v2029 = vld [vmem:[%s14 + $0x4b8] sm:$0xff]
    %v2030 = vld [vmem:[%s14 + $0x4c0] sm:$0xff]
    %v2031 = vld [vmem:[%s14 + $0x4c8] sm:$0xff]
    %v2032 = vld [vmem:[%s14 + $0x4d0] sm:$0xff]
    %v2033 = vld [vmem:[%s14 + $0x4d8] sm:$0xff]
    %v2034 = vld [vmem:[%s14 + $0x4e0] sm:$0xff]
    %v2035 = vld [vmem:[%s14 + $0x4e8] sm:$0xff]
    %v2036 = vld [vmem:[%s14 + $0x4f0] sm:$0xff]
    %v2037 = vld [vmem:[%s14 + $0x4f8] sm:$0xff]
    %v2038 = vld [vmem:[%s14 + $0x500] sm:$0xff]
    %v2039 = vld [vmem:[%s14 + $0x508] sm:$0xff]
    %v2040 = vld [vmem:[%s14 + $0x510] sm:$0xff]
    %v2041 = vld [vmem:[%s14 + $0x518] sm:$0xff]
    %v2042 = vld [vmem:[%s14 + $0x520] sm:$0xff]
    %v2043 = vld [vmem:[%s14 + $0x528] sm:$0xff]
    %v2044 = vld [vmem:[%s14 + $0x530] sm:$0xff]
    %v2045 = vld [vmem:[%s14 + $0x538] sm:$0xff]
    %v2046 = vld [vmem:[%s14 + $0x540] sm:$0xff]
    %v2047 = vld [vmem:[%s14 + $0x548] sm:$0xff]
    %v2048 = vld [vmem:[%s14 + $0x550] sm:$0xff]
    %v2049 = vld [vmem:[%s14 + $0x558] sm:$0xff]
    %v2050 = vld [vmem:[%s14 + $0x560] sm:$0xff]
    %v2051 = vld [vmem:[%s14 + $0x568] sm:$0xff]
    %v2052 = vld [vmem:[%s14 + $0x570] sm:$0xff]
    %v2053 = vld [vmem:[%s14 + $0x578] sm:$0xff]
    %v2054 = vld [vmem:[%s14 + $0x580] sm:$0xff]
    %v2055 = vld [vmem:[%s14 + $0x588] sm:$0xff]
    %v2056 = vld [vmem:[%s14 + $0x590] sm:$0xff]
    %v2057 = vld [vmem:[%s14 + $0x598] sm:$0xff]
    %v2058 = vld [vmem:[%s14 + $0x5a0] sm:$0xff]
    %v2059 = vld [vmem:[%s14 + $0x5a8] sm:$0xff]
    %v2060 = vld [vmem:[%s14 + $0x5b0] sm:$0xff]
    %v2061 = vld [vmem:[%s14 + $0x5b8] sm:$0xff]
    %v2062 = vld [vmem:[%s14 + $0x5c0] sm:$0xff]
    %v2063 = vld [vmem:[%s14 + $0x5c8] sm:$0xff]
    %v2064 = vld [vmem:[%s14 + $0x5d0] sm:$0xff]
    %v2065 = vld [vmem:[%s14 + $0x5d8] sm:$0xff]
    %v2066 = vld [vmem:[%s14 + $0x5e0] sm:$0xff]
    %v2067 = vld [vmem:[%s14 + $0x5e8] sm:$0xff]
    %v2068 = vld [vmem:[%s14 + $0x5f0] sm:$0xff]
    %v2069 = vld [vmem:[%s14 + $0x5f8] sm:$0xff]
    %2070 = vmatprep.subr.mxu0 %v1969
    %2071 = vmatpush1.msra.mxu0 %v1968
    %2072 = vmatprep.subr.mxu0 %v1963
    %2073 = vmatpush1.msra.mxu0 %v1962
    %2074 = vmatprep.subr.mxu0 %v1957
    %2075 = vmatpush1.msra.mxu0 %v1956
    %2076 = vmatprep.subr.mxu0 %v1951
    %2077 = vmatpush1.msra.mxu0 %v1950
    %2078 = vmatprep.subr.mxu0 %v1945
    %2079 = vmatpush1.msra.mxu0 %v1944
    %2080 = vmatprep.subr.mxu0 %v1939
    %2081 = vmatpush1.msra.mxu0 %v1938
    %2082 = vmatprep.subr.mxu0 %v1933
    %2083 = vmatpush1.msra.mxu0 %v1932
    %2084 = vmatprep.subr.mxu0 %v1927
    %2085 = vmatpush1.msra.mxu0 %v1926
    %2086 = vmatprep.subr.mxu0 %v1921
    %2087 = vmatpush1.msra.mxu0 %v1920
    %2088 = vmatprep.subr.mxu0 %v1915
    %2089 = vmatpush1.msra.mxu0 %v1914
    %2090 = vmatprep.subr.mxu0 %v1909
    %2091 = vmatpush1.msra.mxu0 %v1908
    %2092 = vmatprep.subr.mxu0 %v1903
    %2093 = vmatpush1.msra.mxu0 %v1902
    %2094 = vmatprep.subr.mxu0 %v1897
    %2095 = vmatpush1.msra.mxu0 %v1896
    %2096 = vmatprep.subr.mxu0 %v1891
    %2097 = vmatpush1.msra.mxu0 %v1890
    %2098 = vmatprep.subr.mxu0 %v1885
    %2099 = vmatpush1.msra.mxu0 %v1884
    %2100 = vmatprep.subr.mxu0 %v1879
    %2101 = vmatpush1.msra.mxu0 %v1878
    %2102 = vmatprep.subr.mxu0 %v2065
    %2103 = vmatpush2.msra.mxu0 %v2064
    %2104 = vmatprep.subr.mxu0 %v2059
    %2105 = vmatpush2.msra.mxu0 %v2058
    %2106 = vmatprep.subr.mxu0 %v2053
    %2107 = vmatpush2.msra.mxu0 %v2052
    %2108 = vmatprep.subr.mxu0 %v2047
    %2109 = vmatpush2.msra.mxu0 %v2046
    %2110 = vmatprep.subr.mxu0 %v2041
    %2111 = vmatpush2.msra.mxu0 %v2040
    %2112 = vmatprep.subr.mxu0 %v2035
    %2113 = vmatpush2.msra.mxu0 %v2034
    %2114 = vmatprep.subr.mxu0 %v2029
    %2115 = vmatpush2.msra.mxu0 %v2028
    %2116 = vmatprep.subr.mxu0 %v2023
    %2117 = vmatpush2.msra.mxu0 %v2022
    %2118 = vmatprep.subr.mxu0 %v2017
    %2119 = vmatpush2.msra.mxu0 %v2016
    %2120 = vmatprep.subr.mxu0 %v2011
    %2121 = vmatpush2.msra.mxu0 %v2010
    %2122 = vmatprep.subr.mxu0 %v2005
    %2123 = vmatpush2.msra.mxu0 %v2004
    %2124 = vmatprep.subr.mxu0 %v1999
    %2125 = vmatpush2.msra.mxu0 %v1998
    %2126 = vmatprep.subr.mxu0 %v1993
    %2127 = vmatpush2.msra.mxu0 %v1992
    %2128 = vmatprep.subr.mxu0 %v1987
    %2129 = vmatpush2.msra.mxu0 %v1986
    %2130 = vmatprep.subr.mxu0 %v1981
    %2131 = vmatpush2.msra.mxu0 %v1980
    %2132 = vmatprep.subr.mxu0 %v1975
    %2133 = vmatpush2.msra.mxu0 %v1974
    %2134 = vmatprep.mubr.f32.mxu0 %v1192
    %2135 = vmatmul.mubr.f32.gmra.mxu0 %v1191
    %v2136 = vpop.f32.mrf.mxu0
    %v2137 = vadd.f32 0.0, %v2136
    %v2138 = vpop.f32.mrf.mxu0
    %v2139 = vadd.f32 0.0, %v2138
    %2140 = vmatprep.mubr.f32.mxu0 %v1194
    %2141 = vmatmul.mubr.f32.gmra.mxu0 %v1193
    %v2142 = vpop.f32.mrf.mxu0
    %v2143 = vadd.f32 0.0, %v2142
    %v2144 = vpop.f32.mrf.mxu0
    %v2145 = vadd.f32 0.0, %v2144
    %2146 = vdwg.mxu0
    %2147 = vmatprep.subr.mxu0 %v1971
    %2148 = vmatpush1.msra.mxu0 %v1970
    %2149 = vmatprep.subr.mxu0 %v1965
    %2150 = vmatpush1.msra.mxu0 %v1964
    %2151 = vmatprep.subr.mxu0 %v1959
    %2152 = vmatpush1.msra.mxu0 %v1958
    %2153 = vmatprep.subr.mxu0 %v1953
    %2154 = vmatpush1.msra.mxu0 %v1952
    %2155 = vmatprep.subr.mxu0 %v1947
    %2156 = vmatpush1.msra.mxu0 %v1946
    %2157 = vmatprep.subr.mxu0 %v1941
    %2158 = vmatpush1.msra.mxu0 %v1940
    %2159 = vmatprep.subr.mxu0 %v1935
    %2160 = vmatpush1.msra.mxu0 %v1934
    %2161 = vmatprep.subr.mxu0 %v1929
    %2162 = vmatpush1.msra.mxu0 %v1928
    %2163 = vmatprep.subr.mxu0 %v1923
    %2164 = vmatpush1.msra.mxu0 %v1922
    %2165 = vmatprep.subr.mxu0 %v1917
    %2166 = vmatpush1.msra.mxu0 %v1916
    %2167 = vmatprep.subr.mxu0 %v1911
    %2168 = vmatpush1.msra.mxu0 %v1910
    %2169 = vmatprep.subr.mxu0 %v1905
    %2170 = vmatpush1.msra.mxu0 %v1904
    %2171 = vmatprep.subr.mxu0 %v1899
    %2172 = vmatpush1.msra.mxu0 %v1898
    %2173 = vmatprep.subr.mxu0 %v1893
    %2174 = vmatpush1.msra.mxu0 %v1892
    %2175 = vmatprep.subr.mxu0 %v1887
    %2176 = vmatpush1.msra.mxu0 %v1886
    %2177 = vmatprep.subr.mxu0 %v1881
    %2178 = vmatpush1.msra.mxu0 %v1880
    %2179 = vmatprep.subr.mxu0 %v2067
    %2180 = vmatpush2.msra.mxu0 %v2066
    %2181 = vmatprep.subr.mxu0 %v2061
    %2182 = vmatpush2.msra.mxu0 %v2060
    %2183 = vmatprep.subr.mxu0 %v2055
    %2184 = vmatpush2.msra.mxu0 %v2054
    %2185 = vmatprep.subr.mxu0 %v2049
    %2186 = vmatpush2.msra.mxu0 %v2048
    %2187 = vmatprep.subr.mxu0 %v2043
    %2188 = vmatpush2.msra.mxu0 %v2042
    %2189 = vmatprep.subr.mxu0 %v2037
    %2190 = vmatpush2.msra.mxu0 %v2036
    %2191 = vmatprep.subr.mxu0 %v2031
    %2192 = vmatpush2.msra.mxu0 %v2030
    %2193 = vmatprep.subr.mxu0 %v2025
    %2194 = vmatpush2.msra.mxu0 %v2024
    %2195 = vmatprep.subr.mxu0 %v2019
    %2196 = vmatpush2.msra.mxu0 %v2018
    %2197 = vmatprep.subr.mxu0 %v2013
    %2198 = vmatpush2.msra.mxu0 %v2012
    %2199 = vmatprep.subr.mxu0 %v2007
    %2200 = vmatpush2.msra.mxu0 %v2006
    %2201 = vmatprep.subr.mxu0 %v2001
    %2202 = vmatpush2.msra.mxu0 %v2000
    %2203 = vmatprep.subr.mxu0 %v1995
    %2204 = vmatpush2.msra.mxu0 %v1994
    %2205 = vmatprep.subr.mxu0 %v1989
    %2206 = vmatpush2.msra.mxu0 %v1988
    %2207 = vmatprep.subr.mxu0 %v1983
    %2208 = vmatpush2.msra.mxu0 %v1982
    %2209 = vmatprep.subr.mxu0 %v1977
    %2210 = vmatpush2.msra.mxu0 %v1976
    %2211 = vmatprep.mubr.f32.mxu0 %v1192
    %2212 = vmatmul.mubr.f32.gmra.mxu0 %v1191
    %v2213 = vpop.f32.mrf.mxu0
    %v2214 = vadd.f32 0.0, %v2213
    %v2215 = vpop.f32.mrf.mxu0
    %v2216 = vadd.f32 0.0, %v2215
    %2217 = vmatprep.mubr.f32.mxu0 %v1194
    %2218 = vmatmul.mubr.f32.gmra.mxu0 %v1193
    %v2219 = vpop.f32.mrf.mxu0
    %v2220 = vadd.f32 0.0, %v2219
    %v2221 = vpop.f32.mrf.mxu0
    %v2222 = vadd.f32 0.0, %v2221
    %2223 = vdwg.mxu0
    %2224 = vmatprep.subr.mxu0 %v1973
    %2225 = vmatpush1.msra.mxu0 %v1972
    %2226 = vmatprep.subr.mxu0 %v1967
    %2227 = vmatpush1.msra.mxu0 %v1966
    %2228 = vmatprep.subr.mxu0 %v1961
    %2229 = vmatpush1.msra.mxu0 %v1960
    %2230 = vmatprep.subr.mxu0 %v1955
    %2231 = vmatpush1.msra.mxu0 %v1954
    %2232 = vmatprep.subr.mxu0 %v1949
    %2233 = vmatpush1.msra.mxu0 %v1948
    %2234 = vmatprep.subr.mxu0 %v1943
    %2235 = vmatpush1.msra.mxu0 %v1942
    %2236 = vmatprep.subr.mxu0 %v1937
    %2237 = vmatpush1.msra.mxu0 %v1936
    %2238 = vmatprep.subr.mxu0 %v1931
    %2239 = vmatpush1.msra.mxu0 %v1930
    %2240 = vmatprep.subr.mxu0 %v1925
    %2241 = vmatpush1.msra.mxu0 %v1924
    %2242 = vmatprep.subr.mxu0 %v1919
    %2243 = vmatpush1.msra.mxu0 %v1918
    %2244 = vmatprep.subr.mxu0 %v1913
    %2245 = vmatpush1.msra.mxu0 %v1912
    %2246 = vmatprep.subr.mxu0 %v1907
    %2247 = vmatpush1.msra.mxu0 %v1906
    %2248 = vmatprep.subr.mxu0 %v1901
    %2249 = vmatpush1.msra.mxu0 %v1900
    %2250 = vmatprep.subr.mxu0 %v1895
    %2251 = vmatpush1.msra.mxu0 %v1894
    %2252 = vmatprep.subr.mxu0 %v1889
    %2253 = vmatpush1.msra.mxu0 %v1888
    %2254 = vmatprep.subr.mxu0 %v1883
    %2255 = vmatpush1.msra.mxu0 %v1882
    %2256 = vmatprep.subr.mxu0 %v2069
    %2257 = vmatpush2.msra.mxu0 %v2068
    %2258 = vmatprep.subr.mxu0 %v2063
    %2259 = vmatpush2.msra.mxu0 %v2062
    %2260 = vmatprep.subr.mxu0 %v2057
    %2261 = vmatpush2.msra.mxu0 %v2056
    %2262 = vmatprep.subr.mxu0 %v2051
    %2263 = vmatpush2.msra.mxu0 %v2050
    %2264 = vmatprep.subr.mxu0 %v2045
    %2265 = vmatpush2.msra.mxu0 %v2044
    %2266 = vmatprep.subr.mxu0 %v2039
    %2267 = vmatpush2.msra.mxu0 %v2038
    %2268 = vmatprep.subr.mxu0 %v2033
    %2269 = vmatpush2.msra.mxu0 %v2032
    %2270 = vmatprep.subr.mxu0 %v2027
    %2271 = vmatpush2.msra.mxu0 %v2026
    %2272 = vmatprep.subr.mxu0 %v2021
    %2273 = vmatpush2.msra.mxu0 %v2020
    %2274 = vmatprep.subr.mxu0 %v2015
    %2275 = vmatpush2.msra.mxu0 %v2014
    %2276 = vmatprep.subr.mxu0 %v2009
    %2277 = vmatpush2.msra.mxu0 %v2008
    %2278 = vmatprep.subr.mxu0 %v2003
    %2279 = vmatpush2.msra.mxu0 %v2002
    %2280 = vmatprep.subr.mxu0 %v1997
    %2281 = vmatpush2.msra.mxu0 %v1996
    %2282 = vmatprep.subr.mxu0 %v1991
    %2283 = vmatpush2.msra.mxu0 %v1990
    %2284 = vmatprep.subr.mxu0 %v1985
    %2285 = vmatpush2.msra.mxu0 %v1984
    %2286 = vmatprep.subr.mxu0 %v1979
    %2287 = vmatpush2.msra.mxu0 %v1978
    %2288 = vmatprep.mubr.f32.mxu0 %v1192
    %2289 = vmatmul.mubr.f32.gmra.mxu0 %v1191
    %v2290 = vpop.f32.mrf.mxu0
    %v2291 = vadd.f32 0.0, %v2290
    %v2292 = vpop.f32.mrf.mxu0
    %v2293 = vadd.f32 0.0, %v2292
    %2294 = vmatprep.mubr.f32.mxu0 %v1194
    %2295 = vmatmul.mubr.f32.gmra.mxu0 %v1193
    %v2296 = vpop.f32.mrf.mxu0
    %v2297 = vadd.f32 0.0, %v2296
    %v2298 = vpop.f32.mrf.mxu0
    %v2299 = vadd.f32 0.0, %v2298
    %2300 = vdwg.mxu0
    %2301 = vmatprep.subr.mxu0 %v1681
    %2302 = vmatpush1.msra.mxu0 %v1680
    %2303 = vmatprep.subr.mxu0 %v1675
    %2304 = vmatpush1.msra.mxu0 %v1674
    %2305 = vmatprep.subr.mxu0 %v1669
    %2306 = vmatpush1.msra.mxu0 %v1668
    %2307 = vmatprep.subr.mxu0 %v1663
    %2308 = vmatpush1.msra.mxu0 %v1662
    %2309 = vmatprep.subr.mxu0 %v1657
    %2310 = vmatpush1.msra.mxu0 %v1656
    %2311 = vmatprep.subr.mxu0 %v1651
    %2312 = vmatpush1.msra.mxu0 %v1650
    %2313 = vmatprep.subr.mxu0 %v1645
    %2314 = vmatpush1.msra.mxu0 %v1644
    %2315 = vmatprep.subr.mxu0 %v1639
    %2316 = vmatpush1.msra.mxu0 %v1638
    %2317 = vmatprep.subr.mxu0 %v1633
    %2318 = vmatpush1.msra.mxu0 %v1632
    %2319 = vmatprep.subr.mxu0 %v1627
    %2320 = vmatpush1.msra.mxu0 %v1626
    %2321 = vmatprep.subr.mxu0 %v1621
    %2322 = vmatpush1.msra.mxu0 %v1620
    %2323 = vmatprep.subr.mxu0 %v1615
    %2324 = vmatpush1.msra.mxu0 %v1614
    %2325 = vmatprep.subr.mxu0 %v1609
    %2326 = vmatpush1.msra.mxu0 %v1608
    %2327 = vmatprep.subr.mxu0 %v1603
    %2328 = vmatpush1.msra.mxu0 %v1602
    %2329 = vmatprep.subr.mxu0 %v1597
    %2330 = vmatpush1.msra.mxu0 %v1596
    %2331 = vmatprep.subr.mxu0 %v1591
    %2332 = vmatpush1.msra.mxu0 %v1590
    %2333 = vmatprep.subr.mxu0 %v1777
    %2334 = vmatpush2.msra.mxu0 %v1776
    %2335 = vmatprep.subr.mxu0 %v1771
    %2336 = vmatpush2.msra.mxu0 %v1770
    %2337 = vmatprep.subr.mxu0 %v1765
    %2338 = vmatpush2.msra.mxu0 %v1764
    %2339 = vmatprep.subr.mxu0 %v1759
    %2340 = vmatpush2.msra.mxu0 %v1758
    %2341 = vmatprep.subr.mxu0 %v1753
    %2342 = vmatpush2.msra.mxu0 %v1752
    %2343 = vmatprep.subr.mxu0 %v1747
    %2344 = vmatpush2.msra.mxu0 %v1746
    %2345 = vmatprep.subr.mxu0 %v1741
    %2346 = vmatpush2.msra.mxu0 %v1740
    %2347 = vmatprep.subr.mxu0 %v1735
    %2348 = vmatpush2.msra.mxu0 %v1734
    %2349 = vmatprep.subr.mxu0 %v1729
    %2350 = vmatpush2.msra.mxu0 %v1728
    %2351 = vmatprep.subr.mxu0 %v1723
    %2352 = vmatpush2.msra.mxu0 %v1722
    %2353 = vmatprep.subr.mxu0 %v1717
    %2354 = vmatpush2.msra.mxu0 %v1716
    %2355 = vmatprep.subr.mxu0 %v1711
    %2356 = vmatpush2.msra.mxu0 %v1710
    %2357 = vmatprep.subr.mxu0 %v1705
    %2358 = vmatpush2.msra.mxu0 %v1704
    %2359 = vmatprep.subr.mxu0 %v1699
    %2360 = vmatpush2.msra.mxu0 %v1698
    %2361 = vmatprep.subr.mxu0 %v1693
    %2362 = vmatpush2.msra.mxu0 %v1692
    %2363 = vmatprep.subr.mxu0 %v1687
    %2364 = vmatpush2.msra.mxu0 %v1686
    %2365 = vmatprep.mubr.f32.mxu0 %v686
    %2366 = vmatmul.mubr.f32.gmra.mxu0 %v685
    %v2367 = vpop.f32.mrf.mxu0
    %v2368 = vadd.f32 %v2137, %v2367
    %v2369 = vpop.f32.mrf.mxu0
    %v2370 = vadd.f32 %v2139, %v2369
    %2371 = vmatprep.mubr.f32.mxu0 %v689
    %2372 = vmatmul.mubr.f32.gmra.mxu0 %v688
    %v2373 = vpop.f32.mrf.mxu0
    %v2374 = vadd.f32 %v2143, %v2373
    %v2375 = vpop.f32.mrf.mxu0
    %v2376 = vadd.f32 %v2145, %v2375
    %2377 = vdwg.mxu0
    %2378 = vmatprep.subr.mxu0 %v1873
    %2379 = vmatpush1.msra.mxu0 %v1872
    %2380 = vmatprep.subr.mxu0 %v1867
    %2381 = vmatpush1.msra.mxu0 %v1866
    %2382 = vmatprep.subr.mxu0 %v1861
    %2383 = vmatpush1.msra.mxu0 %v1860
    %2384 = vmatprep.subr.mxu0 %v1855
    %2385 = vmatpush1.msra.mxu0 %v1854
    %2386 = vmatprep.subr.mxu0 %v1849
    %2387 = vmatpush1.msra.mxu0 %v1848
    %2388 = vmatprep.subr.mxu0 %v1843
    %2389 = vmatpush1.msra.mxu0 %v1842
    %2390 = vmatprep.subr.mxu0 %v1837
    %2391 = vmatpush1.msra.mxu0 %v1836
    %2392 = vmatprep.subr.mxu0 %v1831
    %2393 = vmatpush1.msra.mxu0 %v1830
    %2394 = vmatprep.subr.mxu0 %v1825
    %2395 = vmatpush1.msra.mxu0 %v1824
    %2396 = vmatprep.subr.mxu0 %v1819
    %2397 = vmatpush1.msra.mxu0 %v1818
    %2398 = vmatprep.subr.mxu0 %v1813
    %2399 = vmatpush1.msra.mxu0 %v1812
    %2400 = vmatprep.subr.mxu0 %v1807
    %2401 = vmatpush1.msra.mxu0 %v1806
    %2402 = vmatprep.subr.mxu0 %v1801
    %2403 = vmatpush1.msra.mxu0 %v1800
    %2404 = vmatprep.subr.mxu0 %v1795
    %2405 = vmatpush1.msra.mxu0 %v1794
    %2406 = vmatprep.subr.mxu0 %v1789
    %2407 = vmatpush1.msra.mxu0 %v1788
    %2408 = vmatprep.subr.mxu0 %v1783
    %2409 = vmatpush1.msra.mxu0 %v1782
    %2410 = vmatprep.subr.mxu0 0.0
    %2411 = vmatpush2.msra.mxu0 0.0
    %2412 = vmatprep.subr.mxu0 0.0
    %2413 = vmatpush2.msra.mxu0 0.0
    %2414 = vmatprep.subr.mxu0 0.0
    %2415 = vmatpush2.msra.mxu0 0.0
    %2416 = vmatprep.subr.mxu0 0.0
    %2417 = vmatpush2.msra.mxu0 0.0
    %2418 = vmatprep.subr.mxu0 0.0
    %2419 = vmatpush2.msra.mxu0 0.0
    %2420 = vmatprep.subr.mxu0 0.0
    %2421 = vmatpush2.msra.mxu0 0.0
    %2422 = vmatprep.subr.mxu0 0.0
    %2423 = vmatpush2.msra.mxu0 0.0
    %2424 = vmatprep.subr.mxu0 0.0
    %2425 = vmatpush2.msra.mxu0 0.0
    %2426 = vmatprep.subr.mxu0 0.0
    %2427 = vmatpush2.msra.mxu0 0.0
    %2428 = vmatprep.subr.mxu0 0.0
    %2429 = vmatpush2.msra.mxu0 0.0
    %2430 = vmatprep.subr.mxu0 0.0
    %2431 = vmatpush2.msra.mxu0 0.0
    %2432 = vmatprep.subr.mxu0 0.0
    %2433 = vmatpush2.msra.mxu0 0.0
    %2434 = vmatprep.subr.mxu0 0.0
    %2435 = vmatpush2.msra.mxu0 0.0
    %2436 = vmatprep.subr.mxu0 0.0
    %2437 = vmatpush2.msra.mxu0 0.0
    %2438 = vmatprep.subr.mxu0 0.0
    %2439 = vmatpush2.msra.mxu0 0.0
    %2440 = vmatprep.subr.mxu0 0.0
    %2441 = vmatpush2.msra.mxu0 0.0
    %2442 = vmatprep.mubr.f32.mxu0 0.0
    %2443 = vmatmul.mubr.f32.gmra.mxu0 %v687
    %v2444 = vpop.f32.mrf.mxu0
    %v2445 = vadd.f32 %v2368, %v2444
    %v2446 = vpop.f32.mrf.mxu0
    %v2447 = vadd.f32 %v2370, %v2446
    %2448 = vmatprep.mubr.f32.mxu0 0.0
    %2449 = vmatmul.mubr.f32.gmra.mxu0 %v690
    %v2450 = vpop.f32.mrf.mxu0
    %v2451 = vadd.f32 %v2374, %v2450
    %v2452 = vpop.f32.mrf.mxu0
    %v2453 = vadd.f32 %v2376, %v2452
    %2454 = vdwg.mxu0
    %2455 = vmatprep.subr.mxu0 %v1683
    %2456 = vmatpush1.msra.mxu0 %v1682
    %2457 = vmatprep.subr.mxu0 %v1677
    %2458 = vmatpush1.msra.mxu0 %v1676
    %2459 = vmatprep.subr.mxu0 %v1671
    %2460 = vmatpush1.msra.mxu0 %v1670
    %2461 = vmatprep.subr.mxu0 %v1665
    %2462 = vmatpush1.msra.mxu0 %v1664
    %2463 = vmatprep.subr.mxu0 %v1659
    %2464 = vmatpush1.msra.mxu0 %v1658
    %2465 = vmatprep.subr.mxu0 %v1653
    %2466 = vmatpush1.msra.mxu0 %v1652
    %2467 = vmatprep.subr.mxu0 %v1647
    %2468 = vmatpush1.msra.mxu0 %v1646
    %2469 = vmatprep.subr.mxu0 %v1641
    %2470 = vmatpush1.msra.mxu0 %v1640
    %2471 = vmatprep.subr.mxu0 %v1635
    %2472 = vmatpush1.msra.mxu0 %v1634
    %2473 = vmatprep.subr.mxu0 %v1629
    %2474 = vmatpush1.msra.mxu0 %v1628
    %2475 = vmatprep.subr.mxu0 %v1623
    %2476 = vmatpush1.msra.mxu0 %v1622
    %2477 = vmatprep.subr.mxu0 %v1617
    %2478 = vmatpush1.msra.mxu0 %v1616
    %2479 = vmatprep.subr.mxu0 %v1611
    %2480 = vmatpush1.msra.mxu0 %v1610
    %2481 = vmatprep.subr.mxu0 %v1605
    %2482 = vmatpush1.msra.mxu0 %v1604
    %2483 = vmatprep.subr.mxu0 %v1599
    %2484 = vmatpush1.msra.mxu0 %v1598
    %2485 = vmatprep.subr.mxu0 %v1593
    %2486 = vmatpush1.msra.mxu0 %v1592
    %2487 = vmatprep.subr.mxu0 %v1779
    %2488 = vmatpush2.msra.mxu0 %v1778
    %2489 = vmatprep.subr.mxu0 %v1773
    %2490 = vmatpush2.msra.mxu0 %v1772
    %2491 = vmatprep.subr.mxu0 %v1767
    %2492 = vmatpush2.msra.mxu0 %v1766
    %2493 = vmatprep.subr.mxu0 %v1761
    %2494 = vmatpush2.msra.mxu0 %v1760
    %2495 = vmatprep.subr.mxu0 %v1755
    %2496 = vmatpush2.msra.mxu0 %v1754
    %2497 = vmatprep.subr.mxu0 %v1749
    %2498 = vmatpush2.msra.mxu0 %v1748
    %2499 = vmatprep.subr.mxu0 %v1743
    %2500 = vmatpush2.msra.mxu0 %v1742
    %2501 = vmatprep.subr.mxu0 %v1737
    %2502 = vmatpush2.msra.mxu0 %v1736
    %2503 = vmatprep.subr.mxu0 %v1731
    %2504 = vmatpush2.msra.mxu0 %v1730
    %2505 = vmatprep.subr.mxu0 %v1725
    %2506 = vmatpush2.msra.mxu0 %v1724
    %2507 = vmatprep.subr.mxu0 %v1719
    %2508 = vmatpush2.msra.mxu0 %v1718
    %2509 = vmatprep.subr.mxu0 %v1713
    %2510 = vmatpush2.msra.mxu0 %v1712
    %2511 = vmatprep.subr.mxu0 %v1707
    %2512 = vmatpush2.msra.mxu0 %v1706
    %2513 = vmatprep.subr.mxu0 %v1701
    %2514 = vmatpush2.msra.mxu0 %v1700
    %2515 = vmatprep.subr.mxu0 %v1695
    %2516 = vmatpush2.msra.mxu0 %v1694
    %2517 = vmatprep.subr.mxu0 %v1689
    %2518 = vmatpush2.msra.mxu0 %v1688
    %2519 = vmatprep.mubr.f32.mxu0 %v686
    %2520 = vmatmul.mubr.f32.gmra.mxu0 %v685
    %v2521 = vpop.f32.mrf.mxu0
    %v2522 = vadd.f32 %v2214, %v2521
    %v2523 = vpop.f32.mrf.mxu0
    %v2524 = vadd.f32 %v2216, %v2523
    %2525 = vmatprep.mubr.f32.mxu0 %v689
    %2526 = vmatmul.mubr.f32.gmra.mxu0 %v688
    %v2527 = vpop.f32.mrf.mxu0
    %v2528 = vadd.f32 %v2220, %v2527
    %v2529 = vpop.f32.mrf.mxu0
    %v2530 = vadd.f32 %v2222, %v2529
    %2531 = vdwg.mxu0
    %2532 = vmatprep.subr.mxu0 %v1875
    %2533 = vmatpush1.msra.mxu0 %v1874
    %2534 = vmatprep.subr.mxu0 %v1869
    %2535 = vmatpush1.msra.mxu0 %v1868
    %2536 = vmatprep.subr.mxu0 %v1863
    %2537 = vmatpush1.msra.mxu0 %v1862
    %2538 = vmatprep.subr.mxu0 %v1857
    %2539 = vmatpush1.msra.mxu0 %v1856
    %2540 = vmatprep.subr.mxu0 %v1851
    %2541 = vmatpush1.msra.mxu0 %v1850
    %2542 = vmatprep.subr.mxu0 %v1845
    %2543 = vmatpush1.msra.mxu0 %v1844
    %2544 = vmatprep.subr.mxu0 %v1839
    %2545 = vmatpush1.msra.mxu0 %v1838
    %2546 = vmatprep.subr.mxu0 %v1833
    %2547 = vmatpush1.msra.mxu0 %v1832
    %2548 = vmatprep.subr.mxu0 %v1827
    %2549 = vmatpush1.msra.mxu0 %v1826
    %2550 = vmatprep.subr.mxu0 %v1821
    %2551 = vmatpush1.msra.mxu0 %v1820
    %2552 = vmatprep.subr.mxu0 %v1815
    %2553 = vmatpush1.msra.mxu0 %v1814
    %2554 = vmatprep.subr.mxu0 %v1809
    %2555 = vmatpush1.msra.mxu0 %v1808
    %2556 = vmatprep.subr.mxu0 %v1803
    %2557 = vmatpush1.msra.mxu0 %v1802
    %2558 = vmatprep.subr.mxu0 %v1797
    %2559 = vmatpush1.msra.mxu0 %v1796
    %2560 = vmatprep.subr.mxu0 %v1791
    %2561 = vmatpush1.msra.mxu0 %v1790
    %2562 = vmatprep.subr.mxu0 %v1785
    %2563 = vmatpush1.msra.mxu0 %v1784
    %2564 = vmatprep.subr.mxu0 0.0
    %2565 = vmatpush2.msra.mxu0 0.0
    %2566 = vmatprep.subr.mxu0 0.0
    %2567 = vmatpush2.msra.mxu0 0.0
    %2568 = vmatprep.subr.mxu0 0.0
    %2569 = vmatpush2.msra.mxu0 0.0
    %2570 = vmatprep.subr.mxu0 0.0
    %2571 = vmatpush2.msra.mxu0 0.0
    %2572 = vmatprep.subr.mxu0 0.0
    %2573 = vmatpush2.msra.mxu0 0.0
    %2574 = vmatprep.subr.mxu0 0.0
    %2575 = vmatpush2.msra.mxu0 0.0
    %2576 = vmatprep.subr.mxu0 0.0
    %2577 = vmatpush2.msra.mxu0 0.0
    %2578 = vmatprep.subr.mxu0 0.0
    %2579 = vmatpush2.msra.mxu0 0.0
    %2580 = vmatprep.subr.mxu0 0.0
    %2581 = vmatpush2.msra.mxu0 0.0
    %2582 = vmatprep.subr.mxu0 0.0
    %2583 = vmatpush2.msra.mxu0 0.0
    %2584 = vmatprep.subr.mxu0 0.0
    %2585 = vmatpush2.msra.mxu0 0.0
    %2586 = vmatprep.subr.mxu0 0.0
    %2587 = vmatpush2.msra.mxu0 0.0
    %2588 = vmatprep.subr.mxu0 0.0
    %2589 = vmatpush2.msra.mxu0 0.0
    %2590 = vmatprep.subr.mxu0 0.0
    %2591 = vmatpush2.msra.mxu0 0.0
    %2592 = vmatprep.subr.mxu0 0.0
    %2593 = vmatpush2.msra.mxu0 0.0
    %2594 = vmatprep.subr.mxu0 0.0
    %2595 = vmatpush2.msra.mxu0 0.0
    %2596 = vmatprep.mubr.f32.mxu0 0.0
    %2597 = vmatmul.mubr.f32.gmra.mxu0 %v687
    %v2598 = vpop.f32.mrf.mxu0
    %v2599 = vadd.f32 %v2522, %v2598
    %v2600 = vpop.f32.mrf.mxu0
    %v2601 = vadd.f32 %v2524, %v2600
    %2602 = vmatprep.mubr.f32.mxu0 0.0
    %2603 = vmatmul.mubr.f32.gmra.mxu0 %v690
    %v2604 = vpop.f32.mrf.mxu0
    %v2605 = vadd.f32 %v2528, %v2604
    %v2606 = vpop.f32.mrf.mxu0
    %v2607 = vadd.f32 %v2530, %v2606
    %2608 = vdwg.mxu0
    %2609 = vmatprep.subr.mxu0 %v1685
    %2610 = vmatpush1.msra.mxu0 %v1684
    %2611 = vmatprep.subr.mxu0 %v1679
    %2612 = vmatpush1.msra.mxu0 %v1678
    %2613 = vmatprep.subr.mxu0 %v1673
    %2614 = vmatpush1.msra.mxu0 %v1672
    %2615 = vmatprep.subr.mxu0 %v1667
    %2616 = vmatpush1.msra.mxu0 %v1666
    %2617 = vmatprep.subr.mxu0 %v1661
    %2618 = vmatpush1.msra.mxu0 %v1660
    %2619 = vmatprep.subr.mxu0 %v1655
    %2620 = vmatpush1.msra.mxu0 %v1654
    %2621 = vmatprep.subr.mxu0 %v1649
    %2622 = vmatpush1.msra.mxu0 %v1648
    %2623 = vmatprep.subr.mxu0 %v1643
    %2624 = vmatpush1.msra.mxu0 %v1642
    %2625 = vmatprep.subr.mxu0 %v1637
    %2626 = vmatpush1.msra.mxu0 %v1636
    %2627 = vmatprep.subr.mxu0 %v1631
    %2628 = vmatpush1.msra.mxu0 %v1630
    %2629 = vmatprep.subr.mxu0 %v1625
    %2630 = vmatpush1.msra.mxu0 %v1624
    %2631 = vmatprep.subr.mxu0 %v1619
    %2632 = vmatpush1.msra.mxu0 %v1618
    %2633 = vmatprep.subr.mxu0 %v1613
    %2634 = vmatpush1.msra.mxu0 %v1612
    %2635 = vmatprep.subr.mxu0 %v1607
    %2636 = vmatpush1.msra.mxu0 %v1606
    %2637 = vmatprep.subr.mxu0 %v1601
    %2638 = vmatpush1.msra.mxu0 %v1600
    %2639 = vmatprep.subr.mxu0 %v1595
    %2640 = vmatpush1.msra.mxu0 %v1594
    %2641 = vmatprep.subr.mxu0 %v1781
    %2642 = vmatpush2.msra.mxu0 %v1780
    %2643 = vmatprep.subr.mxu0 %v1775
    %2644 = vmatpush2.msra.mxu0 %v1774
    %2645 = vmatprep.subr.mxu0 %v1769
    %2646 = vmatpush2.msra.mxu0 %v1768
    %2647 = vmatprep.subr.mxu0 %v1763
    %2648 = vmatpush2.msra.mxu0 %v1762
    %2649 = vmatprep.subr.mxu0 %v1757
    %2650 = vmatpush2.msra.mxu0 %v1756
    %2651 = vmatprep.subr.mxu0 %v1751
    %2652 = vmatpush2.msra.mxu0 %v1750
    %2653 = vmatprep.subr.mxu0 %v1745
    %2654 = vmatpush2.msra.mxu0 %v1744
    %2655 = vmatprep.subr.mxu0 %v1739
    %2656 = vmatpush2.msra.mxu0 %v1738
    %2657 = vmatprep.subr.mxu0 %v1733
    %2658 = vmatpush2.msra.mxu0 %v1732
    %2659 = vmatprep.subr.mxu0 %v1727
    %2660 = vmatpush2.msra.mxu0 %v1726
    %2661 = vmatprep.subr.mxu0 %v1721
    %2662 = vmatpush2.msra.mxu0 %v1720
    %2663 = vmatprep.subr.mxu0 %v1715
    %2664 = vmatpush2.msra.mxu0 %v1714
    %2665 = vmatprep.subr.mxu0 %v1709
    %2666 = vmatpush2.msra.mxu0 %v1708
    %2667 = vmatprep.subr.mxu0 %v1703
    %2668 = vmatpush2.msra.mxu0 %v1702
    %2669 = vmatprep.subr.mxu0 %v1697
    %2670 = vmatpush2.msra.mxu0 %v1696
    %2671 = vmatprep.subr.mxu0 %v1691
    %2672 = vmatpush2.msra.mxu0 %v1690
    %2673 = vmatprep.mubr.f32.mxu0 %v686
    %2674 = vmatmul.mubr.f32.gmra.mxu0 %v685
    %v2675 = vpop.f32.mrf.mxu0
    %v2676 = vadd.f32 %v2291, %v2675
    %v2677 = vpop.f32.mrf.mxu0
    %v2678 = vadd.f32 %v2293, %v2677
    %2679 = vmatprep.mubr.f32.mxu0 %v689
    %2680 = vmatmul.mubr.f32.gmra.mxu0 %v688
    %v2681 = vpop.f32.mrf.mxu0
    %v2682 = vadd.f32 %v2297, %v2681
    %v2683 = vpop.f32.mrf.mxu0
    %v2684 = vadd.f32 %v2299, %v2683
    %2685 = vdwg.mxu0
    %2686 = vmatprep.subr.mxu0 %v1877
    %2687 = vmatpush1.msra.mxu0 %v1876
    %2688 = vmatprep.subr.mxu0 %v1871
    %2689 = vmatpush1.msra.mxu0 %v1870
    %2690 = vmatprep.subr.mxu0 %v1865
    %2691 = vmatpush1.msra.mxu0 %v1864
    %2692 = vmatprep.subr.mxu0 %v1859
    %2693 = vmatpush1.msra.mxu0 %v1858
    %2694 = vmatprep.subr.mxu0 %v1853
    %2695 = vmatpush1.msra.mxu0 %v1852
    %2696 = vmatprep.subr.mxu0 %v1847
    %2697 = vmatpush1.msra.mxu0 %v1846
    %2698 = vmatprep.subr.mxu0 %v1841
    %2699 = vmatpush1.msra.mxu0 %v1840
    %2700 = vmatprep.subr.mxu0 %v1835
    %2701 = vmatpush1.msra.mxu0 %v1834
    %2702 = vmatprep.subr.mxu0 %v1829
    %2703 = vmatpush1.msra.mxu0 %v1828
    %2704 = vmatprep.subr.mxu0 %v1823
    %2705 = vmatpush1.msra.mxu0 %v1822
    %2706 = vmatprep.subr.mxu0 %v1817
    %2707 = vmatpush1.msra.mxu0 %v1816
    %2708 = vmatprep.subr.mxu0 %v1811
    %2709 = vmatpush1.msra.mxu0 %v1810
    %2710 = vmatprep.subr.mxu0 %v1805
    %2711 = vmatpush1.msra.mxu0 %v1804
    %2712 = vmatprep.subr.mxu0 %v1799
    %2713 = vmatpush1.msra.mxu0 %v1798
    %2714 = vmatprep.subr.mxu0 %v1793
    %2715 = vmatpush1.msra.mxu0 %v1792
    %2716 = vmatprep.subr.mxu0 %v1787
    %2717 = vmatpush1.msra.mxu0 %v1786
    %2718 = vmatprep.subr.mxu0 0.0
    %2719 = vmatpush2.msra.mxu0 0.0
    %2720 = vmatprep.subr.mxu0 0.0
    %2721 = vmatpush2.msra.mxu0 0.0
    %2722 = vmatprep.subr.mxu0 0.0
    %2723 = vmatpush2.msra.mxu0 0.0
    %2724 = vmatprep.subr.mxu0 0.0
    %2725 = vmatpush2.msra.mxu0 0.0
    %2726 = vmatprep.subr.mxu0 0.0
    %2727 = vmatpush2.msra.mxu0 0.0
    %2728 = vmatprep.subr.mxu0 0.0
    %2729 = vmatpush2.msra.mxu0 0.0
    %2730 = vmatprep.subr.mxu0 0.0
    %2731 = vmatpush2.msra.mxu0 0.0
    %2732 = vmatprep.subr.mxu0 0.0
    %2733 = vmatpush2.msra.mxu0 0.0
    %2734 = vmatprep.subr.mxu0 0.0
    %2735 = vmatpush2.msra.mxu0 0.0
    %2736 = vmatprep.subr.mxu0 0.0
    %2737 = vmatpush2.msra.mxu0 0.0
    %2738 = vmatprep.subr.mxu0 0.0
    %2739 = vmatpush2.msra.mxu0 0.0
    %2740 = vmatprep.subr.mxu0 0.0
    %2741 = vmatpush2.msra.mxu0 0.0
    %2742 = vmatprep.subr.mxu0 0.0
    %2743 = vmatpush2.msra.mxu0 0.0
    %2744 = vmatprep.subr.mxu0 0.0
    %2745 = vmatpush2.msra.mxu0 0.0
    %2746 = vmatprep.subr.mxu0 0.0
    %2747 = vmatpush2.msra.mxu0 0.0
    %2748 = vmatprep.subr.mxu0 0.0
    %2749 = vmatpush2.msra.mxu0 0.0
    %2750 = vmatprep.mubr.f32.mxu0 0.0
    %2751 = vmatmul.mubr.f32.gmra.mxu0 %v687
    %v2752 = vpop.f32.mrf.mxu0
    %v2753 = vadd.f32 %v2676, %v2752
    %v2754 = vpop.f32.mrf.mxu0
    %v2755 = vadd.f32 %v2678, %v2754
    %2756 = vmatprep.mubr.f32.mxu0 0.0
    %2757 = vmatmul.mubr.f32.gmra.mxu0 %v690
    %v2758 = vpop.f32.mrf.mxu0
    %v2759 = vadd.f32 %v2682, %v2758
    %v2760 = vpop.f32.mrf.mxu0
    %v2761 = vadd.f32 %v2684, %v2760
    %2762 = vdwg.mxu0
    %v2763 = vld [vmem:[%s15] sm:$0xff]
    %v2764 = vld [vmem:[%s15 + $0x8] sm:$0xff]
    %v2765 = vld [vmem:[%s15 + $0x10] sm:$0xff]
    %v2766 = vld [vmem:[%s15 + $0x18] sm:$0xff]
    %v2767 = vld [vmem:[%s15 + $0x20] sm:$0xff]
    %v2768 = vld [vmem:[%s15 + $0x28] sm:$0xff]
    %v2769 = vld [vmem:[%s15 + $0x30] sm:$0xff]
    %v2770 = vld [vmem:[%s15 + $0x38] sm:$0xff]
    %v2771 = vld [vmem:[%s15 + $0x40] sm:$0xff]
    %v2772 = vld [vmem:[%s15 + $0x48] sm:$0xff]
    %v2773 = vld [vmem:[%s15 + $0x50] sm:$0xff]
    %v2774 = vld [vmem:[%s15 + $0x58] sm:$0xff]
    %v2775 = vld [vmem:[%s15 + $0x60] sm:$0xff]
    %v2776 = vld [vmem:[%s15 + $0x68] sm:$0xff]
    %v2777 = vld [vmem:[%s15 + $0x70] sm:$0xff]
    %v2778 = vld [vmem:[%s15 + $0x78] sm:$0xff]
    %v2779 = vld [vmem:[%s15 + $0x80] sm:$0xff]
    %v2780 = vld [vmem:[%s15 + $0x88] sm:$0xff]
    %v2781 = vld [vmem:[%s15 + $0x90] sm:$0xff]
    %v2782 = vld [vmem:[%s15 + $0x98] sm:$0xff]
    %v2783 = vld [vmem:[%s15 + $0xa0] sm:$0xff]
    %v2784 = vld [vmem:[%s15 + $0xa8] sm:$0xff]
    %v2785 = vld [vmem:[%s15 + $0xb0] sm:$0xff]
    %v2786 = vld [vmem:[%s15 + $0xb8] sm:$0xff]
    %v2787 = vld [vmem:[%s15 + $0xc0] sm:$0xff]
    %v2788 = vld [vmem:[%s15 + $0xc8] sm:$0xff]
    %v2789 = vld [vmem:[%s15 + $0xd0] sm:$0xff]
    %v2790 = vld [vmem:[%s15 + $0xd8] sm:$0xff]
    %v2791 = vld [vmem:[%s15 + $0xe0] sm:$0xff]
    %v2792 = vld [vmem:[%s15 + $0xe8] sm:$0xff]
    %v2793 = vld [vmem:[%s15 + $0xf0] sm:$0xff]
    %v2794 = vld [vmem:[%s15 + $0xf8] sm:$0xff]
    %v2795 = vld [vmem:[%s15 + $0x100] sm:$0xff]
    %v2796 = vld [vmem:[%s15 + $0x108] sm:$0xff]
    %v2797 = vld [vmem:[%s15 + $0x110] sm:$0xff]
    %v2798 = vld [vmem:[%s15 + $0x118] sm:$0xff]
    %v2799 = vld [vmem:[%s15 + $0x120] sm:$0xff]
    %v2800 = vld [vmem:[%s15 + $0x128] sm:$0xff]
    %v2801 = vld [vmem:[%s15 + $0x130] sm:$0xff]
    %v2802 = vld [vmem:[%s15 + $0x138] sm:$0xff]
    %v2803 = vld [vmem:[%s15 + $0x140] sm:$0xff]
    %v2804 = vld [vmem:[%s15 + $0x148] sm:$0xff]
    %v2805 = vld [vmem:[%s15 + $0x150] sm:$0xff]
    %v2806 = vld [vmem:[%s15 + $0x158] sm:$0xff]
    %v2807 = vld [vmem:[%s15 + $0x160] sm:$0xff]
    %v2808 = vld [vmem:[%s15 + $0x168] sm:$0xff]
    %v2809 = vld [vmem:[%s15 + $0x170] sm:$0xff]
    %v2810 = vld [vmem:[%s15 + $0x178] sm:$0xff]
    %v2811 = vld [vmem:[%s15 + $0x180] sm:$0xff]
    %v2812 = vld [vmem:[%s15 + $0x188] sm:$0xff]
    %v2813 = vld [vmem:[%s15 + $0x190] sm:$0xff]
    %v2814 = vld [vmem:[%s15 + $0x198] sm:$0xff]
    %v2815 = vld [vmem:[%s15 + $0x1a0] sm:$0xff]
    %v2816 = vld [vmem:[%s15 + $0x1a8] sm:$0xff]
    %v2817 = vld [vmem:[%s15 + $0x1b0] sm:$0xff]
    %v2818 = vld [vmem:[%s15 + $0x1b8] sm:$0xff]
    %v2819 = vld [vmem:[%s15 + $0x1c0] sm:$0xff]
    %v2820 = vld [vmem:[%s15 + $0x1c8] sm:$0xff]
    %v2821 = vld [vmem:[%s15 + $0x1d0] sm:$0xff]
    %v2822 = vld [vmem:[%s15 + $0x1d8] sm:$0xff]
    %v2823 = vld [vmem:[%s15 + $0x1e0] sm:$0xff]
    %v2824 = vld [vmem:[%s15 + $0x1e8] sm:$0xff]
    %v2825 = vld [vmem:[%s15 + $0x1f0] sm:$0xff]
    %v2826 = vld [vmem:[%s15 + $0x1f8] sm:$0xff]
    %v2827 = vld [vmem:[%s15 + $0x200] sm:$0xff]
    %v2828 = vld [vmem:[%s15 + $0x208] sm:$0xff]
    %v2829 = vld [vmem:[%s15 + $0x210] sm:$0xff]
    %v2830 = vld [vmem:[%s15 + $0x218] sm:$0xff]
    %v2831 = vld [vmem:[%s15 + $0x220] sm:$0xff]
    %v2832 = vld [vmem:[%s15 + $0x228] sm:$0xff]
    %v2833 = vld [vmem:[%s15 + $0x230] sm:$0xff]
    %v2834 = vld [vmem:[%s15 + $0x238] sm:$0xff]
    %v2835 = vld [vmem:[%s15 + $0x240] sm:$0xff]
    %v2836 = vld [vmem:[%s15 + $0x248] sm:$0xff]
    %v2837 = vld [vmem:[%s15 + $0x250] sm:$0xff]
    %v2838 = vld [vmem:[%s15 + $0x258] sm:$0xff]
    %v2839 = vld [vmem:[%s15 + $0x260] sm:$0xff]
    %v2840 = vld [vmem:[%s15 + $0x268] sm:$0xff]
    %v2841 = vld [vmem:[%s15 + $0x270] sm:$0xff]
    %v2842 = vld [vmem:[%s15 + $0x278] sm:$0xff]
    %v2843 = vld [vmem:[%s15 + $0x280] sm:$0xff]
    %v2844 = vld [vmem:[%s15 + $0x288] sm:$0xff]
    %v2845 = vld [vmem:[%s15 + $0x290] sm:$0xff]
    %v2846 = vld [vmem:[%s15 + $0x298] sm:$0xff]
    %v2847 = vld [vmem:[%s15 + $0x2a0] sm:$0xff]
    %v2848 = vld [vmem:[%s15 + $0x2a8] sm:$0xff]
    %v2849 = vld [vmem:[%s15 + $0x2b0] sm:$0xff]
    %v2850 = vld [vmem:[%s15 + $0x2b8] sm:$0xff]
    %v2851 = vld [vmem:[%s15 + $0x2c0] sm:$0xff]
    %v2852 = vld [vmem:[%s15 + $0x2c8] sm:$0xff]
    %v2853 = vld [vmem:[%s15 + $0x2d0] sm:$0xff]
    %v2854 = vld [vmem:[%s15 + $0x2d8] sm:$0xff]
    %v2855 = vld [vmem:[%s15 + $0x2e0] sm:$0xff]
    %v2856 = vld [vmem:[%s15 + $0x2e8] sm:$0xff]
    %v2857 = vld [vmem:[%s15 + $0x2f0] sm:$0xff]
    %v2858 = vld [vmem:[%s15 + $0x2f8] sm:$0xff]
    %v2859 = vld [vmem:[%s15 + $0x300] sm:$0xff]
    %v2860 = vld [vmem:[%s15 + $0x308] sm:$0xff]
    %v2861 = vld [vmem:[%s15 + $0x310] sm:$0xff]
    %v2862 = vld [vmem:[%s15 + $0x318] sm:$0xff]
    %v2863 = vld [vmem:[%s15 + $0x320] sm:$0xff]
    %v2864 = vld [vmem:[%s15 + $0x328] sm:$0xff]
    %v2865 = vld [vmem:[%s15 + $0x330] sm:$0xff]
    %v2866 = vld [vmem:[%s15 + $0x338] sm:$0xff]
    %v2867 = vld [vmem:[%s15 + $0x340] sm:$0xff]
    %v2868 = vld [vmem:[%s15 + $0x348] sm:$0xff]
    %v2869 = vld [vmem:[%s15 + $0x350] sm:$0xff]
    %v2870 = vld [vmem:[%s15 + $0x358] sm:$0xff]
    %v2871 = vld [vmem:[%s15 + $0x360] sm:$0xff]
    %v2872 = vld [vmem:[%s15 + $0x368] sm:$0xff]
    %v2873 = vld [vmem:[%s15 + $0x370] sm:$0xff]
    %v2874 = vld [vmem:[%s15 + $0x378] sm:$0xff]
    %v2875 = vld [vmem:[%s15 + $0x380] sm:$0xff]
    %v2876 = vld [vmem:[%s15 + $0x388] sm:$0xff]
    %v2877 = vld [vmem:[%s15 + $0x390] sm:$0xff]
    %v2878 = vld [vmem:[%s15 + $0x398] sm:$0xff]
    %v2879 = vld [vmem:[%s15 + $0x3a0] sm:$0xff]
    %v2880 = vld [vmem:[%s15 + $0x3a8] sm:$0xff]
    %v2881 = vld [vmem:[%s15 + $0x3b0] sm:$0xff]
    %v2882 = vld [vmem:[%s15 + $0x3b8] sm:$0xff]
    %v2883 = vld [vmem:[%s15 + $0x3c0] sm:$0xff]
    %v2884 = vld [vmem:[%s15 + $0x3c8] sm:$0xff]
    %v2885 = vld [vmem:[%s15 + $0x3d0] sm:$0xff]
    %v2886 = vld [vmem:[%s15 + $0x3d8] sm:$0xff]
    %v2887 = vld [vmem:[%s15 + $0x3e0] sm:$0xff]
    %v2888 = vld [vmem:[%s15 + $0x3e8] sm:$0xff]
    %v2889 = vld [vmem:[%s15 + $0x3f0] sm:$0xff]
    %v2890 = vld [vmem:[%s15 + $0x3f8] sm:$0xff]
    %v2891 = vld [vmem:[%s15 + $0x400] sm:$0xff]
    %v2892 = vld [vmem:[%s15 + $0x408] sm:$0xff]
    %v2893 = vld [vmem:[%s15 + $0x410] sm:$0xff]
    %v2894 = vld [vmem:[%s15 + $0x418] sm:$0xff]
    %v2895 = vld [vmem:[%s15 + $0x420] sm:$0xff]
    %v2896 = vld [vmem:[%s15 + $0x428] sm:$0xff]
    %v2897 = vld [vmem:[%s15 + $0x430] sm:$0xff]
    %v2898 = vld [vmem:[%s15 + $0x438] sm:$0xff]
    %v2899 = vld [vmem:[%s15 + $0x440] sm:$0xff]
    %v2900 = vld [vmem:[%s15 + $0x448] sm:$0xff]
    %v2901 = vld [vmem:[%s15 + $0x450] sm:$0xff]
    %v2902 = vld [vmem:[%s15 + $0x458] sm:$0xff]
    %v2903 = vld [vmem:[%s15 + $0x460] sm:$0xff]
    %v2904 = vld [vmem:[%s15 + $0x468] sm:$0xff]
    %v2905 = vld [vmem:[%s15 + $0x470] sm:$0xff]
    %v2906 = vld [vmem:[%s15 + $0x478] sm:$0xff]
    %v2907 = vld [vmem:[%s15 + $0x480] sm:$0xff]
    %v2908 = vld [vmem:[%s15 + $0x488] sm:$0xff]
    %v2909 = vld [vmem:[%s15 + $0x490] sm:$0xff]
    %v2910 = vld [vmem:[%s15 + $0x498] sm:$0xff]
    %v2911 = vld [vmem:[%s15 + $0x4a0] sm:$0xff]
    %v2912 = vld [vmem:[%s15 + $0x4a8] sm:$0xff]
    %v2913 = vld [vmem:[%s15 + $0x4b0] sm:$0xff]
    %v2914 = vld [vmem:[%s15 + $0x4b8] sm:$0xff]
    %v2915 = vld [vmem:[%s15 + $0x4c0] sm:$0xff]
    %v2916 = vld [vmem:[%s15 + $0x4c8] sm:$0xff]
    %v2917 = vld [vmem:[%s15 + $0x4d0] sm:$0xff]
    %v2918 = vld [vmem:[%s15 + $0x4d8] sm:$0xff]
    %v2919 = vld [vmem:[%s15 + $0x4e0] sm:$0xff]
    %v2920 = vld [vmem:[%s15 + $0x4e8] sm:$0xff]
    %v2921 = vld [vmem:[%s15 + $0x4f0] sm:$0xff]
    %v2922 = vld [vmem:[%s15 + $0x4f8] sm:$0xff]
    %v2923 = vld [vmem:[%s15 + $0x500] sm:$0xff]
    %v2924 = vld [vmem:[%s15 + $0x508] sm:$0xff]
    %v2925 = vld [vmem:[%s15 + $0x510] sm:$0xff]
    %v2926 = vld [vmem:[%s15 + $0x518] sm:$0xff]
    %v2927 = vld [vmem:[%s15 + $0x520] sm:$0xff]
    %v2928 = vld [vmem:[%s15 + $0x528] sm:$0xff]
    %v2929 = vld [vmem:[%s15 + $0x530] sm:$0xff]
    %v2930 = vld [vmem:[%s15 + $0x538] sm:$0xff]
    %v2931 = vld [vmem:[%s15 + $0x540] sm:$0xff]
    %v2932 = vld [vmem:[%s15 + $0x548] sm:$0xff]
    %v2933 = vld [vmem:[%s15 + $0x550] sm:$0xff]
    %v2934 = vld [vmem:[%s15 + $0x558] sm:$0xff]
    %v2935 = vld [vmem:[%s15 + $0x560] sm:$0xff]
    %v2936 = vld [vmem:[%s15 + $0x568] sm:$0xff]
    %v2937 = vld [vmem:[%s15 + $0x570] sm:$0xff]
    %v2938 = vld [vmem:[%s15 + $0x578] sm:$0xff]
    %v2939 = vld [vmem:[%s15 + $0x580] sm:$0xff]
    %v2940 = vld [vmem:[%s15 + $0x588] sm:$0xff]
    %v2941 = vld [vmem:[%s15 + $0x590] sm:$0xff]
    %v2942 = vld [vmem:[%s15 + $0x598] sm:$0xff]
    %v2943 = vld [vmem:[%s15 + $0x5a0] sm:$0xff]
    %v2944 = vld [vmem:[%s15 + $0x5a8] sm:$0xff]
    %v2945 = vld [vmem:[%s15 + $0x5b0] sm:$0xff]
    %v2946 = vld [vmem:[%s15 + $0x5b8] sm:$0xff]
    %v2947 = vld [vmem:[%s15 + $0x5c0] sm:$0xff]
    %v2948 = vld [vmem:[%s15 + $0x5c8] sm:$0xff]
    %v2949 = vld [vmem:[%s15 + $0x5d0] sm:$0xff]
    %v2950 = vld [vmem:[%s15 + $0x5d8] sm:$0xff]
    %v2951 = vld [vmem:[%s15 + $0x5e0] sm:$0xff]
    %v2952 = vld [vmem:[%s15 + $0x5e8] sm:$0xff]
    %v2953 = vld [vmem:[%s15 + $0x5f0] sm:$0xff]
    %v2954 = vld [vmem:[%s15 + $0x5f8] sm:$0xff]
    %2955 = vmatprep.subr.mxu0 %v2854
    %2956 = vmatpush1.msra.mxu0 %v2853
    %2957 = vmatprep.subr.mxu0 %v2848
    %2958 = vmatpush1.msra.mxu0 %v2847
    %2959 = vmatprep.subr.mxu0 %v2842
    %2960 = vmatpush1.msra.mxu0 %v2841
    %2961 = vmatprep.subr.mxu0 %v2836
    %2962 = vmatpush1.msra.mxu0 %v2835
    %2963 = vmatprep.subr.mxu0 %v2830
    %2964 = vmatpush1.msra.mxu0 %v2829
    %2965 = vmatprep.subr.mxu0 %v2824
    %2966 = vmatpush1.msra.mxu0 %v2823
    %2967 = vmatprep.subr.mxu0 %v2818
    %2968 = vmatpush1.msra.mxu0 %v2817
    %2969 = vmatprep.subr.mxu0 %v2812
    %2970 = vmatpush1.msra.mxu0 %v2811
    %2971 = vmatprep.subr.mxu0 %v2806
    %2972 = vmatpush1.msra.mxu0 %v2805
    %2973 = vmatprep.subr.mxu0 %v2800
    %2974 = vmatpush1.msra.mxu0 %v2799
    %2975 = vmatprep.subr.mxu0 %v2794
    %2976 = vmatpush1.msra.mxu0 %v2793
    %2977 = vmatprep.subr.mxu0 %v2788
    %2978 = vmatpush1.msra.mxu0 %v2787
    %2979 = vmatprep.subr.mxu0 %v2782
    %2980 = vmatpush1.msra.mxu0 %v2781
    %2981 = vmatprep.subr.mxu0 %v2776
    %2982 = vmatpush1.msra.mxu0 %v2775
    %2983 = vmatprep.subr.mxu0 %v2770
    %2984 = vmatpush1.msra.mxu0 %v2769
    %2985 = vmatprep.subr.mxu0 %v2764
    %2986 = vmatpush1.msra.mxu0 %v2763
    %2987 = vmatprep.subr.mxu0 %v2950
    %2988 = vmatpush2.msra.mxu0 %v2949
    %2989 = vmatprep.subr.mxu0 %v2944
    %2990 = vmatpush2.msra.mxu0 %v2943
    %2991 = vmatprep.subr.mxu0 %v2938
    %2992 = vmatpush2.msra.mxu0 %v2937
    %2993 = vmatprep.subr.mxu0 %v2932
    %2994 = vmatpush2.msra.mxu0 %v2931
    %2995 = vmatprep.subr.mxu0 %v2926
    %2996 = vmatpush2.msra.mxu0 %v2925
    %2997 = vmatprep.subr.mxu0 %v2920
    %2998 = vmatpush2.msra.mxu0 %v2919
    %2999 = vmatprep.subr.mxu0 %v2914
    %3000 = vmatpush2.msra.mxu0 %v2913
    %3001 = vmatprep.subr.mxu0 %v2908
    %3002 = vmatpush2.msra.mxu0 %v2907
    %3003 = vmatprep.subr.mxu0 %v2902
    %3004 = vmatpush2.msra.mxu0 %v2901
    %3005 = vmatprep.subr.mxu0 %v2896
    %3006 = vmatpush2.msra.mxu0 %v2895
    %3007 = vmatprep.subr.mxu0 %v2890
    %3008 = vmatpush2.msra.mxu0 %v2889
    %3009 = vmatprep.subr.mxu0 %v2884
    %3010 = vmatpush2.msra.mxu0 %v2883
    %3011 = vmatprep.subr.mxu0 %v2878
    %3012 = vmatpush2.msra.mxu0 %v2877
    %3013 = vmatprep.subr.mxu0 %v2872
    %3014 = vmatpush2.msra.mxu0 %v2871
    %3015 = vmatprep.subr.mxu0 %v2866
    %3016 = vmatpush2.msra.mxu0 %v2865
    %3017 = vmatprep.subr.mxu0 %v2860
    %3018 = vmatpush2.msra.mxu0 %v2859
    %3019 = vmatprep.mubr.f32.mxu0 %v1587
    %3020 = vmatmul.mubr.f32.gmra.mxu0 %v1586
    %v3021 = vpop.f32.mrf.mxu0
    %v3022 = vadd.f32 0.0, %v3021
    %v3023 = vpop.f32.mrf.mxu0
    %v3024 = vadd.f32 0.0, %v3023
    %3025 = vmatprep.mubr.f32.mxu0 %v1589
    %3026 = vmatmul.mubr.f32.gmra.mxu0 %v1588
    %v3027 = vpop.f32.mrf.mxu0
    %v3028 = vadd.f32 0.0, %v3027
    %v3029 = vpop.f32.mrf.mxu0
    %v3030 = vadd.f32 0.0, %v3029
    %3031 = vdwg.mxu0
    %3032 = vmatprep.subr.mxu0 %v2856
    %3033 = vmatpush1.msra.mxu0 %v2855
    %3034 = vmatprep.subr.mxu0 %v2850
    %3035 = vmatpush1.msra.mxu0 %v2849
    %3036 = vmatprep.subr.mxu0 %v2844
    %3037 = vmatpush1.msra.mxu0 %v2843
    %3038 = vmatprep.subr.mxu0 %v2838
    %3039 = vmatpush1.msra.mxu0 %v2837
    %3040 = vmatprep.subr.mxu0 %v2832
    %3041 = vmatpush1.msra.mxu0 %v2831
    %3042 = vmatprep.subr.mxu0 %v2826
    %3043 = vmatpush1.msra.mxu0 %v2825
    %3044 = vmatprep.subr.mxu0 %v2820
    %3045 = vmatpush1.msra.mxu0 %v2819
    %3046 = vmatprep.subr.mxu0 %v2814
    %3047 = vmatpush1.msra.mxu0 %v2813
    %3048 = vmatprep.subr.mxu0 %v2808
    %3049 = vmatpush1.msra.mxu0 %v2807
    %3050 = vmatprep.subr.mxu0 %v2802
    %3051 = vmatpush1.msra.mxu0 %v2801
    %3052 = vmatprep.subr.mxu0 %v2796
    %3053 = vmatpush1.msra.mxu0 %v2795
    %3054 = vmatprep.subr.mxu0 %v2790
    %3055 = vmatpush1.msra.mxu0 %v2789
    %3056 = vmatprep.subr.mxu0 %v2784
    %3057 = vmatpush1.msra.mxu0 %v2783
    %3058 = vmatprep.subr.mxu0 %v2778
    %3059 = vmatpush1.msra.mxu0 %v2777
    %3060 = vmatprep.subr.mxu0 %v2772
    %3061 = vmatpush1.msra.mxu0 %v2771
    %3062 = vmatprep.subr.mxu0 %v2766
    %3063 = vmatpush1.msra.mxu0 %v2765
    %3064 = vmatprep.subr.mxu0 %v2952
    %3065 = vmatpush2.msra.mxu0 %v2951
    %3066 = vmatprep.subr.mxu0 %v2946
    %3067 = vmatpush2.msra.mxu0 %v2945
    %3068 = vmatprep.subr.mxu0 %v2940
    %3069 = vmatpush2.msra.mxu0 %v2939
    %3070 = vmatprep.subr.mxu0 %v2934
    %3071 = vmatpush2.msra.mxu0 %v2933
    %3072 = vmatprep.subr.mxu0 %v2928
    %3073 = vmatpush2.msra.mxu0 %v2927
    %3074 = vmatprep.subr.mxu0 %v2922
    %3075 = vmatpush2.msra.mxu0 %v2921
    %3076 = vmatprep.subr.mxu0 %v2916
    %3077 = vmatpush2.msra.mxu0 %v2915
    %3078 = vmatprep.subr.mxu0 %v2910
    %3079 = vmatpush2.msra.mxu0 %v2909
    %3080 = vmatprep.subr.mxu0 %v2904
    %3081 = vmatpush2.msra.mxu0 %v2903
    %3082 = vmatprep.subr.mxu0 %v2898
    %3083 = vmatpush2.msra.mxu0 %v2897
    %3084 = vmatprep.subr.mxu0 %v2892
    %3085 = vmatpush2.msra.mxu0 %v2891
    %3086 = vmatprep.subr.mxu0 %v2886
    %3087 = vmatpush2.msra.mxu0 %v2885
    %3088 = vmatprep.subr.mxu0 %v2880
    %3089 = vmatpush2.msra.mxu0 %v2879
    %3090 = vmatprep.subr.mxu0 %v2874
    %3091 = vmatpush2.msra.mxu0 %v2873
    %3092 = vmatprep.subr.mxu0 %v2868
    %3093 = vmatpush2.msra.mxu0 %v2867
    %3094 = vmatprep.subr.mxu0 %v2862
    %3095 = vmatpush2.msra.mxu0 %v2861
    %3096 = vmatprep.mubr.f32.mxu0 %v1587
    %3097 = vmatmul.mubr.f32.gmra.mxu0 %v1586
    %v3098 = vpop.f32.mrf.mxu0
    %v3099 = vadd.f32 0.0, %v3098
    %v3100 = vpop.f32.mrf.mxu0
    %v3101 = vadd.f32 0.0, %v3100
    %3102 = vmatprep.mubr.f32.mxu0 %v1589
    %3103 = vmatmul.mubr.f32.gmra.mxu0 %v1588
    %v3104 = vpop.f32.mrf.mxu0
    %v3105 = vadd.f32 0.0, %v3104
    %v3106 = vpop.f32.mrf.mxu0
    %v3107 = vadd.f32 0.0, %v3106
    %3108 = vdwg.mxu0
    %3109 = vmatprep.subr.mxu0 %v2858
    %3110 = vmatpush1.msra.mxu0 %v2857
    %3111 = vmatprep.subr.mxu0 %v2852
    %3112 = vmatpush1.msra.mxu0 %v2851
    %3113 = vmatprep.subr.mxu0 %v2846
    %3114 = vmatpush1.msra.mxu0 %v2845
    %3115 = vmatprep.subr.mxu0 %v2840
    %3116 = vmatpush1.msra.mxu0 %v2839
    %3117 = vmatprep.subr.mxu0 %v2834
    %3118 = vmatpush1.msra.mxu0 %v2833
    %3119 = vmatprep.subr.mxu0 %v2828
    %3120 = vmatpush1.msra.mxu0 %v2827
    %3121 = vmatprep.subr.mxu0 %v2822
    %3122 = vmatpush1.msra.mxu0 %v2821
    %3123 = vmatprep.subr.mxu0 %v2816
    %3124 = vmatpush1.msra.mxu0 %v2815
    %3125 = vmatprep.subr.mxu0 %v2810
    %3126 = vmatpush1.msra.mxu0 %v2809
    %3127 = vmatprep.subr.mxu0 %v2804
    %3128 = vmatpush1.msra.mxu0 %v2803
    %3129 = vmatprep.subr.mxu0 %v2798
    %3130 = vmatpush1.msra.mxu0 %v2797
    %3131 = vmatprep.subr.mxu0 %v2792
    %3132 = vmatpush1.msra.mxu0 %v2791
    %3133 = vmatprep.subr.mxu0 %v2786
    %3134 = vmatpush1.msra.mxu0 %v2785
    %3135 = vmatprep.subr.mxu0 %v2780
    %3136 = vmatpush1.msra.mxu0 %v2779
    %3137 = vmatprep.subr.mxu0 %v2774
    %3138 = vmatpush1.msra.mxu0 %v2773
    %3139 = vmatprep.subr.mxu0 %v2768
    %3140 = vmatpush1.msra.mxu0 %v2767
    %3141 = vmatprep.subr.mxu0 %v2954
    %3142 = vmatpush2.msra.mxu0 %v2953
    %3143 = vmatprep.subr.mxu0 %v2948
    %3144 = vmatpush2.msra.mxu0 %v2947
    %3145 = vmatprep.subr.mxu0 %v2942
    %3146 = vmatpush2.msra.mxu0 %v2941
    %3147 = vmatprep.subr.mxu0 %v2936
    %3148 = vmatpush2.msra.mxu0 %v2935
    %3149 = vmatprep.subr.mxu0 %v2930
    %3150 = vmatpush2.msra.mxu0 %v2929
    %3151 = vmatprep.subr.mxu0 %v2924
    %3152 = vmatpush2.msra.mxu0 %v2923
    %3153 = vmatprep.subr.mxu0 %v2918
    %3154 = vmatpush2.msra.mxu0 %v2917
    %3155 = vmatprep.subr.mxu0 %v2912
    %3156 = vmatpush2.msra.mxu0 %v2911
    %3157 = vmatprep.subr.mxu0 %v2906
    %3158 = vmatpush2.msra.mxu0 %v2905
    %3159 = vmatprep.subr.mxu0 %v2900
    %3160 = vmatpush2.msra.mxu0 %v2899
    %3161 = vmatprep.subr.mxu0 %v2894
    %3162 = vmatpush2.msra.mxu0 %v2893
    %3163 = vmatprep.subr.mxu0 %v2888
    %3164 = vmatpush2.msra.mxu0 %v2887
    %3165 = vmatprep.subr.mxu0 %v2882
    %3166 = vmatpush2.msra.mxu0 %v2881
    %3167 = vmatprep.subr.mxu0 %v2876
    %3168 = vmatpush2.msra.mxu0 %v2875
    %3169 = vmatprep.subr.mxu0 %v2870
    %3170 = vmatpush2.msra.mxu0 %v2869
    %3171 = vmatprep.subr.mxu0 %v2864
    %3172 = vmatpush2.msra.mxu0 %v2863
    %3173 = vmatprep.mubr.f32.mxu0 %v1587
    %3174 = vmatmul.mubr.f32.gmra.mxu0 %v1586
    %v3175 = vpop.f32.mrf.mxu0
    %v3176 = vadd.f32 0.0, %v3175
    %v3177 = vpop.f32.mrf.mxu0
    %v3178 = vadd.f32 0.0, %v3177
    %3179 = vmatprep.mubr.f32.mxu0 %v1589
    %3180 = vmatmul.mubr.f32.gmra.mxu0 %v1588
    %v3181 = vpop.f32.mrf.mxu0
    %v3182 = vadd.f32 0.0, %v3181
    %v3183 = vpop.f32.mrf.mxu0
    %v3184 = vadd.f32 0.0, %v3183
    %3185 = vdwg.mxu0
    %v3186 = vadd.f32 %v2445, %v3022
    %v3187 = vadd.f32 %v2447, %v3024
    %v3188 = vadd.f32 %v2599, %v3099
    %v3189 = vadd.f32 %v2601, %v3101
    %v3190 = vadd.f32 %v2753, %v3176
    %v3191 = vadd.f32 %v2755, %v3178
    %v3192 = vadd.f32 %v2451, %v3028
    %v3193 = vadd.f32 %v2453, %v3030
    %v3194 = vadd.f32 %v2605, %v3105
    %v3195 = vadd.f32 %v2607, %v3107
    %v3196 = vadd.f32 %v2759, %v3182
    %v3197 = vadd.f32 %v2761, %v3184
    %v3198 = vld [vmem:[%s16] sm:$0x3f]
    %v3200 = vlaneseq
    %v3201 = vshrl.u32 %v3200, 7
    %v3202 = vsub.s32 0, %v3201
    %v3203 = vrot.slane %v3198, %v3202
    %v3204 = vlaneseq
    %v3205 = vshrl.u32 %v3204, 7
    %v3206 = vsub.s32 1, %v3205
    %v3207 = vrot.slane %v3198, %v3206
    %v3208 = vlaneseq
    %v3209 = vshrl.u32 %v3208, 7
    %v3210 = vsub.s32 2, %v3209
    %v3211 = vrot.slane %v3198, %v3210
    %v3212 = vlaneseq
    %v3213 = vshrl.u32 %v3212, 7
    %v3214 = vsub.s32 3, %v3213
    %v3215 = vrot.slane %v3198, %v3214
    %v3216 = vlaneseq
    %v3217 = vshrl.u32 %v3216, 7
    %v3218 = vsub.s32 4, %v3217
    %v3219 = vrot.slane %v3198, %v3218
    %v3220 = vlaneseq
    %v3221 = vshrl.u32 %v3220, 7
    %v3222 = vsub.s32 5, %v3221
    %v3223 = vrot.slane %v3198, %v3222
    %v3230 = vadd.f32 %v3186, %v3203
    %v3231 = vadd.f32 %v3187, %v3207
    %v3232 = vadd.f32 %v3188, %v3211
    %v3233 = vadd.f32 %v3189, %v3215
    %v3234 = vadd.f32 %v3190, %v3219
    %v3235 = vadd.f32 %v3191, %v3223
    %v3236 = vadd.f32 %v3192, %v3203
    %v3237 = vadd.f32 %v3193, %v3207
    %v3238 = vadd.f32 %v3194, %v3211
    %v3239 = vadd.f32 %v3195, %v3215
    %v3240 = vadd.f32 %v3196, %v3219
    %v3241 = vadd.f32 %v3197, %v3223
    %v3242 = vld [vmem:[%s17] sm:$0x3f]
    %v3243 = vld [vmem:[%s18] sm:$0x3f]
    %vm3244 = vcmp.gt.f32.partialorder %v3230, 0.0
    %vm3245 = vcmp.gt.f32.partialorder %v3231, 0.0
    %vm3246 = vcmp.gt.f32.partialorder %v3232, 0.0
    %vm3247 = vcmp.gt.f32.partialorder %v3233, 0.0
    %vm3248 = vcmp.gt.f32.partialorder %v3234, 0.0
    %vm3249 = vcmp.gt.f32.partialorder %v3235, 0.0
    %vm3250 = vcmp.gt.f32.partialorder %v3236, 0.0
    %vm3251 = vcmp.gt.f32.partialorder %v3237, 0.0
    %vm3252 = vcmp.gt.f32.partialorder %v3238, 0.0
    %vm3253 = vcmp.gt.f32.partialorder %v3239, 0.0
    %vm3254 = vcmp.gt.f32.partialorder %v3240, 0.0
    %vm3255 = vcmp.gt.f32.partialorder %v3241, 0.0
    %v3256 = vmul.f32 %v3230, 0.01
    %v3257 = vmul.f32 %v3231, 0.01
    %v3258 = vmul.f32 %v3232, 0.01
    %v3259 = vmul.f32 %v3233, 0.01
    %v3260 = vmul.f32 %v3234, 0.01
    %v3261 = vmul.f32 %v3235, 0.01
    %v3262 = vmul.f32 %v3236, 0.01
    %v3263 = vmul.f32 %v3237, 0.01
    %v3264 = vmul.f32 %v3238, 0.01
    %v3265 = vmul.f32 %v3239, 0.01
    %v3266 = vmul.f32 %v3240, 0.01
    %v3267 = vmul.f32 %v3241, 0.01
    %v3268 = vsel %vm3244, %v3230, %v3256
    %v3269 = vsel %vm3245, %v3231, %v3257
    %v3270 = vsel %vm3246, %v3232, %v3258
    %v3271 = vsel %vm3247, %v3233, %v3259
    %v3272 = vsel %vm3248, %v3234, %v3260
    %v3273 = vsel %vm3249, %v3235, %v3261
    %v3274 = vsel %vm3250, %v3236, %v3262
    %v3275 = vsel %vm3251, %v3237, %v3263
    %v3276 = vsel %vm3252, %v3238, %v3264
    %v3277 = vsel %vm3253, %v3239, %v3265
    %v3278 = vsel %vm3254, %v3240, %v3266
    %v3279 = vsel %vm3255, %v3241, %v3267
    %3280 = vmatprep.subr.mxu0 0.0
    %3281 = vmatpush1.msra.mxu0 0.0
    %3282 = vmatprep.subr.mxu0 0.0
    %3283 = vmatpush1.msra.mxu0 0.0
    %3284 = vmatprep.subr.mxu0 0.0
    %3285 = vmatpush1.msra.mxu0 0.0
    %3286 = vmatprep.subr.mxu0 0.0
    %3287 = vmatpush1.msra.mxu0 0.0
    %3288 = vmatprep.subr.mxu0 0.0
    %3289 = vmatpush1.msra.mxu0 0.0
    %3290 = vmatprep.subr.mxu0 0.0
    %3291 = vmatpush1.msra.mxu0 0.0
    %3292 = vmatprep.subr.mxu0 0.0
    %3293 = vmatpush1.msra.mxu0 0.0
    %3294 = vmatprep.subr.mxu0 0.0
    %3295 = vmatpush1.msra.mxu0 0.0
    %3296 = vmatprep.subr.mxu0 0.0
    %3297 = vmatpush1.msra.mxu0 0.0
    %3298 = vmatprep.subr.mxu0 0.0
    %3299 = vmatpush1.msra.mxu0 0.0
    %3300 = vmatprep.subr.mxu0 0.0
    %3301 = vmatpush1.msra.mxu0 0.0
    %3302 = vmatprep.subr.mxu0 0.0
    %3303 = vmatpush1.msra.mxu0 0.0
    %3304 = vmatprep.subr.mxu0 0.0
    %3305 = vmatpush1.msra.mxu0 0.0
    %3306 = vmatprep.subr.mxu0 0.0
    %3307 = vmatpush1.msra.mxu0 0.0
    %3308 = vmatprep.subr.mxu0 %v3275
    %3309 = vmatpush1.msra.mxu0 %v3274
    %3310 = vmatprep.subr.mxu0 %v3269
    %3311 = vmatpush1.msra.mxu0 %v3268
    %3312 = vmatprep.subr.mxu0 0.0
    %3313 = vmatpush2.msra.mxu0 0.0
    %3314 = vmatprep.subr.mxu0 0.0
    %3315 = vmatpush2.msra.mxu0 0.0
    %3316 = vmatprep.subr.mxu0 0.0
    %3317 = vmatpush2.msra.mxu0 0.0
    %3318 = vmatprep.subr.mxu0 0.0
    %3319 = vmatpush2.msra.mxu0 0.0
    %3320 = vmatprep.subr.mxu0 0.0
    %3321 = vmatpush2.msra.mxu0 0.0
    %3322 = vmatprep.subr.mxu0 0.0
    %3323 = vmatpush2.msra.mxu0 0.0
    %3324 = vmatprep.subr.mxu0 0.0
    %3325 = vmatpush2.msra.mxu0 0.0
    %3326 = vmatprep.subr.mxu0 0.0
    %3327 = vmatpush2.msra.mxu0 0.0
    %3328 = vmatprep.subr.mxu0 0.0
    %3329 = vmatpush2.msra.mxu0 0.0
    %3330 = vmatprep.subr.mxu0 0.0
    %3331 = vmatpush2.msra.mxu0 0.0
    %3332 = vmatprep.subr.mxu0 0.0
    %3333 = vmatpush2.msra.mxu0 0.0
    %3334 = vmatprep.subr.mxu0 0.0
    %3335 = vmatpush2.msra.mxu0 0.0
    %3336 = vmatprep.subr.mxu0 0.0
    %3337 = vmatpush2.msra.mxu0 0.0
    %3338 = vmatprep.subr.mxu0 0.0
    %3339 = vmatpush2.msra.mxu0 0.0
    %3340 = vmatprep.subr.mxu0 0.0
    %3341 = vmatpush2.msra.mxu0 0.0
    %3342 = vmatprep.subr.mxu0 0.0
    %3343 = vmatpush2.msra.mxu0 0.0
    %3344 = vmatprep.mubr.f32.mxu0 0.0
    %3345 = vmatmul.mubr.f32.gmra.mxu0 %v280
    %v3346 = vpop.f32.mrf.mxu0
    %v3347 = vadd.f32 0.0, %v3346
    %v3348 = vpop.f32.mrf.mxu0
    %v3349 = vadd.f32 0.0, %v3348
    %3350 = vdwg.mxu0
    %3351 = vmatprep.subr.mxu0 0.0
    %3352 = vmatpush1.msra.mxu0 0.0
    %3353 = vmatprep.subr.mxu0 0.0
    %3354 = vmatpush1.msra.mxu0 0.0
    %3355 = vmatprep.subr.mxu0 0.0
    %3356 = vmatpush1.msra.mxu0 0.0
    %3357 = vmatprep.subr.mxu0 0.0
    %3358 = vmatpush1.msra.mxu0 0.0
    %3359 = vmatprep.subr.mxu0 0.0
    %3360 = vmatpush1.msra.mxu0 0.0
    %3361 = vmatprep.subr.mxu0 0.0
    %3362 = vmatpush1.msra.mxu0 0.0
    %3363 = vmatprep.subr.mxu0 0.0
    %3364 = vmatpush1.msra.mxu0 0.0
    %3365 = vmatprep.subr.mxu0 0.0
    %3366 = vmatpush1.msra.mxu0 0.0
    %3367 = vmatprep.subr.mxu0 0.0
    %3368 = vmatpush1.msra.mxu0 0.0
    %3369 = vmatprep.subr.mxu0 0.0
    %3370 = vmatpush1.msra.mxu0 0.0
    %3371 = vmatprep.subr.mxu0 0.0
    %3372 = vmatpush1.msra.mxu0 0.0
    %3373 = vmatprep.subr.mxu0 0.0
    %3374 = vmatpush1.msra.mxu0 0.0
    %3375 = vmatprep.subr.mxu0 0.0
    %3376 = vmatpush1.msra.mxu0 0.0
    %3377 = vmatprep.subr.mxu0 0.0
    %3378 = vmatpush1.msra.mxu0 0.0
    %3379 = vmatprep.subr.mxu0 %v3277
    %3380 = vmatpush1.msra.mxu0 %v3276
    %3381 = vmatprep.subr.mxu0 %v3271
    %3382 = vmatpush1.msra.mxu0 %v3270
    %3383 = vmatprep.subr.mxu0 0.0
    %3384 = vmatpush2.msra.mxu0 0.0
    %3385 = vmatprep.subr.mxu0 0.0
    %3386 = vmatpush2.msra.mxu0 0.0
    %3387 = vmatprep.subr.mxu0 0.0
    %3388 = vmatpush2.msra.mxu0 0.0
    %3389 = vmatprep.subr.mxu0 0.0
    %3390 = vmatpush2.msra.mxu0 0.0
    %3391 = vmatprep.subr.mxu0 0.0
    %3392 = vmatpush2.msra.mxu0 0.0
    %3393 = vmatprep.subr.mxu0 0.0
    %3394 = vmatpush2.msra.mxu0 0.0
    %3395 = vmatprep.subr.mxu0 0.0
    %3396 = vmatpush2.msra.mxu0 0.0
    %3397 = vmatprep.subr.mxu0 0.0
    %3398 = vmatpush2.msra.mxu0 0.0
    %3399 = vmatprep.subr.mxu0 0.0
    %3400 = vmatpush2.msra.mxu0 0.0
    %3401 = vmatprep.subr.mxu0 0.0
    %3402 = vmatpush2.msra.mxu0 0.0
    %3403 = vmatprep.subr.mxu0 0.0
    %3404 = vmatpush2.msra.mxu0 0.0
    %3405 = vmatprep.subr.mxu0 0.0
    %3406 = vmatpush2.msra.mxu0 0.0
    %3407 = vmatprep.subr.mxu0 0.0
    %3408 = vmatpush2.msra.mxu0 0.0
    %3409 = vmatprep.subr.mxu0 0.0
    %3410 = vmatpush2.msra.mxu0 0.0
    %3411 = vmatprep.subr.mxu0 0.0
    %3412 = vmatpush2.msra.mxu0 0.0
    %3413 = vmatprep.subr.mxu0 0.0
    %3414 = vmatpush2.msra.mxu0 0.0
    %3415 = vmatprep.mubr.f32.mxu0 0.0
    %3416 = vmatmul.mubr.f32.gmra.mxu0 %v280
    %v3417 = vpop.f32.mrf.mxu0
    %v3418 = vadd.f32 0.0, %v3417
    %v3419 = vpop.f32.mrf.mxu0
    %v3420 = vadd.f32 0.0, %v3419
    %3421 = vdwg.mxu0
    %3422 = vmatprep.subr.mxu0 0.0
    %3423 = vmatpush1.msra.mxu0 0.0
    %3424 = vmatprep.subr.mxu0 0.0
    %3425 = vmatpush1.msra.mxu0 0.0
    %3426 = vmatprep.subr.mxu0 0.0
    %3427 = vmatpush1.msra.mxu0 0.0
    %3428 = vmatprep.subr.mxu0 0.0
    %3429 = vmatpush1.msra.mxu0 0.0
    %3430 = vmatprep.subr.mxu0 0.0
    %3431 = vmatpush1.msra.mxu0 0.0
    %3432 = vmatprep.subr.mxu0 0.0
    %3433 = vmatpush1.msra.mxu0 0.0
    %3434 = vmatprep.subr.mxu0 0.0
    %3435 = vmatpush1.msra.mxu0 0.0
    %3436 = vmatprep.subr.mxu0 0.0
    %3437 = vmatpush1.msra.mxu0 0.0
    %3438 = vmatprep.subr.mxu0 0.0
    %3439 = vmatpush1.msra.mxu0 0.0
    %3440 = vmatprep.subr.mxu0 0.0
    %3441 = vmatpush1.msra.mxu0 0.0
    %3442 = vmatprep.subr.mxu0 0.0
    %3443 = vmatpush1.msra.mxu0 0.0
    %3444 = vmatprep.subr.mxu0 0.0
    %3445 = vmatpush1.msra.mxu0 0.0
    %3446 = vmatprep.subr.mxu0 0.0
    %3447 = vmatpush1.msra.mxu0 0.0
    %3448 = vmatprep.subr.mxu0 0.0
    %3449 = vmatpush1.msra.mxu0 0.0
    %3450 = vmatprep.subr.mxu0 %v3279
    %3451 = vmatpush1.msra.mxu0 %v3278
    %3452 = vmatprep.subr.mxu0 %v3273
    %3453 = vmatpush1.msra.mxu0 %v3272
    %3454 = vmatprep.subr.mxu0 0.0
    %3455 = vmatpush2.msra.mxu0 0.0
    %3456 = vmatprep.subr.mxu0 0.0
    %3457 = vmatpush2.msra.mxu0 0.0
    %3458 = vmatprep.subr.mxu0 0.0
    %3459 = vmatpush2.msra.mxu0 0.0
    %3460 = vmatprep.subr.mxu0 0.0
    %3461 = vmatpush2.msra.mxu0 0.0
    %3462 = vmatprep.subr.mxu0 0.0
    %3463 = vmatpush2.msra.mxu0 0.0
    %3464 = vmatprep.subr.mxu0 0.0
    %3465 = vmatpush2.msra.mxu0 0.0
    %3466 = vmatprep.subr.mxu0 0.0
    %3467 = vmatpush2.msra.mxu0 0.0
    %3468 = vmatprep.subr.mxu0 0.0
    %3469 = vmatpush2.msra.mxu0 0.0
    %3470 = vmatprep.subr.mxu0 0.0
    %3471 = vmatpush2.msra.mxu0 0.0
    %3472 = vmatprep.subr.mxu0 0.0
    %3473 = vmatpush2.msra.mxu0 0.0
    %3474 = vmatprep.subr.mxu0 0.0
    %3475 = vmatpush2.msra.mxu0 0.0
    %3476 = vmatprep.subr.mxu0 0.0
    %3477 = vmatpush2.msra.mxu0 0.0
    %3478 = vmatprep.subr.mxu0 0.0
    %3479 = vmatpush2.msra.mxu0 0.0
    %3480 = vmatprep.subr.mxu0 0.0
    %3481 = vmatpush2.msra.mxu0 0.0
    %3482 = vmatprep.subr.mxu0 0.0
    %3483 = vmatpush2.msra.mxu0 0.0
    %3484 = vmatprep.subr.mxu0 0.0
    %3485 = vmatpush2.msra.mxu0 0.0
    %3486 = vmatprep.mubr.f32.mxu0 0.0
    %3487 = vmatmul.mubr.f32.gmra.mxu0 %v280
    %v3488 = vpop.f32.mrf.mxu0
    %v3489 = vadd.f32 0.0, %v3488
    %v3490 = vpop.f32.mrf.mxu0
    %v3491 = vadd.f32 0.0, %v3490
    %3492 = vdwg.mxu0
    %v3493 = vmul.f32 %v3268, %v3268
    %v3494 = vmul.f32 %v3269, %v3269
    %v3495 = vmul.f32 %v3270, %v3270
    %v3496 = vmul.f32 %v3271, %v3271
    %v3497 = vmul.f32 %v3272, %v3272
    %v3498 = vmul.f32 %v3273, %v3273
    %v3499 = vmul.f32 %v3274, %v3274
    %v3500 = vmul.f32 %v3275, %v3275
    %v3501 = vmul.f32 %v3276, %v3276
    %v3502 = vmul.f32 %v3277, %v3277
    %v3503 = vmul.f32 %v3278, %v3278
    %v3504 = vmul.f32 %v3279, %v3279
    %3505 = vmatprep.subr.mxu0 0.0
    %3506 = vmatpush1.msra.mxu0 0.0
    %3507 = vmatprep.subr.mxu0 0.0
    %3508 = vmatpush1.msra.mxu0 0.0
    %3509 = vmatprep.subr.mxu0 0.0
    %3510 = vmatpush1.msra.mxu0 0.0
    %3511 = vmatprep.subr.mxu0 0.0
    %3512 = vmatpush1.msra.mxu0 0.0
    %3513 = vmatprep.subr.mxu0 0.0
    %3514 = vmatpush1.msra.mxu0 0.0
    %3515 = vmatprep.subr.mxu0 0.0
    %3516 = vmatpush1.msra.mxu0 0.0
    %3517 = vmatprep.subr.mxu0 0.0
    %3518 = vmatpush1.msra.mxu0 0.0
    %3519 = vmatprep.subr.mxu0 0.0
    %3520 = vmatpush1.msra.mxu0 0.0
    %3521 = vmatprep.subr.mxu0 0.0
    %3522 = vmatpush1.msra.mxu0 0.0
    %3523 = vmatprep.subr.mxu0 0.0
    %3524 = vmatpush1.msra.mxu0 0.0
    %3525 = vmatprep.subr.mxu0 0.0
    %3526 = vmatpush1.msra.mxu0 0.0
    %3527 = vmatprep.subr.mxu0 0.0
    %3528 = vmatpush1.msra.mxu0 0.0
    %3529 = vmatprep.subr.mxu0 0.0
    %3530 = vmatpush1.msra.mxu0 0.0
    %3531 = vmatprep.subr.mxu0 0.0
    %3532 = vmatpush1.msra.mxu0 0.0
    %3533 = vmatprep.subr.mxu0 %v3500
    %3534 = vmatpush1.msra.mxu0 %v3499
    %3535 = vmatprep.subr.mxu0 %v3494
    %3536 = vmatpush1.msra.mxu0 %v3493
    %3537 = vmatprep.subr.mxu0 0.0
    %3538 = vmatpush2.msra.mxu0 0.0
    %3539 = vmatprep.subr.mxu0 0.0
    %3540 = vmatpush2.msra.mxu0 0.0
    %3541 = vmatprep.subr.mxu0 0.0
    %3542 = vmatpush2.msra.mxu0 0.0
    %3543 = vmatprep.subr.mxu0 0.0
    %3544 = vmatpush2.msra.mxu0 0.0
    %3545 = vmatprep.subr.mxu0 0.0
    %3546 = vmatpush2.msra.mxu0 0.0
    %3547 = vmatprep.subr.mxu0 0.0
    %3548 = vmatpush2.msra.mxu0 0.0
    %3549 = vmatprep.subr.mxu0 0.0
    %3550 = vmatpush2.msra.mxu0 0.0
    %3551 = vmatprep.subr.mxu0 0.0
    %3552 = vmatpush2.msra.mxu0 0.0
    %3553 = vmatprep.subr.mxu0 0.0
    %3554 = vmatpush2.msra.mxu0 0.0
    %3555 = vmatprep.subr.mxu0 0.0
    %3556 = vmatpush2.msra.mxu0 0.0
    %3557 = vmatprep.subr.mxu0 0.0
    %3558 = vmatpush2.msra.mxu0 0.0
    %3559 = vmatprep.subr.mxu0 0.0
    %3560 = vmatpush2.msra.mxu0 0.0
    %3561 = vmatprep.subr.mxu0 0.0
    %3562 = vmatpush2.msra.mxu0 0.0
    %3563 = vmatprep.subr.mxu0 0.0
    %3564 = vmatpush2.msra.mxu0 0.0
    %3565 = vmatprep.subr.mxu0 0.0
    %3566 = vmatpush2.msra.mxu0 0.0
    %3567 = vmatprep.subr.mxu0 0.0
    %3568 = vmatpush2.msra.mxu0 0.0
    %3569 = vmatprep.mubr.f32.mxu0 0.0
    %3570 = vmatmul.mubr.f32.gmra.mxu0 %v280
    %v3571 = vpop.f32.mrf.mxu0
    %v3572 = vadd.f32 0.0, %v3571
    %v3573 = vpop.f32.mrf.mxu0
    %v3574 = vadd.f32 0.0, %v3573
    %3575 = vdwg.mxu0
    %3576 = vmatprep.subr.mxu0 0.0
    %3577 = vmatpush1.msra.mxu0 0.0
    %3578 = vmatprep.subr.mxu0 0.0
    %3579 = vmatpush1.msra.mxu0 0.0
    %3580 = vmatprep.subr.mxu0 0.0
    %3581 = vmatpush1.msra.mxu0 0.0
    %3582 = vmatprep.subr.mxu0 0.0
    %3583 = vmatpush1.msra.mxu0 0.0
    %3584 = vmatprep.subr.mxu0 0.0
    %3585 = vmatpush1.msra.mxu0 0.0
    %3586 = vmatprep.subr.mxu0 0.0
    %3587 = vmatpush1.msra.mxu0 0.0
    %3588 = vmatprep.subr.mxu0 0.0
    %3589 = vmatpush1.msra.mxu0 0.0
    %3590 = vmatprep.subr.mxu0 0.0
    %3591 = vmatpush1.msra.mxu0 0.0
    %3592 = vmatprep.subr.mxu0 0.0
    %3593 = vmatpush1.msra.mxu0 0.0
    %3594 = vmatprep.subr.mxu0 0.0
    %3595 = vmatpush1.msra.mxu0 0.0
    %3596 = vmatprep.subr.mxu0 0.0
    %3597 = vmatpush1.msra.mxu0 0.0
    %3598 = vmatprep.subr.mxu0 0.0
    %3599 = vmatpush1.msra.mxu0 0.0
    %3600 = vmatprep.subr.mxu0 0.0
    %3601 = vmatpush1.msra.mxu0 0.0
    %3602 = vmatprep.subr.mxu0 0.0
    %3603 = vmatpush1.msra.mxu0 0.0
    %3604 = vmatprep.subr.mxu0 %v3502
    %3605 = vmatpush1.msra.mxu0 %v3501
    %3606 = vmatprep.subr.mxu0 %v3496
    %3607 = vmatpush1.msra.mxu0 %v3495
    %3608 = vmatprep.subr.mxu0 0.0
    %3609 = vmatpush2.msra.mxu0 0.0
    %3610 = vmatprep.subr.mxu0 0.0
    %3611 = vmatpush2.msra.mxu0 0.0
    %3612 = vmatprep.subr.mxu0 0.0
    %3613 = vmatpush2.msra.mxu0 0.0
    %3614 = vmatprep.subr.mxu0 0.0
    %3615 = vmatpush2.msra.mxu0 0.0
    %3616 = vmatprep.subr.mxu0 0.0
    %3617 = vmatpush2.msra.mxu0 0.0
    %3618 = vmatprep.subr.mxu0 0.0
    %3619 = vmatpush2.msra.mxu0 0.0
    %3620 = vmatprep.subr.mxu0 0.0
    %3621 = vmatpush2.msra.mxu0 0.0
    %3622 = vmatprep.subr.mxu0 0.0
    %3623 = vmatpush2.msra.mxu0 0.0
    %3624 = vmatprep.subr.mxu0 0.0
    %3625 = vmatpush2.msra.mxu0 0.0
    %3626 = vmatprep.subr.mxu0 0.0
    %3627 = vmatpush2.msra.mxu0 0.0
    %3628 = vmatprep.subr.mxu0 0.0
    %3629 = vmatpush2.msra.mxu0 0.0
    %3630 = vmatprep.subr.mxu0 0.0
    %3631 = vmatpush2.msra.mxu0 0.0
    %3632 = vmatprep.subr.mxu0 0.0
    %3633 = vmatpush2.msra.mxu0 0.0
    %3634 = vmatprep.subr.mxu0 0.0
    %3635 = vmatpush2.msra.mxu0 0.0
    %3636 = vmatprep.subr.mxu0 0.0
    %3637 = vmatpush2.msra.mxu0 0.0
    %3638 = vmatprep.subr.mxu0 0.0
    %3639 = vmatpush2.msra.mxu0 0.0
    %3640 = vmatprep.mubr.f32.mxu0 0.0
    %3641 = vmatmul.mubr.f32.gmra.mxu0 %v280
    %v3642 = vpop.f32.mrf.mxu0
    %v3643 = vadd.f32 0.0, %v3642
    %v3644 = vpop.f32.mrf.mxu0
    %v3645 = vadd.f32 0.0, %v3644
    %3646 = vdwg.mxu0
    %3647 = vmatprep.subr.mxu0 0.0
    %3648 = vmatpush1.msra.mxu0 0.0
    %3649 = vmatprep.subr.mxu0 0.0
    %3650 = vmatpush1.msra.mxu0 0.0
    %3651 = vmatprep.subr.mxu0 0.0
    %3652 = vmatpush1.msra.mxu0 0.0
    %3653 = vmatprep.subr.mxu0 0.0
    %3654 = vmatpush1.msra.mxu0 0.0
    %3655 = vmatprep.subr.mxu0 0.0
    %3656 = vmatpush1.msra.mxu0 0.0
    %3657 = vmatprep.subr.mxu0 0.0
    %3658 = vmatpush1.msra.mxu0 0.0
    %3659 = vmatprep.subr.mxu0 0.0
    %3660 = vmatpush1.msra.mxu0 0.0
    %3661 = vmatprep.subr.mxu0 0.0
    %3662 = vmatpush1.msra.mxu0 0.0
    %3663 = vmatprep.subr.mxu0 0.0
    %3664 = vmatpush1.msra.mxu0 0.0
    %3665 = vmatprep.subr.mxu0 0.0
    %3666 = vmatpush1.msra.mxu0 0.0
    %3667 = vmatprep.subr.mxu0 0.0
    %3668 = vmatpush1.msra.mxu0 0.0
    %3669 = vmatprep.subr.mxu0 0.0
    %3670 = vmatpush1.msra.mxu0 0.0
    %3671 = vmatprep.subr.mxu0 0.0
    %3672 = vmatpush1.msra.mxu0 0.0
    %3673 = vmatprep.subr.mxu0 0.0
    %3674 = vmatpush1.msra.mxu0 0.0
    %3675 = vmatprep.subr.mxu0 %v3504
    %3676 = vmatpush1.msra.mxu0 %v3503
    %3677 = vmatprep.subr.mxu0 %v3498
    %3678 = vmatpush1.msra.mxu0 %v3497
    %3679 = vmatprep.subr.mxu0 0.0
    %3680 = vmatpush2.msra.mxu0 0.0
    %3681 = vmatprep.subr.mxu0 0.0
    %3682 = vmatpush2.msra.mxu0 0.0
    %3683 = vmatprep.subr.mxu0 0.0
    %3684 = vmatpush2.msra.mxu0 0.0
    %3685 = vmatprep.subr.mxu0 0.0
    %3686 = vmatpush2.msra.mxu0 0.0
    %3687 = vmatprep.subr.mxu0 0.0
    %3688 = vmatpush2.msra.mxu0 0.0
    %3689 = vmatprep.subr.mxu0 0.0
    %3690 = vmatpush2.msra.mxu0 0.0
    %3691 = vmatprep.subr.mxu0 0.0
    %3692 = vmatpush2.msra.mxu0 0.0
    %3693 = vmatprep.subr.mxu0 0.0
    %3694 = vmatpush2.msra.mxu0 0.0
    %3695 = vmatprep.subr.mxu0 0.0
    %3696 = vmatpush2.msra.mxu0 0.0
    %3697 = vmatprep.subr.mxu0 0.0
    %3698 = vmatpush2.msra.mxu0 0.0
    %3699 = vmatprep.subr.mxu0 0.0
    %3700 = vmatpush2.msra.mxu0 0.0
    %3701 = vmatprep.subr.mxu0 0.0
    %3702 = vmatpush2.msra.mxu0 0.0
    %3703 = vmatprep.subr.mxu0 0.0
    %3704 = vmatpush2.msra.mxu0 0.0
    %3705 = vmatprep.subr.mxu0 0.0
    %3706 = vmatpush2.msra.mxu0 0.0
    %3707 = vmatprep.subr.mxu0 0.0
    %3708 = vmatpush2.msra.mxu0 0.0
    %3709 = vmatprep.subr.mxu0 0.0
    %3710 = vmatpush2.msra.mxu0 0.0
    %3711 = vmatprep.mubr.f32.mxu0 0.0
    %3712 = vmatmul.mubr.f32.gmra.mxu0 %v280
    %v3713 = vpop.f32.mrf.mxu0
    %v3714 = vadd.f32 0.0, %v3713
    %v3715 = vpop.f32.mrf.mxu0
    %v3716 = vadd.f32 0.0, %v3715
    %3717 = vdwg.mxu0
    %v3718 = vmul.f32 %v3347, 0.0625
    %v3719 = vmul.f32 %v3349, 0.0625
    %v3720 = vmul.f32 %v3418, 0.0625
    %v3721 = vmul.f32 %v3420, 0.0625
    %v3722 = vmul.f32 %v3489, 0.0625
    %v3723 = vmul.f32 %v3491, 0.0625
    %v3724 = vmul.f32 %v3572, 0.0625
    %v3725 = vmul.f32 %v3574, 0.0625
    %v3726 = vmul.f32 %v3643, 0.0625
    %v3727 = vmul.f32 %v3645, 0.0625
    %v3728 = vmul.f32 %v3714, 0.0625
    %v3729 = vmul.f32 %v3716, 0.0625
    %v3730 = vmul.f32 %v3718, %v3718
    %v3731 = vmul.f32 %v3719, %v3719
    %v3732 = vmul.f32 %v3720, %v3720
    %v3733 = vmul.f32 %v3721, %v3721
    %v3734 = vmul.f32 %v3722, %v3722
    %v3735 = vmul.f32 %v3723, %v3723
    %v3736 = vsub.f32 %v3724, %v3730
    %v3737 = vsub.f32 %v3725, %v3731
    %v3738 = vsub.f32 %v3726, %v3732
    %v3739 = vsub.f32 %v3727, %v3733
    %v3740 = vsub.f32 %v3728, %v3734
    %v3741 = vsub.f32 %v3729, %v3735
    %v3742 = vadd.f32 %v3736, 1e-05
    %v3743 = vadd.f32 %v3737, 1e-05
    %v3744 = vadd.f32 %v3738, 1e-05
    %v3745 = vadd.f32 %v3739, 1e-05
    %v3746 = vadd.f32 %v3740, 1e-05
    %v3747 = vadd.f32 %v3741, 1e-05
    %v3748 = vrsqrt.pop %v3742
    %v3749 = vrsqrt.pop %v3743
    %v3750 = vrsqrt.pop %v3744
    %v3751 = vrsqrt.pop %v3745
    %v3752 = vrsqrt.pop %v3746
    %v3753 = vrsqrt.pop %v3747
    %v3760 = vcombine.low %v3748, %v3749
    %v3761 = vcombine.low %v3750, %v3751
    %v3762 = vcombine.low %v3752, %v3753
    %v3764 = vunpack.c.l.s4 1966171168
    %v3765 = vunpack.c.0.s8 %v3764
    %v3766 = vlaneseq
    %v3767 = vshrl.u32 %v3766, 7
    %v3768 = vsub.s32 %v3765, %v3767
    %v3769 = vrot.slane %v3760, %v3768
    %v3771 = vunpack.c.l.s4 1966171168
    %v3772 = vunpack.c.0.s8 %v3771
    %v3773 = vlaneseq
    %v3774 = vshrl.u32 %v3773, 7
    %v3775 = vsub.s32 %v3772, %v3774
    %v3776 = vrot.slane %v3761, %v3775
    %v3778 = vunpack.c.l.s4 1966171168
    %v3779 = vunpack.c.0.s8 %v3778
    %v3780 = vlaneseq
    %v3781 = vshrl.u32 %v3780, 7
    %v3782 = vsub.s32 %v3779, %v3781
    %v3783 = vrot.slane %v3762, %v3782
    %v3784 = vcombine.low %v3769, %v3776
    %v3786 = vunpack.c.l.s4 1966171168
    %v3787 = vunpack.c.0.s8 %v3786
    %v3788 = vlaneseq
    %v3789 = vshrl.u32 %v3788, 7
    %v3790 = vsub.s32 %v3787, %v3789
    %v3791 = vrot.slane %v3784, %v3790
    %v3793 = vunpack.c.l.s4 1966171168
    %v3794 = vunpack.c.0.s8 %v3793
    %v3795 = vlaneseq
    %v3796 = vshrl.u32 %v3795, 7
    %v3797 = vsub.s32 %v3794, %v3796
    %v3798 = vrot.slane %v3783, %v3797
    %v3799 = vcombine.low %v3791, %v3798
    %v3801 = vmul.f32 %v3242, %v3799
    %v3803 = vlaneseq
    %v3804 = vshrl.u32 %v3803, 7
    %v3805 = vsub.s32 0, %v3804
    %v3806 = vrot.slane %v3801, %v3805
    %v3807 = vlaneseq
    %v3808 = vshrl.u32 %v3807, 7
    %v3809 = vsub.s32 1, %v3808
    %v3810 = vrot.slane %v3801, %v3809
    %v3811 = vlaneseq
    %v3812 = vshrl.u32 %v3811, 7
    %v3813 = vsub.s32 2, %v3812
    %v3814 = vrot.slane %v3801, %v3813
    %v3815 = vlaneseq
    %v3816 = vshrl.u32 %v3815, 7
    %v3817 = vsub.s32 3, %v3816
    %v3818 = vrot.slane %v3801, %v3817
    %v3819 = vlaneseq
    %v3820 = vshrl.u32 %v3819, 7
    %v3821 = vsub.s32 4, %v3820
    %v3822 = vrot.slane %v3801, %v3821
    %v3823 = vlaneseq
    %v3824 = vshrl.u32 %v3823, 7
    %v3825 = vsub.s32 5, %v3824
    %v3826 = vrot.slane %v3801, %v3825
    %v3833 = vmul.f32 %v3718, %v3806
    %v3834 = vmul.f32 %v3719, %v3810
    %v3835 = vmul.f32 %v3720, %v3814
    %v3836 = vmul.f32 %v3721, %v3818
    %v3837 = vmul.f32 %v3722, %v3822
    %v3838 = vmul.f32 %v3723, %v3826
    %v3845 = vcombine.low %v3833, %v3834
    %v3846 = vcombine.low %v3835, %v3836
    %v3847 = vcombine.low %v3837, %v3838
    %v3849 = vunpack.c.l.s4 1966171168
    %v3850 = vunpack.c.0.s8 %v3849
    %v3851 = vlaneseq
    %v3852 = vshrl.u32 %v3851, 7
    %v3853 = vsub.s32 %v3850, %v3852
    %v3854 = vrot.slane %v3845, %v3853
    %v3856 = vunpack.c.l.s4 1966171168
    %v3857 = vunpack.c.0.s8 %v3856
    %v3858 = vlaneseq
    %v3859 = vshrl.u32 %v3858, 7
    %v3860 = vsub.s32 %v3857, %v3859
    %v3861 = vrot.slane %v3846, %v3860
    %v3863 = vunpack.c.l.s4 1966171168
    %v3864 = vunpack.c.0.s8 %v3863
    %v3865 = vlaneseq
    %v3866 = vshrl.u32 %v3865, 7
    %v3867 = vsub.s32 %v3864, %v3866
    %v3868 = vrot.slane %v3847, %v3867
    %v3869 = vcombine.low %v3854, %v3861
    %v3871 = vunpack.c.l.s4 1966171168
    %v3872 = vunpack.c.0.s8 %v3871
    %v3873 = vlaneseq
    %v3874 = vshrl.u32 %v3873, 7
    %v3875 = vsub.s32 %v3872, %v3874
    %v3876 = vrot.slane %v3869, %v3875
    %v3878 = vunpack.c.l.s4 1966171168
    %v3879 = vunpack.c.0.s8 %v3878
    %v3880 = vlaneseq
    %v3881 = vshrl.u32 %v3880, 7
    %v3882 = vsub.s32 %v3879, %v3881
    %v3883 = vrot.slane %v3868, %v3882
    %v3884 = vcombine.low %v3876, %v3883
    %v3886 = vsub.f32 %v3243, %v3884
    %v3887 = vmul.f32 %v3268, %v3806
    %v3888 = vmul.f32 %v3269, %v3810
    %v3889 = vmul.f32 %v3270, %v3814
    %v3890 = vmul.f32 %v3271, %v3818
    %v3891 = vmul.f32 %v3272, %v3822
    %v3892 = vmul.f32 %v3273, %v3826
    %v3893 = vmul.f32 %v3274, %v3806
    %v3894 = vmul.f32 %v3275, %v3810
    %v3895 = vmul.f32 %v3276, %v3814
    %v3896 = vmul.f32 %v3277, %v3818
    %v3897 = vmul.f32 %v3278, %v3822
    %v3898 = vmul.f32 %v3279, %v3826
    %v3900 = vlaneseq
    %v3901 = vshrl.u32 %v3900, 7
    %v3902 = vsub.s32 0, %v3901
    %v3903 = vrot.slane %v3886, %v3902
    %v3904 = vlaneseq
    %v3905 = vshrl.u32 %v3904, 7
    %v3906 = vsub.s32 1, %v3905
    %v3907 = vrot.slane %v3886, %v3906
    %v3908 = vlaneseq
    %v3909 = vshrl.u32 %v3908, 7
    %v3910 = vsub.s32 2, %v3909
    %v3911 = vrot.slane %v3886, %v3910
    %v3912 = vlaneseq
    %v3913 = vshrl.u32 %v3912, 7
    %v3914 = vsub.s32 3, %v3913
    %v3915 = vrot.slane %v3886, %v3914
    %v3916 = vlaneseq
    %v3917 = vshrl.u32 %v3916, 7
    %v3918 = vsub.s32 4, %v3917
    %v3919 = vrot.slane %v3886, %v3918
    %v3920 = vlaneseq
    %v3921 = vshrl.u32 %v3920, 7
    %v3922 = vsub.s32 5, %v3921
    %v3923 = vrot.slane %v3886, %v3922
    %v3930 = vadd.f32 %v3887, %v3903
    %v3931 = vadd.f32 %v3888, %v3907
    %v3932 = vadd.f32 %v3889, %v3911
    %v3933 = vadd.f32 %v3890, %v3915
    %v3934 = vadd.f32 %v3891, %v3919
    %v3935 = vadd.f32 %v3892, %v3923
    %v3936 = vadd.f32 %v3893, %v3903
    %v3937 = vadd.f32 %v3894, %v3907
    %v3938 = vadd.f32 %v3895, %v3911
    %v3939 = vadd.f32 %v3896, %v3915
    %v3940 = vadd.f32 %v3897, %v3919
    %v3941 = vadd.f32 %v3898, %v3923
    %v3942 = vld [vmem:[%s19] sm:$0xff]
    %v3943 = vld [vmem:[%s19 + $0x8] sm:$0xff]
    %v3944 = vld [vmem:[%s19 + $0x10] sm:$0xff]
    %v3945 = vld [vmem:[%s19 + $0x18] sm:$0xff]
    %v3946 = vld [vmem:[%s19 + $0x20] sm:$0xff]
    %v3947 = vld [vmem:[%s19 + $0x28] sm:$0xff]
    %v3948 = vld [vmem:[%s19 + $0x30] sm:$0xff]
    %v3949 = vld [vmem:[%s19 + $0x38] sm:$0xff]
    %v3950 = vld [vmem:[%s19 + $0x40] sm:$0xff]
    %v3951 = vld [vmem:[%s19 + $0x48] sm:$0xff]
    %v3952 = vld [vmem:[%s19 + $0x50] sm:$0xff]
    %v3953 = vld [vmem:[%s19 + $0x58] sm:$0xff]
    %v3954 = vld [vmem:[%s19 + $0x60] sm:$0xff]
    %v3955 = vld [vmem:[%s19 + $0x68] sm:$0xff]
    %v3956 = vld [vmem:[%s19 + $0x70] sm:$0xff]
    %v3957 = vld [vmem:[%s19 + $0x78] sm:$0xff]
    %v3958 = vld [vmem:[%s19 + $0x80] sm:$0xff]
    %v3959 = vld [vmem:[%s19 + $0x88] sm:$0xff]
    %v3960 = vld [vmem:[%s19 + $0x90] sm:$0xff]
    %v3961 = vld [vmem:[%s19 + $0x98] sm:$0xff]
    %v3962 = vld [vmem:[%s19 + $0xa0] sm:$0xff]
    %v3963 = vld [vmem:[%s19 + $0xa8] sm:$0xff]
    %v3964 = vld [vmem:[%s19 + $0xb0] sm:$0xff]
    %v3965 = vld [vmem:[%s19 + $0xb8] sm:$0xff]
    %v3966 = vld [vmem:[%s19 + $0xc0] sm:$0xff]
    %v3967 = vld [vmem:[%s19 + $0xc8] sm:$0xff]
    %v3968 = vld [vmem:[%s19 + $0xd0] sm:$0xff]
    %v3969 = vld [vmem:[%s19 + $0xd8] sm:$0xff]
    %v3970 = vld [vmem:[%s19 + $0xe0] sm:$0xff]
    %v3971 = vld [vmem:[%s19 + $0xe8] sm:$0xff]
    %v3972 = vld [vmem:[%s19 + $0xf0] sm:$0xff]
    %v3973 = vld [vmem:[%s19 + $0xf8] sm:$0xff]
    %v3974 = vld [vmem:[%s19 + $0x100] sm:$0xff]
    %v3975 = vld [vmem:[%s19 + $0x108] sm:$0xff]
    %v3976 = vld [vmem:[%s19 + $0x110] sm:$0xff]
    %v3977 = vld [vmem:[%s19 + $0x118] sm:$0xff]
    %v3978 = vld [vmem:[%s19 + $0x120] sm:$0xff]
    %v3979 = vld [vmem:[%s19 + $0x128] sm:$0xff]
    %v3980 = vld [vmem:[%s19 + $0x130] sm:$0xff]
    %v3981 = vld [vmem:[%s19 + $0x138] sm:$0xff]
    %v3982 = vld [vmem:[%s19 + $0x140] sm:$0xff]
    %v3983 = vld [vmem:[%s19 + $0x148] sm:$0xff]
    %v3984 = vld [vmem:[%s19 + $0x150] sm:$0xff]
    %v3985 = vld [vmem:[%s19 + $0x158] sm:$0xff]
    %v3986 = vld [vmem:[%s19 + $0x160] sm:$0xff]
    %v3987 = vld [vmem:[%s19 + $0x168] sm:$0xff]
    %v3988 = vld [vmem:[%s19 + $0x170] sm:$0xff]
    %v3989 = vld [vmem:[%s19 + $0x178] sm:$0xff]
    %v3990 = vld [vmem:[%s19 + $0x180] sm:$0xff]
    %v3991 = vld [vmem:[%s19 + $0x188] sm:$0xff]
    %v3992 = vld [vmem:[%s19 + $0x190] sm:$0xff]
    %v3993 = vld [vmem:[%s19 + $0x198] sm:$0xff]
    %v3994 = vld [vmem:[%s19 + $0x1a0] sm:$0xff]
    %v3995 = vld [vmem:[%s19 + $0x1a8] sm:$0xff]
    %v3996 = vld [vmem:[%s19 + $0x1b0] sm:$0xff]
    %v3997 = vld [vmem:[%s19 + $0x1b8] sm:$0xff]
    %v3998 = vld [vmem:[%s19 + $0x1c0] sm:$0xff]
    %v3999 = vld [vmem:[%s19 + $0x1c8] sm:$0xff]
    %v4000 = vld [vmem:[%s19 + $0x1d0] sm:$0xff]
    %v4001 = vld [vmem:[%s19 + $0x1d8] sm:$0xff]
    %v4002 = vld [vmem:[%s19 + $0x1e0] sm:$0xff]
    %v4003 = vld [vmem:[%s19 + $0x1e8] sm:$0xff]
    %v4004 = vld [vmem:[%s19 + $0x1f0] sm:$0xff]
    %v4005 = vld [vmem:[%s19 + $0x1f8] sm:$0xff]
    %v4006 = vld [vmem:[%s19 + $0x200] sm:$0xff]
    %v4007 = vld [vmem:[%s19 + $0x208] sm:$0xff]
    %v4008 = vld [vmem:[%s19 + $0x210] sm:$0xff]
    %v4009 = vld [vmem:[%s19 + $0x218] sm:$0xff]
    %v4010 = vld [vmem:[%s19 + $0x220] sm:$0xff]
    %v4011 = vld [vmem:[%s19 + $0x228] sm:$0xff]
    %v4012 = vld [vmem:[%s19 + $0x230] sm:$0xff]
    %v4013 = vld [vmem:[%s19 + $0x238] sm:$0xff]
    %v4014 = vld [vmem:[%s19 + $0x240] sm:$0xff]
    %v4015 = vld [vmem:[%s19 + $0x248] sm:$0xff]
    %v4016 = vld [vmem:[%s19 + $0x250] sm:$0xff]
    %v4017 = vld [vmem:[%s19 + $0x258] sm:$0xff]
    %v4018 = vld [vmem:[%s19 + $0x260] sm:$0xff]
    %v4019 = vld [vmem:[%s19 + $0x268] sm:$0xff]
    %v4020 = vld [vmem:[%s19 + $0x270] sm:$0xff]
    %v4021 = vld [vmem:[%s19 + $0x278] sm:$0xff]
    %v4022 = vld [vmem:[%s19 + $0x280] sm:$0xff]
    %v4023 = vld [vmem:[%s19 + $0x288] sm:$0xff]
    %v4024 = vld [vmem:[%s19 + $0x290] sm:$0xff]
    %v4025 = vld [vmem:[%s19 + $0x298] sm:$0xff]
    %v4026 = vld [vmem:[%s19 + $0x2a0] sm:$0xff]
    %v4027 = vld [vmem:[%s19 + $0x2a8] sm:$0xff]
    %v4028 = vld [vmem:[%s19 + $0x2b0] sm:$0xff]
    %v4029 = vld [vmem:[%s19 + $0x2b8] sm:$0xff]
    %v4030 = vld [vmem:[%s19 + $0x2c0] sm:$0xff]
    %v4031 = vld [vmem:[%s19 + $0x2c8] sm:$0xff]
    %v4032 = vld [vmem:[%s19 + $0x2d0] sm:$0xff]
    %v4033 = vld [vmem:[%s19 + $0x2d8] sm:$0xff]
    %v4034 = vld [vmem:[%s19 + $0x2e0] sm:$0xff]
    %v4035 = vld [vmem:[%s19 + $0x2e8] sm:$0xff]
    %v4036 = vld [vmem:[%s19 + $0x2f0] sm:$0xff]
    %v4037 = vld [vmem:[%s19 + $0x2f8] sm:$0xff]
    %4038 = vmatprep.subr.mxu0 0.0
    %4039 = vmatpush1.msra.mxu0 %v3957
    %4040 = vmatprep.subr.mxu0 0.0
    %4041 = vmatpush1.msra.mxu0 %v3956
    %4042 = vmatprep.subr.mxu0 0.0
    %4043 = vmatpush1.msra.mxu0 %v3955
    %4044 = vmatprep.subr.mxu0 0.0
    %4045 = vmatpush1.msra.mxu0 %v3954
    %4046 = vmatprep.subr.mxu0 0.0
    %4047 = vmatpush1.msra.mxu0 %v3953
    %4048 = vmatprep.subr.mxu0 0.0
    %4049 = vmatpush1.msra.mxu0 %v3952
    %4050 = vmatprep.subr.mxu0 0.0
    %4051 = vmatpush1.msra.mxu0 %v3951
    %4052 = vmatprep.subr.mxu0 0.0
    %4053 = vmatpush1.msra.mxu0 %v3950
    %4054 = vmatprep.subr.mxu0 0.0
    %4055 = vmatpush1.msra.mxu0 %v3949
    %4056 = vmatprep.subr.mxu0 0.0
    %4057 = vmatpush1.msra.mxu0 %v3948
    %4058 = vmatprep.subr.mxu0 0.0
    %4059 = vmatpush1.msra.mxu0 %v3947
    %4060 = vmatprep.subr.mxu0 0.0
    %4061 = vmatpush1.msra.mxu0 %v3946
    %4062 = vmatprep.subr.mxu0 0.0
    %4063 = vmatpush1.msra.mxu0 %v3945
    %4064 = vmatprep.subr.mxu0 0.0
    %4065 = vmatpush1.msra.mxu0 %v3944
    %4066 = vmatprep.subr.mxu0 0.0
    %4067 = vmatpush1.msra.mxu0 %v3943
    %4068 = vmatprep.subr.mxu0 0.0
    %4069 = vmatpush1.msra.mxu0 %v3942
    %4070 = vmatprep.subr.mxu0 0.0
    %4071 = vmatpush2.msra.mxu0 %v3973
    %4072 = vmatprep.subr.mxu0 0.0
    %4073 = vmatpush2.msra.mxu0 %v3972
    %4074 = vmatprep.subr.mxu0 0.0
    %4075 = vmatpush2.msra.mxu0 %v3971
    %4076 = vmatprep.subr.mxu0 0.0
    %4077 = vmatpush2.msra.mxu0 %v3970
    %4078 = vmatprep.subr.mxu0 0.0
    %4079 = vmatpush2.msra.mxu0 %v3969
    %4080 = vmatprep.subr.mxu0 0.0
    %4081 = vmatpush2.msra.mxu0 %v3968
    %4082 = vmatprep.subr.mxu0 0.0
    %4083 = vmatpush2.msra.mxu0 %v3967
    %4084 = vmatprep.subr.mxu0 0.0
    %4085 = vmatpush2.msra.mxu0 %v3966
    %4086 = vmatprep.subr.mxu0 0.0
    %4087 = vmatpush2.msra.mxu0 %v3965
    %4088 = vmatprep.subr.mxu0 0.0
    %4089 = vmatpush2.msra.mxu0 %v3964
    %4090 = vmatprep.subr.mxu0 0.0
    %4091 = vmatpush2.msra.mxu0 %v3963
    %4092 = vmatprep.subr.mxu0 0.0
    %4093 = vmatpush2.msra.mxu0 %v3962
    %4094 = vmatprep.subr.mxu0 0.0
    %4095 = vmatpush2.msra.mxu0 %v3961
    %4096 = vmatprep.subr.mxu0 0.0
    %4097 = vmatpush2.msra.mxu0 %v3960
    %4098 = vmatprep.subr.mxu0 0.0
    %4099 = vmatpush2.msra.mxu0 %v3959
    %4100 = vmatprep.subr.mxu0 0.0
    %4101 = vmatpush2.msra.mxu0 %v3958
    %4102 = vmatprep.mubr.f32.mxu0 %v3931
    %4103 = vmatmul.mubr.f32.gmra.mxu0 %v3930
    %v4104 = vpop.f32.mrf.mxu0
    %v4105 = vadd.f32 0.0, %v4104
    %v4106 = vpop.f32.mrf.mxu0
    %4107 = vmatprep.mubr.f32.mxu0 %v3937
    %4108 = vmatmul.mubr.f32.gmra.mxu0 %v3936
    %v4109 = vpop.f32.mrf.mxu0
    %v4110 = vadd.f32 0.0, %v4109
    %v4111 = vpop.f32.mrf.mxu0
    %4112 = vdwg.mxu0
    %4113 = vmatprep.subr.mxu0 0.0
    %4114 = vmatpush1.msra.mxu0 %v3989
    %4115 = vmatprep.subr.mxu0 0.0
    %4116 = vmatpush1.msra.mxu0 %v3988
    %4117 = vmatprep.subr.mxu0 0.0
    %4118 = vmatpush1.msra.mxu0 %v3987
    %4119 = vmatprep.subr.mxu0 0.0
    %4120 = vmatpush1.msra.mxu0 %v3986
    %4121 = vmatprep.subr.mxu0 0.0
    %4122 = vmatpush1.msra.mxu0 %v3985
    %4123 = vmatprep.subr.mxu0 0.0
    %4124 = vmatpush1.msra.mxu0 %v3984
    %4125 = vmatprep.subr.mxu0 0.0
    %4126 = vmatpush1.msra.mxu0 %v3983
    %4127 = vmatprep.subr.mxu0 0.0
    %4128 = vmatpush1.msra.mxu0 %v3982
    %4129 = vmatprep.subr.mxu0 0.0
    %4130 = vmatpush1.msra.mxu0 %v3981
    %4131 = vmatprep.subr.mxu0 0.0
    %4132 = vmatpush1.msra.mxu0 %v3980
    %4133 = vmatprep.subr.mxu0 0.0
    %4134 = vmatpush1.msra.mxu0 %v3979
    %4135 = vmatprep.subr.mxu0 0.0
    %4136 = vmatpush1.msra.mxu0 %v3978
    %4137 = vmatprep.subr.mxu0 0.0
    %4138 = vmatpush1.msra.mxu0 %v3977
    %4139 = vmatprep.subr.mxu0 0.0
    %4140 = vmatpush1.msra.mxu0 %v3976
    %4141 = vmatprep.subr.mxu0 0.0
    %4142 = vmatpush1.msra.mxu0 %v3975
    %4143 = vmatprep.subr.mxu0 0.0
    %4144 = vmatpush1.msra.mxu0 %v3974
    %4145 = vmatprep.subr.mxu0 0.0
    %4146 = vmatpush2.msra.mxu0 %v4005
    %4147 = vmatprep.subr.mxu0 0.0
    %4148 = vmatpush2.msra.mxu0 %v4004
    %4149 = vmatprep.subr.mxu0 0.0
    %4150 = vmatpush2.msra.mxu0 %v4003
    %4151 = vmatprep.subr.mxu0 0.0
    %4152 = vmatpush2.msra.mxu0 %v4002
    %4153 = vmatprep.subr.mxu0 0.0
    %4154 = vmatpush2.msra.mxu0 %v4001
    %4155 = vmatprep.subr.mxu0 0.0
    %4156 = vmatpush2.msra.mxu0 %v4000
    %4157 = vmatprep.subr.mxu0 0.0
    %4158 = vmatpush2.msra.mxu0 %v3999
    %4159 = vmatprep.subr.mxu0 0.0
    %4160 = vmatpush2.msra.mxu0 %v3998
    %4161 = vmatprep.subr.mxu0 0.0
    %4162 = vmatpush2.msra.mxu0 %v3997
    %4163 = vmatprep.subr.mxu0 0.0
    %4164 = vmatpush2.msra.mxu0 %v3996
    %4165 = vmatprep.subr.mxu0 0.0
    %4166 = vmatpush2.msra.mxu0 %v3995
    %4167 = vmatprep.subr.mxu0 0.0
    %4168 = vmatpush2.msra.mxu0 %v3994
    %4169 = vmatprep.subr.mxu0 0.0
    %4170 = vmatpush2.msra.mxu0 %v3993
    %4171 = vmatprep.subr.mxu0 0.0
    %4172 = vmatpush2.msra.mxu0 %v3992
    %4173 = vmatprep.subr.mxu0 0.0
    %4174 = vmatpush2.msra.mxu0 %v3991
    %4175 = vmatprep.subr.mxu0 0.0
    %4176 = vmatpush2.msra.mxu0 %v3990
    %4177 = vmatprep.mubr.f32.mxu0 %v3933
    %4178 = vmatmul.mubr.f32.gmra.mxu0 %v3932
    %v4179 = vpop.f32.mrf.mxu0
    %v4180 = vadd.f32 %v4105, %v4179
    %v4181 = vpop.f32.mrf.mxu0
    %4182 = vmatprep.mubr.f32.mxu0 %v3939
    %4183 = vmatmul.mubr.f32.gmra.mxu0 %v3938
    %v4184 = vpop.f32.mrf.mxu0
    %v4185 = vadd.f32 %v4110, %v4184
    %v4186 = vpop.f32.mrf.mxu0
    %4187 = vdwg.mxu0
    %4188 = vmatprep.subr.mxu0 0.0
    %4189 = vmatpush1.msra.mxu0 %v4021
    %4190 = vmatprep.subr.mxu0 0.0
    %4191 = vmatpush1.msra.mxu0 %v4020
    %4192 = vmatprep.subr.mxu0 0.0
    %4193 = vmatpush1.msra.mxu0 %v4019
    %4194 = vmatprep.subr.mxu0 0.0
    %4195 = vmatpush1.msra.mxu0 %v4018
    %4196 = vmatprep.subr.mxu0 0.0
    %4197 = vmatpush1.msra.mxu0 %v4017
    %4198 = vmatprep.subr.mxu0 0.0
    %4199 = vmatpush1.msra.mxu0 %v4016
    %4200 = vmatprep.subr.mxu0 0.0
    %4201 = vmatpush1.msra.mxu0 %v4015
    %4202 = vmatprep.subr.mxu0 0.0
    %4203 = vmatpush1.msra.mxu0 %v4014
    %4204 = vmatprep.subr.mxu0 0.0
    %4205 = vmatpush1.msra.mxu0 %v4013
    %4206 = vmatprep.subr.mxu0 0.0
    %4207 = vmatpush1.msra.mxu0 %v4012
    %4208 = vmatprep.subr.mxu0 0.0
    %4209 = vmatpush1.msra.mxu0 %v4011
    %4210 = vmatprep.subr.mxu0 0.0
    %4211 = vmatpush1.msra.mxu0 %v4010
    %4212 = vmatprep.subr.mxu0 0.0
    %4213 = vmatpush1.msra.mxu0 %v4009
    %4214 = vmatprep.subr.mxu0 0.0
    %4215 = vmatpush1.msra.mxu0 %v4008
    %4216 = vmatprep.subr.mxu0 0.0
    %4217 = vmatpush1.msra.mxu0 %v4007
    %4218 = vmatprep.subr.mxu0 0.0
    %4219 = vmatpush1.msra.mxu0 %v4006
    %4220 = vmatprep.subr.mxu0 0.0
    %4221 = vmatpush2.msra.mxu0 %v4037
    %4222 = vmatprep.subr.mxu0 0.0
    %4223 = vmatpush2.msra.mxu0 %v4036
    %4224 = vmatprep.subr.mxu0 0.0
    %4225 = vmatpush2.msra.mxu0 %v4035
    %4226 = vmatprep.subr.mxu0 0.0
    %4227 = vmatpush2.msra.mxu0 %v4034
    %4228 = vmatprep.subr.mxu0 0.0
    %4229 = vmatpush2.msra.mxu0 %v4033
    %4230 = vmatprep.subr.mxu0 0.0
    %4231 = vmatpush2.msra.mxu0 %v4032
    %4232 = vmatprep.subr.mxu0 0.0
    %4233 = vmatpush2.msra.mxu0 %v4031
    %4234 = vmatprep.subr.mxu0 0.0
    %4235 = vmatpush2.msra.mxu0 %v4030
    %4236 = vmatprep.subr.mxu0 0.0
    %4237 = vmatpush2.msra.mxu0 %v4029
    %4238 = vmatprep.subr.mxu0 0.0
    %4239 = vmatpush2.msra.mxu0 %v4028
    %4240 = vmatprep.subr.mxu0 0.0
    %4241 = vmatpush2.msra.mxu0 %v4027
    %4242 = vmatprep.subr.mxu0 0.0
    %4243 = vmatpush2.msra.mxu0 %v4026
    %4244 = vmatprep.subr.mxu0 0.0
    %4245 = vmatpush2.msra.mxu0 %v4025
    %4246 = vmatprep.subr.mxu0 0.0
    %4247 = vmatpush2.msra.mxu0 %v4024
    %4248 = vmatprep.subr.mxu0 0.0
    %4249 = vmatpush2.msra.mxu0 %v4023
    %4250 = vmatprep.subr.mxu0 0.0
    %4251 = vmatpush2.msra.mxu0 %v4022
    %4252 = vmatprep.mubr.f32.mxu0 %v3935
    %4253 = vmatmul.mubr.f32.gmra.mxu0 %v3934
    %v4254 = vpop.f32.mrf.mxu0
    %v4255 = vadd.f32 %v4180, %v4254
    %v4256 = vpop.f32.mrf.mxu0
    %4257 = vmatprep.mubr.f32.mxu0 %v3941
    %4258 = vmatmul.mubr.f32.gmra.mxu0 %v3940
    %v4259 = vpop.f32.mrf.mxu0
    %v4260 = vadd.f32 %v4185, %v4259
    %v4261 = vpop.f32.mrf.mxu0
    %4262 = vdwg.mxu0
    %vm4263 = vcmask 64512
    %v4264 = vsel %vm4263, %v4255, -inf
    %4265 = vmax.xlane.f32.xlu0 %v4264
    %v4266 = vpop.xlane.xlu0 %4265
    %v4267 = vsel %vm4263, %v4260, -inf
    %4268 = vmax.xlane.f32.xlu0 %v4267
    %v4269 = vpop.xlane.xlu0 %4268
    %v4270 = vsub.f32 %v4255, %v4266
    %v4271 = vsub.f32 %v4260, %v4269
    %v4272 = vmul.f32 %v4270, 1.442695
    %v4273 = vpow.pop %v4272
    %v4274 = vmul.f32 %v4271, 1.442695
    %v4275 = vpow.pop %v4274
    %v4276 = vsel %vm4263, %v4273, 0.0
    %4277 = vadd.xlane.f32.xlu0 %v4276
    %v4278 = vpop.xlane.xlu0 %4277
    %v4279 = vsel %vm4263, %v4275, 0.0
    %4280 = vadd.xlane.f32.xlu0 %v4279
    %v4281 = vpop.xlane.xlu0 %4280
    %v4282 = vrcp.pop %v4278
    %v4283 = vrcp.pop %v4281
    %v4284 = vmul.f32 %v4278, %v4282
    %v4285 = vmul.f32 %v4281, %v4283
    %v4286 = vsub.f32 2.0, %v4284
    %v4287 = vsub.f32 2.0, %v4285
    %v4288 = vmul.f32 %v4282, %v4286
    %v4289 = vmul.f32 %v4283, %v4287
    %v4290 = vmul.f32 %v4273, %v4288
    %v4291 = vmul.f32 %v4275, %v4289
    %4292 = vst.msk [vmem:[%s20] sm:$0xff] %vm4263, %v4290
    %4293 = vst.msk [vmem:[%s20 + $0x8] sm:$0xff] %vm4263, %v4291
    %4294 = vst [vmem:[#allocation2] sm:$0xff] %v3930
    %4295 = vst [vmem:[#allocation2 + $0x8] sm:$0xff] %v3931
    %4296 = vst [vmem:[#allocation2 + $0x10] sm:$0xff] %v3932
    %4297 = vst [vmem:[#allocation2 + $0x18] sm:$0xff] %v3933
    %4298 = vst [vmem:[#allocation2 + $0x20] sm:$0xff] %v3934
    %4299 = vst [vmem:[#allocation2 + $0x28] sm:$0xff] %v3935
    %4300 = vst [vmem:[#allocation2 + $0x30] sm:$0xff] %v3936
    %4301 = vst [vmem:[#allocation2 + $0x38] sm:$0xff] %v3937
    %4302 = vst [vmem:[#allocation2 + $0x40] sm:$0xff] %v3938
    %4303 = vst [vmem:[#allocation2 + $0x48] sm:$0xff] %v3939
    %4304 = vst [vmem:[#allocation2 + $0x50] sm:$0xff] %v3940
    %4305 = vst [vmem:[#allocation2 + $0x58] sm:$0xff] %v3941
    // Predicated region
    $region82: #{encoder_forward.1} parent=1 // pred_check
      _
    $region83: #{encoder_forward.1} parent=1 // pred_check_branch
      %4307 = sbr.rel (0) target = $region85
    $region84: #{encoder_forward.1} parent=1 // pred_region
      _
    $region85: #{encoder_forward.1} parent=1 // pred_fallthru
      _
    // Predicated region
    $region86: #{encoder_forward.1} parent=1 // pred_check
      _
    $region87: #{encoder_forward.1} parent=1 // pred_check_branch
      %4309 = sbr.rel (0) target = $region89
    $region88: #{encoder_forward.1} parent=1 // pred_region
      %s4311 = ssub.s32 1536, 1536
      %4312 = vsyncadd [#allocation3], %s4311
      %s4313 = sshll.u32 [#allocation2], 4
      %s4314 = int_to_ptr.vmem [resolvable:$true] %s4313
      %4319 = dma.vmem_to_hbm [thread:$0]  %s4314, 1536, %s21, [#allocation3], 768, 768, 48
    $region89: #{encoder_forward.1} parent=1 // pred_fallthru
      _
    // Predicated region
    $region90: #{encoder_forward.1} parent=1 // pred_check
      _
    $region91: #{encoder_forward.1} parent=1 // pred_check_branch
      %4321 = sbr.rel (0) target = $region93
    $region92: #{encoder_forward.1} parent=1 // pred_region
      _
    $region93: #{encoder_forward.1} parent=1 // pred_fallthru
      _
    // Predicated region
    $region94: #{encoder_forward.1} parent=1 // pred_check
      _
    $region95: #{encoder_forward.1} parent=1 // pred_check_branch
      %4323 = sbr.rel (0) target = $region97
    $region96: #{encoder_forward.1} parent=1 // pred_region
      %4324 = dma.done [#allocation3], 1536
    $region97: #{encoder_forward.1} parent=1 // pred_fallthru
      _
    %4325 = vsyncpa [#allocation3], 1

</llo_original>
